<compile_context>
chip_gen: v6e
topology: v6e:2x2x1
jax: 0.10.0
libtpu: 0.0.40
codegen_flags: <defaults>
</compile_context>

<pallas_src>
import functools

import jax
import jax.numpy as jnp
from jax import lax
from jax.experimental import pallas as pl
from jax.experimental.pallas import tpu as pltpu


# ----------------------------------------------------------------------------
# Fused CLIP text-encoder kernel (all layers + optional final-LN/pool/proj)
# ----------------------------------------------------------------------------
def clip_encoder_kernel(eos_ref,                       # SMEM (B,) int32 (scalar prefetch)
                        x_ref, mask_ref,
                        ln1g_ref, ln1b_ref,
                        wqkv_ref, bqkv_ref,
                        wo_ref, bo_ref,
                        ln2g_ref, ln2b_ref,
                        w1_ref, b1_ref, w2_ref, b2_ref,
                        *rest, num_heads, num_layers, has_pool):
    if has_pool:
        lnfg_ref, lnfb_ref, wproj_ref, penult_ref, pooled_ref, x_res = rest
    else:
        penult_ref, x_res = rest

    b = pl.program_id(0)
    l = pl.program_id(1)
    S, D = x_res.shape
    H = num_heads
    hd = D // H
    eps = 1e-5

    def ln(v, g, bb):
        mu = jnp.mean(v, axis=-1, keepdims=True)
        var = jnp.mean((v - mu) ** 2, axis=-1, keepdims=True)
        return (v - mu) * lax.rsqrt(var + eps) * g + bb

    # Layer 0: load the embedding output into the resident VMEM residual stream.
    @pl.when(l == 0)
    def _():
        x_res[...] = x_ref[...]

    # hidden_states[-2] == residual stream right before the last encoder layer.
    @pl.when(l == num_layers - 1)
    def _():
        penult_ref[...] = x_res[...]

    x = x_res[...]                                           # (S, D) f32

    # ---- LayerNorm 1 (f32) + fused per-head QKV projection (bf16 MXU, f32 acc) ----
    h = ln(x, ln1g_ref[...], ln1b_ref[...])
    hb = jnp.broadcast_to(h.astype(jnp.bfloat16), (H, S, D))

    # (H,S,D) x (H,D,3*hd) -> (H,S,3*hd): one batched matmul instead of three.
    qkv = lax.dot_general(hb, wqkv_ref[...],
                          (((2,), (1,)), ((0,), (0,))),
                          preferred_element_type=jnp.float32) + bqkv_ref[...]
    q = qkv[:, :, 0 * hd:1 * hd]          # 128-aligned lane slices -> no relayout
    k = qkv[:, :, 1 * hd:2 * hd]
    v = qkv[:, :, 2 * hd:3 * hd]

    scale = 1.0 / (hd ** 0.5)

    # ---- causal attention, batched over heads ----
    s = lax.dot_general(q.astype(jnp.bfloat16), k.astype(jnp.bfloat16),
                        (((2,), (2,)), ((0,), (0,))),
                        preferred_element_type=jnp.float32)  # (H, S, S)
    s = s * scale + mask_ref[...]                            # additive causal bias
    s = s - jnp.max(s, axis=-1, keepdims=True)
    p = jnp.exp(s)
    p = p * pl.reciprocal(jnp.sum(p, axis=-1, keepdims=True), approx=True)

    ctx = lax.dot_general(p.astype(jnp.bfloat16), v.astype(jnp.bfloat16),
                          (((2,), (1,)), ((0,), (0,))),
                          preferred_element_type=jnp.float32)    # (H, S, hd)
    attn = lax.dot_general(ctx.astype(jnp.bfloat16), wo_ref[...],
                           (((2,), (1,)), ((0,), (0,))),
                           preferred_element_type=jnp.float32)   # (H, S, D)
    attn = jnp.sum(attn, axis=0) + bo_ref[...]
    x = x + attn

    # ---- LayerNorm 2 (f32) + MLP (bf16 MXU, quick-GELU in f32) ----
    h2 = ln(x, ln2g_ref[...], ln2b_ref[...])
    h2 = jnp.dot(h2.astype(jnp.bfloat16), w1_ref[...],
                 preferred_element_type=jnp.float32) + b1_ref[...]
    h2 = h2 * jax.nn.sigmoid(1.702 * h2)                     # quick_gelu
    h2 = jnp.dot(h2.astype(jnp.bfloat16), w2_ref[...],
                 preferred_element_type=jnp.float32) + b2_ref[...]

    x_new = x + h2
    x_res[...] = x_new

    if has_pool:
        # Fused final LayerNorm + EOS pooling + text projection (last layer only).
        @pl.when(l == num_layers - 1)
        def _():
            eos = eos_ref[b]
            sel = (lax.broadcasted_iota(jnp.int32, (S, 1), 0) == eos)
            row = jnp.sum(sel.astype(jnp.float32) * x_new, axis=0, keepdims=True)  # (1, D)
            row = ln(row, lnfg_ref[...], lnfb_ref[...])
            pooled_ref[...] = jnp.dot(row.astype(jnp.bfloat16), wproj_ref[...],
                                      preferred_element_type=jnp.float32)


# ----------------------------------------------------------------------------
# Wrapper: one pallas_call per encoder branch
# ----------------------------------------------------------------------------
def run_clip_encoder(x_emb, eos_idx, p, *, num_heads, has_pool):
    B, S, D = x_emb.shape
    L = p['wqkv'].shape[0]
    H = num_heads
    hd = D // H
    M = p['w1'].shape[2]

    # Additive causal-mask bias, built once, resident in VMEM across the grid.
    rows = jnp.arange(S)[:, None]
    cols = jnp.arange(S)[None, :]
    mask = jnp.where(cols <= rows, 0.0, -1e9).astype(jnp.float32)

    def wspec(tail):     # layer-stacked param: leading L axis squeezed, indexed by l
        n = len(tail)
        return pl.BlockSpec((None,) + tail, lambda b, l, eos, _n=n: (l,) + (0,) * _n)

    def cspec(shape):    # constant, replicated across the grid
        n = len(shape)
        return pl.BlockSpec(shape, lambda b, l, eos, _n=n: (0,) * _n)

    in_specs = [
        pl.BlockSpec((None, S, D), lambda b, l, eos: (b, 0, 0)),    # x_emb
        cspec((S, S)),                                              # causal bias
        wspec((1, D)), wspec((1, D)),                               # ln1 g/b
        wspec((H, D, 3 * hd)), wspec((H, 1, 3 * hd)),               # Wqkv, bqkv (fused)
        wspec((H, hd, D)), wspec((1, D)),                           # Wo, bo
        wspec((1, D)), wspec((1, D)),                               # ln2 g/b
        wspec((D, M)), wspec((1, M)),                               # W1, b1
        wspec((M, D)), wspec((1, D)),                               # W2, b2
    ]
    inputs = [x_emb, mask,
              p['ln1_g'], p['ln1_b'],
              p['wqkv'], p['bqkv'],
              p['wo'], p['bo'],
              p['ln2_g'], p['ln2_b'],
              p['w1'], p['b1'], p['w2'], p['b2']]

    if has_pool:
        P = p['w_proj'].shape[1]
        in_specs += [cspec((1, D)), cspec((1, D)), cspec((D, P))]
        inputs += [p['lnf_g'], p['lnf_b'], p['w_proj']]
        out_shape = (jax.ShapeDtypeStruct((B, S, D), jnp.float32),
                     jax.ShapeDtypeStruct((B, 1, P), jnp.float32))
        out_specs = (pl.BlockSpec((None, S, D), lambda b, l, eos: (b, 0, 0)),
                     pl.BlockSpec((None, 1, P), lambda b, l, eos: (b, 0, 0)))
    else:
        out_shape = jax.ShapeDtypeStruct((B, S, D), jnp.float32)
        out_specs = pl.BlockSpec((None, S, D), lambda b, l, eos: (b, 0, 0))

    kernel = functools.partial(clip_encoder_kernel,
                               num_heads=H, num_layers=L, has_pool=has_pool)

    grid_spec = pltpu.PrefetchScalarGridSpec(
        num_scalar_prefetch=1,
        grid=(B, L),                       # L innermost: residual carried in VMEM scratch
        in_specs=in_specs,
        out_specs=out_specs,
        scratch_shapes=[pltpu.VMEM((S, D), jnp.float32)])

    out = pl.pallas_call(
        kernel,
        out_shape=out_shape,
        grid_spec=grid_spec,
        compiler_params=pltpu.CompilerParams(
            dimension_semantics=("parallel", "arbitrary")),
    )(eos_idx, *inputs)

    if has_pool:
        penult, pooled = out
        return penult, pooled[:, 0, :]
    return out


# ----------------------------------------------------------------------------
# Pure-JAX reference encoder (correctness check only)
# ----------------------------------------------------------------------------
def ref_clip_encoder(x, eos_idx, p, *, num_heads, has_pool):
    B, S, D = x.shape
    L = p['wqkv'].shape[0]
    H = num_heads
    hd = D // H
    eps = 1e-5

    def ln(v, g, bb):
        mu = jnp.mean(v, axis=-1, keepdims=True)
        var = jnp.mean((v - mu) ** 2, axis=-1, keepdims=True)
        return (v - mu) * lax.rsqrt(var + eps) * g + bb

    rows = jnp.arange(S)[:, None]
    cols = jnp.arange(S)[None, :]
    mask = jnp.where(cols <= rows, 0.0, -1e9).astype(jnp.float32)

    penult = None
    for l in range(L):
        if l == L - 1:
            penult = x
        h = ln(x, p['ln1_g'][l], p['ln1_b'][l])
        qkv = jnp.einsum('bsd,hdk->bhsk', h, p['wqkv'][l].astype(jnp.float32)) \
            + p['bqkv'][l][None]
        q, k, v = qkv[..., :hd], qkv[..., hd:2 * hd], qkv[..., 2 * hd:]
        s = jnp.einsum('bhqe,bhke->bhqk', q, k) * (1.0 / (hd ** 0.5)) + mask
        pmat = jax.nn.softmax(s, axis=-1)
        ctx = jnp.einsum('bhqk,bhke->bhqe', pmat, v)
        attn = jnp.einsum('bhse,hed->bsd', ctx, p['wo'][l].astype(jnp.float32)) + p['bo'][l]
        x = x + attn
        h2 = ln(x, p['ln2_g'][l], p['ln2_b'][l])
        h2 = h2 @ p['w1'][l].astype(jnp.float32) + p['b1'][l]
        h2 = h2 * jax.nn.sigmoid(1.702 * h2)
        h2 = h2 @ p['w2'][l].astype(jnp.float32) + p['b2'][l]
        x = x + h2

    if not has_pool:
        return penult
    row = x[jnp.arange(B), eos_idx]                           # (B, D)
    row = ln(row, p['lnf_g'], p['lnf_b'])
    pooled = row @ p['w_proj'].astype(jnp.float32)            # (B, P)
    return penult, pooled


# ----------------------------------------------------------------------------
# Synthetic CLIP text encoders (deterministic init) + PromptEncoder forward
# ----------------------------------------------------------------------------
def init_encoder_params(key, vocab, seq, d, mlp, layers, heads, proj_dim=None):
    hd = d // heads
    keys = jax.random.split(key, 8)

    def nrm(k, shape, dtype=jnp.bfloat16):
        return (0.02 * jax.random.normal(k, shape, jnp.float32)).astype(dtype)

    p = {
        'tok_emb': nrm(keys[0], (vocab, d), jnp.float32),
        'pos_emb': nrm(keys[1], (seq, d), jnp.float32),
        'ln1_g': jnp.ones((layers, 1, d), jnp.float32),
        'ln1_b': jnp.zeros((layers, 1, d), jnp.float32),
        'wqkv': nrm(keys[2], (layers, heads, d, 3 * hd)),         # fused Wq|Wk|Wv
        'bqkv': jnp.zeros((layers, heads, 1, 3 * hd), jnp.float32),
        'wo': nrm(keys[5], (layers, heads, hd, d)),
        'bo': jnp.zeros((layers, 1, d), jnp.float32),
        'ln2_g': jnp.ones((layers, 1, d), jnp.float32),
        'ln2_b': jnp.zeros((layers, 1, d), jnp.float32),
        'w1': nrm(keys[6], (layers, d, mlp)),
        'b1': jnp.zeros((layers, 1, mlp), jnp.float32),
        'w2': nrm(keys[7], (layers, mlp, d)),
        'b2': jnp.zeros((layers, 1, d), jnp.float32),
        'lnf_g': jnp.ones((1, d), jnp.float32),
        'lnf_b': jnp.zeros((1, d), jnp.float32),
    }
    if proj_dim is not None:
        p['w_proj'] = nrm(jax.random.fold_in(key, 123), (d, proj_dim))
    return p


def _clip_branches(params1, params2, ids1, ids2, *, num_heads1, num_heads2, use_pallas):
    S = ids1.shape[1]
    # Embedding gather (plain-JAX glue).
    x1 = params1['tok_emb'][ids1] + params1['pos_emb'][None, :S, :]
    x2 = params2['tok_emb'][ids2] + params2['pos_emb'][None, :S, :]
    B = ids1.shape[0]
    zero_eos = jnp.zeros((B,), jnp.int32)
    # TODO(synk): EOS pooling via argmax(ids) matches HF CLIP only because the real
    # tokenizer's EOS id is the max token id; with synthetic random ids it picks an
    # arbitrary position (fine for this benchmark).
    eos_idx2 = jnp.argmax(ids2, axis=-1).astype(jnp.int32)

    if use_pallas:
        penult1 = run_clip_encoder(x1, zero_eos, params1,
                                   num_heads=num_heads1, has_pool=False)
        penult2, pooled2 = run_clip_encoder(x2, eos_idx2, params2,
                                            num_heads=num_heads2, has_pool=True)
    else:
        penult1 = ref_clip_encoder(x1, zero_eos, params1,
                                   num_heads=num_heads1, has_pool=False)
        penult2, pooled2 = ref_clip_encoder(x2, eos_idx2, params2,
                                            num_heads=num_heads2, has_pool=True)
    return penult1, penult2, pooled2


@functools.partial(jax.jit, static_argnames=("num_heads1", "num_heads2",
                                              "batch_size", "out_dtype", "use_pallas"))
def prompt_encoder_forward(params1, params2,
                           text_ids_1, text_ids_2, uncond_ids_1, uncond_ids_2,
                           *, num_heads1, num_heads2, batch_size=1,
                           out_dtype=jnp.float32, use_pallas=True):
    """Mirror of PromptEncoderModule.forward (do_classifier_free_guidance=True,
    batch_input=False)."""
    bs = text_ids_1.shape[0]
    S = text_ids_1.shape[1]

    # Batch cond + uncond into a single call per encoder (B = 2*bs).
    ids1 = jnp.concatenate([text_ids_1, uncond_ids_1], axis=0)
    ids2 = jnp.concatenate([text_ids_2, uncond_ids_2], axis=0)

    penult1, penult2, pooled2 = _clip_branches(
        params1, params2, ids1, ids2,
        num_heads1=num_heads1, num_heads2=num_heads2, use_pallas=use_pallas)

    embeds = jnp.concatenate([penult1, penult2], axis=-1)      # (2*bs, S, d1+d2)
    text_embeds = pooled2                                       # (2*bs, proj_dim)

    prompt_embeds, neg_prompt_embeds = embeds[:bs], embeds[bs:]
    pooled_prompt, neg_pooled = text_embeds[:bs], text_embeds[bs:]

    # batch_input=False path: repeat along batch.
    prompt_embeds = jnp.tile(prompt_embeds.reshape(bs, S, -1), (batch_size, 1, 1))
    add_text_embeds = jnp.tile(pooled_prompt.reshape(bs, -1), (batch_size, 1))
    neg_prompt_embeds = jnp.tile(neg_prompt_embeds.reshape(bs, S, -1), (batch_size, 1, 1))
    neg_pooled = jnp.tile(neg_pooled.reshape(1, -1), (batch_size, 1))

    # classifier-free guidance: prepend the negative branch.
    prompt_embeds = jnp.concatenate([neg_prompt_embeds, prompt_embeds], axis=0)
    add_text_embeds = jnp.concatenate([neg_pooled, add_text_embeds], axis=0)

    return prompt_embeds.astype(out_dtype), add_text_embeds.astype(out_dtype)


# ----------------------------------------------------------------------------
if __name__ == "__main__":
    # Small synthetic config with lane-dense (128-multiple) feature dims.
    # (Real SDXL: CLIP-L d=768 / OpenCLIP-bigG d=1280, S=77 — scaled down here.)
    VOCAB = 1000
    SEQ = 8
    D1, HEADS1, LAYERS1, MLP1 = 128, 1, 3, 256     # "text_encoder"
    D2, HEADS2, LAYERS2, MLP2 = 256, 2, 3, 512     # "text_encoder_2"
    PROJ_DIM = 128
    BATCH_SIZE = 1                                 # module default
    # TODO(synk): pretrained HF checkpoints are replaced by deterministic random init.

    key = jax.random.PRNGKey(0)
    k_p1, k_p2, k_ids = jax.random.split(key, 3)
    params1 = init_encoder_params(k_p1, VOCAB, SEQ, D1, MLP1, LAYERS1, HEADS1)
    params2 = init_encoder_params(k_p2, VOCAB, SEQ, D2, MLP2, LAYERS2, HEADS2,
                                  proj_dim=PROJ_DIM)

    ik = jax.random.split(k_ids, 4)
    text_input_ids_1 = jax.random.randint(ik[0], (1, SEQ), 0, VOCAB, jnp.int32)
    text_input_ids_2 = jax.random.randint(ik[1], (1, SEQ), 0, VOCAB, jnp.int32)
    uncond_input_ids_1 = jax.random.randint(ik[2], (1, SEQ), 0, VOCAB, jnp.int32)
    uncond_input_ids_2 = jax.random.randint(ik[3], (1, SEQ), 0, VOCAB, jnp.int32)

    args = (params1, params2,
            text_input_ids_1, text_input_ids_2, uncond_input_ids_1, uncond_input_ids_2)
    kw = dict(num_heads1=HEADS1, num_heads2=HEADS2, batch_size=BATCH_SIZE,
              out_dtype=jnp.float32)   # precision='fp32'

    prompt_embeds, add_text_embeds = prompt_encoder_forward(*args, use_pallas=True, **kw)
    jax.block_until_ready((prompt_embeds, add_text_embeds))

    # Pure-JAX reference check (f32 math vs bf16-MXU kernel -> generous tolerance).
    ref_pe, ref_ate = prompt_encoder_forward(*args, use_pallas=False, **kw)
    jax.block_until_ready((ref_pe, ref_ate))

    assert prompt_embeds.shape == (2 * BATCH_SIZE, SEQ, D1 + D2), prompt_embeds.shape
    assert add_text_embeds.shape == (2 * BATCH_SIZE, PROJ_DIM), add_text_embeds.shape
    assert jnp.all(jnp.isfinite(prompt_embeds)) and jnp.all(jnp.isfinite(add_text_embeds))
    err_pe = float(jnp.max(jnp.abs(prompt_embeds - ref_pe)))
    err_ate = float(jnp.max(jnp.abs(add_text_embeds - ref_ate)))
    assert err_pe < 7.5e-2 and err_ate < 7.5e-2, (err_pe, err_ate)
    print("KERNEL_OK")
</pallas_src>

<mosaic_0001>
module attributes {stable_mosaic.version = 11 : i64} {
  func.func @clip_encoder_kernel(%arg0: i32, %arg1: i32, %arg2: memref<2xi32, #tpu.memory_space<smem>>, %arg3: memref<1x8x128xf32, #tpu.memory_space<vmem>>, %arg4: memref<8x8xf32, #tpu.memory_space<vmem>>, %arg5: memref<1x1x128xf32, #tpu.memory_space<vmem>>, %arg6: memref<1x1x128xf32, #tpu.memory_space<vmem>>, %arg7: memref<1x1x128x384xbf16, #tpu.memory_space<vmem>>, %arg8: memref<1x1x1x384xf32, #tpu.memory_space<vmem>>, %arg9: memref<1x1x128x128xbf16, #tpu.memory_space<vmem>>, %arg10: memref<1x1x128xf32, #tpu.memory_space<vmem>>, %arg11: memref<1x1x128xf32, #tpu.memory_space<vmem>>, %arg12: memref<1x1x128xf32, #tpu.memory_space<vmem>>, %arg13: memref<1x128x256xbf16, #tpu.memory_space<vmem>>, %arg14: memref<1x1x256xf32, #tpu.memory_space<vmem>>, %arg15: memref<1x256x128xbf16, #tpu.memory_space<vmem>>, %arg16: memref<1x1x128xf32, #tpu.memory_space<vmem>>, %arg17: memref<1x8x128xf32, #tpu.memory_space<vmem>>, %arg18: memref<8x128xf32, #tpu.memory_space<vmem>>) attributes {dimension_semantics = [#tpu.dimension_semantics<parallel>, #tpu.dimension_semantics<arbitrary>], iteration_bounds = array<i64: 2, 3>, scalar_prefetch = 1 : i64, scratch_operands = 1 : i64, tpu.core_type = #tpu.core_type<tc>, window_params = [{transform_indices = @transform_0, window_bounds = array<i64: 1, 8, 128>}, {pipeline_mode = #tpu.pipeline_mode<synchronous>, transform_indices = @transform_1, window_bounds = array<i64: 8, 8>}, {transform_indices = @transform_2, window_bounds = array<i64: 1, 1, 128>}, {transform_indices = @transform_3, window_bounds = array<i64: 1, 1, 128>}, {transform_indices = @transform_4, window_bounds = array<i64: 1, 1, 128, 384>}, {transform_indices = @transform_5, window_bounds = array<i64: 1, 1, 1, 384>}, {transform_indices = @transform_6, window_bounds = array<i64: 1, 1, 128, 128>}, {transform_indices = @transform_7, window_bounds = array<i64: 1, 1, 128>}, {transform_indices = @transform_8, window_bounds = array<i64: 1, 1, 128>}, {transform_indices = @transform_9, window_bounds = array<i64: 1, 1, 128>}, {transform_indices = @transform_10, window_bounds = array<i64: 1, 128, 256>}, {transform_indices = @transform_11, window_bounds = array<i64: 1, 1, 256>}, {transform_indices = @transform_12, window_bounds = array<i64: 1, 256, 128>}, {transform_indices = @transform_13, window_bounds = array<i64: 1, 1, 128>}, {transform_indices = @transform_14, window_bounds = array<i64: 1, 8, 128>}]} {
    %c0_i32 = arith.constant 0 : i32
    %0 = arith.cmpi eq, %arg1, %c0_i32 : i32
    %1 = arith.extui %0 : i1 to i32
    %c0_i32_0 = arith.constant 0 : i32
    %2 = arith.cmpi ne, %1, %c0_i32_0 : i32
    scf.if %2 {
      %c0_67 = arith.constant 0 : index
      %c0_68 = arith.constant 0 : index
      %c0_69 = arith.constant 0 : index
      %128 = vector.load %arg3[%c0_67, %c0_68, %c0_69] : memref<1x8x128xf32, #tpu.memory_space<vmem>>, vector<1x8x128xf32>
      %129 = vector.shape_cast %128 : vector<1x8x128xf32> to vector<8x128xf32>
      %c0_70 = arith.constant 0 : index
      %c0_71 = arith.constant 0 : index
      %130 = vector.load %arg18[%c0_70, %c0_71] : memref<8x128xf32, #tpu.memory_space<vmem>>, vector<8x128xf32>
      tpu.vector_store %arg18[%c0_70, %c0_71], %129 {strides = array<i32>} : memref<8x128xf32, #tpu.memory_space<vmem>>, vector<8x128xf32>,
    } else {
    }
    %c2_i32 = arith.constant 2 : i32
    %3 = arith.cmpi eq, %arg1, %c2_i32 : i32
    %4 = arith.extui %3 : i1 to i32
    %c0_i32_1 = arith.constant 0 : i32
    %5 = arith.cmpi ne, %4, %c0_i32_1 : i32
    scf.if %5 {
      %c0_67 = arith.constant 0 : index
      %c0_68 = arith.constant 0 : index
      %128 = vector.load %arg18[%c0_67, %c0_68] : memref<8x128xf32, #tpu.memory_space<vmem>>, vector<8x128xf32>
      %c0_69 = arith.constant 0 : index
      %c0_70 = arith.constant 0 : index
      %c0_71 = arith.constant 0 : index
      %129 = vector.load %arg17[%c0_69, %c0_70, %c0_71] : memref<1x8x128xf32, #tpu.memory_space<vmem>>, vector<1x8x128xf32>
      %130 = vector.shape_cast %129 : vector<1x8x128xf32> to vector<8x128xf32>
      %131 = vector.shape_cast %128 : vector<8x128xf32> to vector<1x8x128xf32>
      tpu.vector_store %arg17[%c0_69, %c0_70, %c0_71], %131 {strides = array<i32>} : memref<1x8x128xf32, #tpu.memory_space<vmem>>, vector<1x8x128xf32>,
    } else {
    }
    %c0 = arith.constant 0 : index
    %c0_2 = arith.constant 0 : index
    %6 = vector.load %arg18[%c0, %c0_2] : memref<8x128xf32, #tpu.memory_space<vmem>>, vector<8x128xf32>
    %c0_3 = arith.constant 0 : index
    %c0_4 = arith.constant 0 : index
    %c0_5 = arith.constant 0 : index
    %7 = vector.load %arg5[%c0_3, %c0_4, %c0_5] : memref<1x1x128xf32, #tpu.memory_space<vmem>>, vector<1x1x128xf32>
    %8 = vector.shape_cast %7 : vector<1x1x128xf32> to vector<1x128xf32>
    %c0_6 = arith.constant 0 : index
    %c0_7 = arith.constant 0 : index
    %c0_8 = arith.constant 0 : index
    %9 = vector.load %arg6[%c0_6, %c0_7, %c0_8] : memref<1x1x128xf32, #tpu.memory_space<vmem>>, vector<1x1x128xf32>
    %10 = vector.shape_cast %9 : vector<1x1x128xf32> to vector<1x128xf32>
    %cst = arith.constant dense<0.000000e+00> : vector<8xf32>
    %11 = vector.multi_reduction <add>, %6, %cst [1] : vector<8x128xf32> to vector<8xf32>
    %12 = vector.shape_cast %11 : vector<8xf32> to vector<8x1xf32>
    %cst_9 = arith.constant 1.280000e+02 : f32
    %13 = vector.broadcast %cst_9 : f32 to vector<8x1xf32>
    %14 = arith.divf %12, %13 : vector<8x1xf32>
    %15 = vector.broadcast %14 : vector<8x1xf32> to vector<8x128xf32>
    %16 = arith.subf %6, %15 : vector<8x128xf32>
    %17 = arith.mulf %16, %16 : vector<8x128xf32>
    %cst_10 = arith.constant dense<0.000000e+00> : vector<8xf32>
    %18 = vector.multi_reduction <add>, %17, %cst_10 [1] : vector<8x128xf32> to vector<8xf32>
    %19 = vector.shape_cast %18 : vector<8xf32> to vector<8x1xf32>
    %cst_11 = arith.constant 1.280000e+02 : f32
    %20 = vector.broadcast %cst_11 : f32 to vector<8x1xf32>
    %21 = arith.divf %19, %20 : vector<8x1xf32>
    %22 = vector.broadcast %14 : vector<8x1xf32> to vector<8x128xf32>
    %23 = arith.subf %6, %22 : vector<8x128xf32>
    %cst_12 = arith.constant 9.99999974E-6 : f32
    %24 = vector.broadcast %cst_12 : f32 to vector<8x1xf32>
    %25 = arith.addf %21, %24 : vector<8x1xf32>
    %26 = math.rsqrt %25 : vector<8x1xf32>
    %27 = vector.broadcast %26 : vector<8x1xf32> to vector<8x128xf32>
    %28 = arith.mulf %23, %27 : vector<8x128xf32>
    %29 = vector.broadcast %8 : vector<1x128xf32> to vector<8x128xf32>
    %30 = arith.mulf %28, %29 : vector<8x128xf32>
    %31 = vector.broadcast %10 : vector<1x128xf32> to vector<8x128xf32>
    %32 = arith.addf %30, %31 : vector<8x128xf32>
    %33 = arith.truncf %32 : vector<8x128xf32> to vector<8x128xbf16>
    %34 = vector.shape_cast %33 : vector<8x128xbf16> to vector<1x8x128xbf16>
    %c0_13 = arith.constant 0 : index
    %c0_14 = arith.constant 0 : index
    %c0_15 = arith.constant 0 : index
    %c0_16 = arith.constant 0 : index
    %35 = vector.load %arg7[%c0_13, %c0_14, %c0_15, %c0_16] : memref<1x1x128x384xbf16, #tpu.memory_space<vmem>>, vector<1x1x128x384xbf16>
    %36 = vector.shape_cast %35 : vector<1x1x128x384xbf16> to vector<1x128x384xbf16>
    %cst_17 = arith.constant dense<0.000000e+00> : vector<1x8x384xf32>
    %37 = tpu.matmul %34, %36, %cst_17 {dimension_numbers = #tpu.dot_dimension_numbers<[2], [1], [1], [2], [0, 0, 0, 1, 1, 2], [0], [0]>} : vector<1x8x128xbf16>, vector<1x128x384xbf16>, vector<1x8x384xf32> -> vector<1x8x384xf32>
    %c0_18 = arith.constant 0 : index
    %c0_19 = arith.constant 0 : index
    %c0_20 = arith.constant 0 : index
    %c0_21 = arith.constant 0 : index
    %38 = vector.load %arg8[%c0_18, %c0_19, %c0_20, %c0_21] : memref<1x1x1x384xf32, #tpu.memory_space<vmem>>, vector<1x1x1x384xf32>
    %39 = vector.shape_cast %38 : vector<1x1x1x384xf32> to vector<1x1x384xf32>
    %40 = vector.broadcast %39 : vector<1x1x384xf32> to vector<1x8x384xf32>
    %41 = arith.addf %37, %40 : vector<1x8x384xf32>
    %42 = vector.extract_strided_slice %41 {offsets = [0, 0, 0], sizes = [1, 8, 128], strides = [1, 1, 1]} : vector<1x8x384xf32> to vector<1x8x128xf32>
    %43 = vector.extract_strided_slice %41 {offsets = [0, 0, 128], sizes = [1, 8, 128], strides = [1, 1, 1]} : vector<1x8x384xf32> to vector<1x8x128xf32>
    %44 = vector.extract_strided_slice %41 {offsets = [0, 0, 256], sizes = [1, 8, 128], strides = [1, 1, 1]} : vector<1x8x384xf32> to vector<1x8x128xf32>
    %45 = arith.truncf %42 : vector<1x8x128xf32> to vector<1x8x128xbf16>
    %46 = arith.truncf %43 : vector<1x8x128xf32> to vector<1x8x128xbf16>
    %cst_22 = arith.constant dense<0.000000e+00> : vector<1x8x8xf32>
    %47 = tpu.matmul %45, %46, %cst_22 {dimension_numbers = #tpu.dot_dimension_numbers<[2], [2], [1], [1], [0, 0, 0, 1, 1, 1], [0], [0]>} : vector<1x8x128xbf16>, vector<1x8x128xbf16>, vector<1x8x8xf32> -> vector<1x8x8xf32>
    %cst_23 = arith.constant 0.0883883461 : f32
    %48 = vector.broadcast %cst_23 : f32 to vector<1x8x8xf32>
    %49 = arith.mulf %47, %48 : vector<1x8x8xf32>
    %c0_24 = arith.constant 0 : index
    %c0_25 = arith.constant 0 : index
    %50 = vector.load %arg4[%c0_24, %c0_25] : memref<8x8xf32, #tpu.memory_space<vmem>>, vector<8x8xf32>
    %51 = vector.shape_cast %50 : vector<8x8xf32> to vector<1x8x8xf32>
    %52 = arith.addf %49, %51 : vector<1x8x8xf32>
    %cst_26 = arith.constant dense<0xFF800000> : vector<1x8xf32>
    %53 = vector.multi_reduction <maximumf>, %52, %cst_26 [2] : vector<1x8x8xf32> to vector<1x8xf32>
    %54 = vector.shape_cast %53 : vector<1x8xf32> to vector<1x8x1xf32>
    %55 = vector.broadcast %54 : vector<1x8x1xf32> to vector<1x8x8xf32>
    %56 = arith.subf %52, %55 : vector<1x8x8xf32>
    %57 = math.exp %56 : vector<1x8x8xf32>
    %cst_27 = arith.constant dense<0.000000e+00> : vector<1x8xf32>
    %58 = vector.multi_reduction <add>, %57, %cst_27 [2] : vector<1x8x8xf32> to vector<1x8xf32>
    %59 = vector.shape_cast %58 : vector<1x8xf32> to vector<1x8x1xf32>
    %60 = tpu.reciprocal %59 {approx = true} : vector<1x8x1xf32> -> vector<1x8x1xf32>
    %61 = vector.broadcast %60 : vector<1x8x1xf32> to vector<1x8x8xf32>
    %62 = arith.mulf %57, %61 : vector<1x8x8xf32>
    %63 = arith.truncf %62 : vector<1x8x8xf32> to vector<1x8x8xbf16>
    %64 = arith.truncf %44 : vector<1x8x128xf32> to vector<1x8x128xbf16>
    %cst_28 = arith.constant dense<0.000000e+00> : vector<1x8x128xf32>
    %65 = tpu.matmul %63, %64, %cst_28 {dimension_numbers = #tpu.dot_dimension_numbers<[2], [1], [1], [2], [0, 0, 0, 1, 1, 2], [0], [0]>} : vector<1x8x8xbf16>, vector<1x8x128xbf16>, vector<1x8x128xf32> -> vector<1x8x128xf32>
    %66 = arith.truncf %65 : vector<1x8x128xf32> to vector<1x8x128xbf16>
    %c0_29 = arith.constant 0 : index
    %c0_30 = arith.constant 0 : index
    %c0_31 = arith.constant 0 : index
    %c0_32 = arith.constant 0 : index
    %67 = vector.load %arg9[%c0_29, %c0_30, %c0_31, %c0_32] : memref<1x1x128x128xbf16, #tpu.memory_space<vmem>>, vector<1x1x128x128xbf16>
    %68 = vector.shape_cast %67 : vector<1x1x128x128xbf16> to vector<1x128x128xbf16>
    %cst_33 = arith.constant dense<0.000000e+00> : vector<1x8x128xf32>
    %69 = tpu.matmul %66, %68, %cst_33 {dimension_numbers = #tpu.dot_dimension_numbers<[2], [1], [1], [2], [0, 0, 0, 1, 1, 2], [0], [0]>} : vector<1x8x128xbf16>, vector<1x128x128xbf16>, vector<1x8x128xf32> -> vector<1x8x128xf32>
    %cst_34 = arith.constant dense<0.000000e+00> : vector<8x128xf32>
    %70 = vector.multi_reduction <add>, %69, %cst_34 [0] : vector<1x8x128xf32> to vector<8x128xf32>
    %c0_35 = arith.constant 0 : index
    %c0_36 = arith.constant 0 : index
    %c0_37 = arith.constant 0 : index
    %71 = vector.load %arg10[%c0_35, %c0_36, %c0_37] : memref<1x1x128xf32, #tpu.memory_space<vmem>>, vector<1x1x128xf32>
    %72 = vector.shape_cast %71 : vector<1x1x128xf32> to vector<1x128xf32>
    %73 = vector.broadcast %72 : vector<1x128xf32> to vector<8x128xf32>
    %74 = arith.addf %70, %73 : vector<8x128xf32>
    %75 = arith.addf %6, %74 : vector<8x128xf32>
    %c0_38 = arith.constant 0 : index
    %c0_39 = arith.constant 0 : index
    %c0_40 = arith.constant 0 : index
    %76 = vector.load %arg11[%c0_38, %c0_39, %c0_40] : memref<1x1x128xf32, #tpu.memory_space<vmem>>, vector<1x1x128xf32>
    %77 = vector.shape_cast %76 : vector<1x1x128xf32> to vector<1x128xf32>
    %c0_41 = arith.constant 0 : index
    %c0_42 = arith.constant 0 : index
    %c0_43 = arith.constant 0 : index
    %78 = vector.load %arg12[%c0_41, %c0_42, %c0_43] : memref<1x1x128xf32, #tpu.memory_space<vmem>>, vector<1x1x128xf32>
    %79 = vector.shape_cast %78 : vector<1x1x128xf32> to vector<1x128xf32>
    %cst_44 = arith.constant dense<0.000000e+00> : vector<8xf32>
    %80 = vector.multi_reduction <add>, %75, %cst_44 [1] : vector<8x128xf32> to vector<8xf32>
    %81 = vector.shape_cast %80 : vector<8xf32> to vector<8x1xf32>
    %cst_45 = arith.constant 1.280000e+02 : f32
    %82 = vector.broadcast %cst_45 : f32 to vector<8x1xf32>
    %83 = arith.divf %81, %82 : vector<8x1xf32>
    %84 = vector.broadcast %83 : vector<8x1xf32> to vector<8x128xf32>
    %85 = arith.subf %75, %84 : vector<8x128xf32>
    %86 = arith.mulf %85, %85 : vector<8x128xf32>
    %cst_46 = arith.constant dense<0.000000e+00> : vector<8xf32>
    %87 = vector.multi_reduction <add>, %86, %cst_46 [1] : vector<8x128xf32> to vector<8xf32>
    %88 = vector.shape_cast %87 : vector<8xf32> to vector<8x1xf32>
    %cst_47 = arith.constant 1.280000e+02 : f32
    %89 = vector.broadcast %cst_47 : f32 to vector<8x1xf32>
    %90 = arith.divf %88, %89 : vector<8x1xf32>
    %91 = vector.broadcast %83 : vector<8x1xf32> to vector<8x128xf32>
    %92 = arith.subf %75, %91 : vector<8x128xf32>
    %cst_48 = arith.constant 9.99999974E-6 : f32
    %93 = vector.broadcast %cst_48 : f32 to vector<8x1xf32>
    %94 = arith.addf %90, %93 : vector<8x1xf32>
    %95 = math.rsqrt %94 : vector<8x1xf32>
    %96 = vector.broadcast %95 : vector<8x1xf32> to vector<8x128xf32>
    %97 = arith.mulf %92, %96 : vector<8x128xf32>
    %98 = vector.broadcast %77 : vector<1x128xf32> to vector<8x128xf32>
    %99 = arith.mulf %97, %98 : vector<8x128xf32>
    %100 = vector.broadcast %79 : vector<1x128xf32> to vector<8x128xf32>
    %101 = arith.addf %99, %100 : vector<8x128xf32>
    %102 = arith.truncf %101 : vector<8x128xf32> to vector<8x128xbf16>
    %c0_49 = arith.constant 0 : index
    %c0_50 = arith.constant 0 : index
    %c0_51 = arith.constant 0 : index
    %103 = vector.load %arg13[%c0_49, %c0_50, %c0_51] : memref<1x128x256xbf16, #tpu.memory_space<vmem>>, vector<1x128x256xbf16>
    %104 = vector.shape_cast %103 : vector<1x128x256xbf16> to vector<128x256xbf16>
    %cst_52 = arith.constant dense<0.000000e+00> : vector<8x256xf32>
    %105 = tpu.matmul %102, %104, %cst_52 {dimension_numbers = #tpu.dot_dimension_numbers<[1], [0], [0], [1], [0, 0, 1, 1], [], []>} : vector<8x128xbf16>, vector<128x256xbf16>, vector<8x256xf32> -> vector<8x256xf32>
    %c0_53 = arith.constant 0 : index
    %c0_54 = arith.constant 0 : index
    %c0_55 = arith.constant 0 : index
    %106 = vector.load %arg14[%c0_53, %c0_54, %c0_55] : memref<1x1x256xf32, #tpu.memory_space<vmem>>, vector<1x1x256xf32>
    %107 = vector.shape_cast %106 : vector<1x1x256xf32> to vector<1x256xf32>
    %108 = vector.broadcast %107 : vector<1x256xf32> to vector<8x256xf32>
    %109 = arith.addf %105, %108 : vector<8x256xf32>
    %cst_56 = arith.constant 1.702000e+00 : f32
    %110 = vector.broadcast %cst_56 : f32 to vector<8x256xf32>
    %111 = arith.mulf %110, %109 : vector<8x256xf32>
    %112 = arith.negf %111 : vector<8x256xf32>
    %113 = math.exp %112 : vector<8x256xf32>
    %cst_57 = arith.constant 1.000000e+00 : f32
    %114 = vector.broadcast %cst_57 : f32 to vector<8x256xf32>
    %115 = arith.addf %114, %113 : vector<8x256xf32>
    %116 = arith.divf %114, %115 : vector<8x256xf32>
    %117 = arith.mulf %109, %116 : vector<8x256xf32>
    %118 = arith.truncf %117 : vector<8x256xf32> to vector<8x256xbf16>
    %c0_58 = arith.constant 0 : index
    %c0_59 = arith.constant 0 : index
    %c0_60 = arith.constant 0 : index
    %119 = vector.load %arg15[%c0_58, %c0_59, %c0_60] : memref<1x256x128xbf16, #tpu.memory_space<vmem>>, vector<1x256x128xbf16>
    %120 = vector.shape_cast %119 : vector<1x256x128xbf16> to vector<256x128xbf16>
    %cst_61 = arith.constant dense<0.000000e+00> : vector<8x128xf32>
    %121 = tpu.matmul %118, %120, %cst_61 {dimension_numbers = #tpu.dot_dimension_numbers<[1], [0], [0], [1], [0, 0, 1, 1], [], []>} : vector<8x256xbf16>, vector<256x128xbf16>, vector<8x128xf32> -> vector<8x128xf32>
    %c0_62 = arith.constant 0 : index
    %c0_63 = arith.constant 0 : index
    %c0_64 = arith.constant 0 : index
    %122 = vector.load %arg16[%c0_62, %c0_63, %c0_64] : memref<1x1x128xf32, #tpu.memory_space<vmem>>, vector<1x1x128xf32>
    %123 = vector.shape_cast %122 : vector<1x1x128xf32> to vector<1x128xf32>
    %124 = vector.broadcast %123 : vector<1x128xf32> to vector<8x128xf32>
    %125 = arith.addf %121, %124 : vector<8x128xf32>
    %126 = arith.addf %75, %125 : vector<8x128xf32>
    %c0_65 = arith.constant 0 : index
    %c0_66 = arith.constant 0 : index
    %127 = vector.load %arg18[%c0_65, %c0_66] : memref<8x128xf32, #tpu.memory_space<vmem>>, vector<8x128xf32>
    tpu.vector_store %arg18[%c0_65, %c0_66], %126 {strides = array<i32>} : memref<8x128xf32, #tpu.memory_space<vmem>>, vector<8x128xf32>,
    return
  }
  func.func @transform_0(%arg0: i32, %arg1: i32, %arg2: memref<2xi32, #tpu.memory_space<smem>>) -> (i32, i32, i32) {
    %c0_i32 = arith.constant 0 : i32
    %c0_i32_0 = arith.constant 0 : i32
    %c0_i32_1 = arith.constant 0 : i32
    return %arg0, %c0_i32, %c0_i32_0 : i32, i32, i32
  }
  func.func @transform_1(%arg0: i32, %arg1: i32, %arg2: memref<2xi32, #tpu.memory_space<smem>>) -> (i32, i32) {
    %c0_i32 = arith.constant 0 : i32
    %c0_i32_0 = arith.constant 0 : i32
    %c0_i32_1 = arith.constant 0 : i32
    return %c0_i32, %c0_i32_0 : i32, i32
  }
  func.func @transform_2(%arg0: i32, %arg1: i32, %arg2: memref<2xi32, #tpu.memory_space<smem>>) -> (i32, i32, i32) {
    %c0_i32 = arith.constant 0 : i32
    %c0_i32_0 = arith.constant 0 : i32
    %c0_i32_1 = arith.constant 0 : i32
    return %arg1, %c0_i32, %c0_i32_0 : i32, i32, i32
  }
  func.func @transform_3(%arg0: i32, %arg1: i32, %arg2: memref<2xi32, #tpu.memory_space<smem>>) -> (i32, i32, i32) {
    %c0_i32 = arith.constant 0 : i32
    %c0_i32_0 = arith.constant 0 : i32
    %c0_i32_1 = arith.constant 0 : i32
    return %arg1, %c0_i32, %c0_i32_0 : i32, i32, i32
  }
  func.func @transform_4(%arg0: i32, %arg1: i32, %arg2: memref<2xi32, #tpu.memory_space<smem>>) -> (i32, i32, i32, i32) {
    %c0_i32 = arith.constant 0 : i32
    %c0_i32_0 = arith.constant 0 : i32
    %c0_i32_1 = arith.constant 0 : i32
    %c0_i32_2 = arith.constant 0 : i32
    return %arg1, %c0_i32, %c0_i32_0, %c0_i32_1 : i32, i32, i32, i32
  }
  func.func @transform_5(%arg0: i32, %arg1: i32, %arg2: memref<2xi32, #tpu.memory_space<smem>>) -> (i32, i32, i32, i32) {
    %c0_i32 = arith.constant 0 : i32
    %c0_i32_0 = arith.constant 0 : i32
    %c0_i32_1 = arith.constant 0 : i32
    %c0_i32_2 = arith.constant 0 : i32
    return %arg1, %c0_i32, %c0_i32_0, %c0_i32_1 : i32, i32, i32, i32
  }
  func.func @transform_6(%arg0: i32, %arg1: i32, %arg2: memref<2xi32, #tpu.memory_space<smem>>) -> (i32, i32, i32, i32) {
    %c0_i32 = arith.constant 0 : i32
    %c0_i32_0 = arith.constant 0 : i32
    %c0_i32_1 = arith.constant 0 : i32
    %c0_i32_2 = arith.constant 0 : i32
    return %arg1, %c0_i32, %c0_i32_0, %c0_i32_1 : i32, i32, i32, i32
  }
  func.func @transform_7(%arg0: i32, %arg1: i32, %arg2: memref<2xi32, #tpu.memory_space<smem>>) -> (i32, i32, i32) {
    %c0_i32 = arith.constant 0 : i32
    %c0_i32_0 = arith.constant 0 : i32
    %c0_i32_1 = arith.constant 0 : i32
    return %arg1, %c0_i32, %c0_i32_0 : i32, i32, i32
  }
  func.func @transform_8(%arg0: i32, %arg1: i32, %arg2: memref<2xi32, #tpu.memory_space<smem>>) -> (i32, i32, i32) {
    %c0_i32 = arith.constant 0 : i32
    %c0_i32_0 = arith.constant 0 : i32
    %c0_i32_1 = arith.constant 0 : i32
    return %arg1, %c0_i32, %c0_i32_0 : i32, i32, i32
  }
  func.func @transform_9(%arg0: i32, %arg1: i32, %arg2: memref<2xi32, #tpu.memory_space<smem>>) -> (i32, i32, i32) {
    %c0_i32 = arith.constant 0 : i32
    %c0_i32_0 = arith.constant 0 : i32
    %c0_i32_1 = arith.constant 0 : i32
    return %arg1, %c0_i32, %c0_i32_0 : i32, i32, i32
  }
  func.func @transform_10(%arg0: i32, %arg1: i32, %arg2: memref<2xi32, #tpu.memory_space<smem>>) -> (i32, i32, i32) {
    %c0_i32 = arith.constant 0 : i32
    %c0_i32_0 = arith.constant 0 : i32
    %c0_i32_1 = arith.constant 0 : i32
    return %arg1, %c0_i32, %c0_i32_0 : i32, i32, i32
  }
  func.func @transform_11(%arg0: i32, %arg1: i32, %arg2: memref<2xi32, #tpu.memory_space<smem>>) -> (i32, i32, i32) {
    %c0_i32 = arith.constant 0 : i32
    %c0_i32_0 = arith.constant 0 : i32
    %c0_i32_1 = arith.constant 0 : i32
    return %arg1, %c0_i32, %c0_i32_0 : i32, i32, i32
  }
  func.func @transform_12(%arg0: i32, %arg1: i32, %arg2: memref<2xi32, #tpu.memory_space<smem>>) -> (i32, i32, i32) {
    %c0_i32 = arith.constant 0 : i32
    %c0_i32_0 = arith.constant 0 : i32
    %c0_i32_1 = arith.constant 0 : i32
    return %arg1, %c0_i32, %c0_i32_0 : i32, i32, i32
  }
  func.func @transform_13(%arg0: i32, %arg1: i32, %arg2: memref<2xi32, #tpu.memory_space<smem>>) -> (i32, i32, i32) {
    %c0_i32 = arith.constant 0 : i32
    %c0_i32_0 = arith.constant 0 : i32
    %c0_i32_1 = arith.constant 0 : i32
    return %arg1, %c0_i32, %c0_i32_0 : i32, i32, i32
  }
  func.func @transform_14(%arg0: i32, %arg1: i32, %arg2: memref<2xi32, #tpu.memory_space<smem>>) -> (i32, i32, i32) {
    %c0_i32 = arith.constant 0 : i32
    %c0_i32_0 = arith.constant 0 : i32
    %c0_i32_1 = arith.constant 0 : i32
    return %arg0, %c0_i32, %c0_i32_0 : i32, i32, i32
  }
}

module attributes {stable_mosaic.version = 11 : i64} {
  func.func @clip_encoder_kernel(%arg0: i32, %arg1: i32, %arg2: memref<2xi32, #tpu.memory_space<smem>>, %arg3: memref<1x8x256xf32, #tpu.memory_space<vmem>>, %arg4: memref<8x8xf32, #tpu.memory_space<vmem>>, %arg5: memref<1x1x256xf32, #tpu.memory_space<vmem>>, %arg6: memref<1x1x256xf32, #tpu.memory_space<vmem>>, %arg7: memref<1x2x256x384xbf16, #tpu.memory_space<vmem>>, %arg8: memref<1x2x1x384xf32, #tpu.memory_space<vmem>>, %arg9: memref<1x2x128x256xbf16, #tpu.memory_space<vmem>>, %arg10: memref<1x1x256xf32, #tpu.memory_space<vmem>>, %arg11: memref<1x1x256xf32, #tpu.memory_space<vmem>>, %arg12: memref<1x1x256xf32, #tpu.memory_space<vmem>>, %arg13: memref<1x256x512xbf16, #tpu.memory_space<vmem>>, %arg14: memref<1x1x512xf32, #tpu.memory_space<vmem>>, %arg15: memref<1x512x256xbf16, #tpu.memory_space<vmem>>, %arg16: memref<1x1x256xf32, #tpu.memory_space<vmem>>, %arg17: memref<1x256xf32, #tpu.memory_space<vmem>>, %arg18: memref<1x256xf32, #tpu.memory_space<vmem>>, %arg19: memref<256x128xbf16, #tpu.memory_space<vmem>>, %arg20: memref<1x8x256xf32, #tpu.memory_space<vmem>>, %arg21: memref<1x1x128xf32, #tpu.memory_space<vmem>>, %arg22: memref<8x256xf32, #tpu.memory_space<vmem>>) attributes {dimension_semantics = [#tpu.dimension_semantics<parallel>, #tpu.dimension_semantics<arbitrary>], iteration_bounds = array<i64: 2, 3>, scalar_prefetch = 1 : i64, scratch_operands = 1 : i64, tpu.core_type = #tpu.core_type<tc>, window_params = [{transform_indices = @transform_0, window_bounds = array<i64: 1, 8, 256>}, {pipeline_mode = #tpu.pipeline_mode<synchronous>, transform_indices = @transform_1, window_bounds = array<i64: 8, 8>}, {transform_indices = @transform_2, window_bounds = array<i64: 1, 1, 256>}, {transform_indices = @transform_3, window_bounds = array<i64: 1, 1, 256>}, {transform_indices = @transform_4, window_bounds = array<i64: 1, 2, 256, 384>}, {transform_indices = @transform_5, window_bounds = array<i64: 1, 2, 1, 384>}, {transform_indices = @transform_6, window_bounds = array<i64: 1, 2, 128, 256>}, {transform_indices = @transform_7, window_bounds = array<i64: 1, 1, 256>}, {transform_indices = @transform_8, window_bounds = array<i64: 1, 1, 256>}, {transform_indices = @transform_9, window_bounds = array<i64: 1, 1, 256>}, {transform_indices = @transform_10, window_bounds = array<i64: 1, 256, 512>}, {transform_indices = @transform_11, window_bounds = array<i64: 1, 1, 512>}, {transform_indices = @transform_12, window_bounds = array<i64: 1, 512, 256>}, {transform_indices = @transform_13, window_bounds = array<i64: 1, 1, 256>}, {pipeline_mode = #tpu.pipeline_mode<synchronous>, transform_indices = @transform_14, window_bounds = array<i64: 1, 256>}, {pipeline_mode = #tpu.pipeline_mode<synchronous>, transform_indices = @transform_15, window_bounds = array<i64: 1, 256>}, {pipeline_mode = #tpu.pipeline_mode<synchronous>, transform_indices = @transform_16, window_bounds = array<i64: 256, 128>}, {transform_indices = @transform_17, window_bounds = array<i64: 1, 8, 256>}, {transform_indices = @transform_18, window_bounds = array<i64: 1, 1, 128>}]} {
    %c0_i32 = arith.constant 0 : i32
    %0 = arith.cmpi eq, %arg1, %c0_i32 : i32
    %1 = arith.extui %0 : i1 to i32
    %c0_i32_0 = arith.constant 0 : i32
    %2 = arith.cmpi ne, %1, %c0_i32_0 : i32
    scf.if %2 {
      %c0_69 = arith.constant 0 : index
      %c0_70 = arith.constant 0 : index
      %c0_71 = arith.constant 0 : index
      %133 = vector.load %arg3[%c0_69, %c0_70, %c0_71] : memref<1x8x256xf32, #tpu.memory_space<vmem>>, vector<1x8x256xf32>
      %134 = vector.shape_cast %133 : vector<1x8x256xf32> to vector<8x256xf32>
      %c0_72 = arith.constant 0 : index
      %c0_73 = arith.constant 0 : index
      %135 = vector.load %arg22[%c0_72, %c0_73] : memref<8x256xf32, #tpu.memory_space<vmem>>, vector<8x256xf32>
      tpu.vector_store %arg22[%c0_72, %c0_73], %134 {strides = array<i32>} : memref<8x256xf32, #tpu.memory_space<vmem>>, vector<8x256xf32>,
    } else {
    }
    %c2_i32 = arith.constant 2 : i32
    %3 = arith.cmpi eq, %arg1, %c2_i32 : i32
    %4 = arith.extui %3 : i1 to i32
    %c0_i32_1 = arith.constant 0 : i32
    %5 = arith.cmpi ne, %4, %c0_i32_1 : i32
    scf.if %5 {
      %c0_69 = arith.constant 0 : index
      %c0_70 = arith.constant 0 : index
      %133 = vector.load %arg22[%c0_69, %c0_70] : memref<8x256xf32, #tpu.memory_space<vmem>>, vector<8x256xf32>
      %c0_71 = arith.constant 0 : index
      %c0_72 = arith.constant 0 : index
      %c0_73 = arith.constant 0 : index
      %134 = vector.load %arg20[%c0_71, %c0_72, %c0_73] : memref<1x8x256xf32, #tpu.memory_space<vmem>>, vector<1x8x256xf32>
      %135 = vector.shape_cast %134 : vector<1x8x256xf32> to vector<8x256xf32>
      %136 = vector.shape_cast %133 : vector<8x256xf32> to vector<1x8x256xf32>
      tpu.vector_store %arg20[%c0_71, %c0_72, %c0_73], %136 {strides = array<i32>} : memref<1x8x256xf32, #tpu.memory_space<vmem>>, vector<1x8x256xf32>,
    } else {
    }
    %c0 = arith.constant 0 : index
    %c0_2 = arith.constant 0 : index
    %6 = vector.load %arg22[%c0, %c0_2] : memref<8x256xf32, #tpu.memory_space<vmem>>, vector<8x256xf32>
    %c0_3 = arith.constant 0 : index
    %c0_4 = arith.constant 0 : index
    %c0_5 = arith.constant 0 : index
    %7 = vector.load %arg5[%c0_3, %c0_4, %c0_5] : memref<1x1x256xf32, #tpu.memory_space<vmem>>, vector<1x1x256xf32>
    %8 = vector.shape_cast %7 : vector<1x1x256xf32> to vector<1x256xf32>
    %c0_6 = arith.constant 0 : index
    %c0_7 = arith.constant 0 : index
    %c0_8 = arith.constant 0 : index
    %9 = vector.load %arg6[%c0_6, %c0_7, %c0_8] : memref<1x1x256xf32, #tpu.memory_space<vmem>>, vector<1x1x256xf32>
    %10 = vector.shape_cast %9 : vector<1x1x256xf32> to vector<1x256xf32>
    %cst = arith.constant dense<0.000000e+00> : vector<8xf32>
    %11 = vector.multi_reduction <add>, %6, %cst [1] : vector<8x256xf32> to vector<8xf32>
    %12 = vector.shape_cast %11 : vector<8xf32> to vector<8x1xf32>
    %cst_9 = arith.constant 2.560000e+02 : f32
    %13 = vector.broadcast %cst_9 : f32 to vector<8x1xf32>
    %14 = arith.divf %12, %13 : vector<8x1xf32>
    %15 = vector.broadcast %14 : vector<8x1xf32> to vector<8x256xf32>
    %16 = arith.subf %6, %15 : vector<8x256xf32>
    %17 = arith.mulf %16, %16 : vector<8x256xf32>
    %cst_10 = arith.constant dense<0.000000e+00> : vector<8xf32>
    %18 = vector.multi_reduction <add>, %17, %cst_10 [1] : vector<8x256xf32> to vector<8xf32>
    %19 = vector.shape_cast %18 : vector<8xf32> to vector<8x1xf32>
    %cst_11 = arith.constant 2.560000e+02 : f32
    %20 = vector.broadcast %cst_11 : f32 to vector<8x1xf32>
    %21 = arith.divf %19, %20 : vector<8x1xf32>
    %22 = vector.broadcast %14 : vector<8x1xf32> to vector<8x256xf32>
    %23 = arith.subf %6, %22 : vector<8x256xf32>
    %cst_12 = arith.constant 9.99999974E-6 : f32
    %24 = vector.broadcast %cst_12 : f32 to vector<8x1xf32>
    %25 = arith.addf %21, %24 : vector<8x1xf32>
    %26 = math.rsqrt %25 : vector<8x1xf32>
    %27 = vector.broadcast %26 : vector<8x1xf32> to vector<8x256xf32>
    %28 = arith.mulf %23, %27 : vector<8x256xf32>
    %29 = vector.broadcast %8 : vector<1x256xf32> to vector<8x256xf32>
    %30 = arith.mulf %28, %29 : vector<8x256xf32>
    %31 = vector.broadcast %10 : vector<1x256xf32> to vector<8x256xf32>
    %32 = arith.addf %30, %31 : vector<8x256xf32>
    %33 = arith.truncf %32 : vector<8x256xf32> to vector<8x256xbf16>
    %34 = vector.shape_cast %33 : vector<8x256xbf16> to vector<1x8x256xbf16>
    %35 = vector.broadcast %34 : vector<1x8x256xbf16> to vector<2x8x256xbf16>
    %c0_13 = arith.constant 0 : index
    %c0_14 = arith.constant 0 : index
    %c0_15 = arith.constant 0 : index
    %c0_16 = arith.constant 0 : index
    %36 = vector.load %arg7[%c0_13, %c0_14, %c0_15, %c0_16] : memref<1x2x256x384xbf16, #tpu.memory_space<vmem>>, vector<1x2x256x384xbf16>
    %37 = vector.shape_cast %36 : vector<1x2x256x384xbf16> to vector<2x256x384xbf16>
    %cst_17 = arith.constant dense<0.000000e+00> : vector<2x8x384xf32>
    %38 = tpu.matmul %35, %37, %cst_17 {dimension_numbers = #tpu.dot_dimension_numbers<[2], [1], [1], [2], [0, 0, 0, 1, 1, 2], [0], [0]>} : vector<2x8x256xbf16>, vector<2x256x384xbf16>, vector<2x8x384xf32> -> vector<2x8x384xf32>
    %c0_18 = arith.constant 0 : index
    %c0_19 = arith.constant 0 : index
    %c0_20 = arith.constant 0 : index
    %c0_21 = arith.constant 0 : index
    %39 = vector.load %arg8[%c0_18, %c0_19, %c0_20, %c0_21] : memref<1x2x1x384xf32, #tpu.memory_space<vmem>>, vector<1x2x1x384xf32>
    %40 = vector.shape_cast %39 : vector<1x2x1x384xf32> to vector<2x1x384xf32>
    %41 = vector.broadcast %40 : vector<2x1x384xf32> to vector<2x8x384xf32>
    %42 = arith.addf %38, %41 : vector<2x8x384xf32>
    %43 = vector.extract_strided_slice %42 {offsets = [0, 0, 0], sizes = [2, 8, 128], strides = [1, 1, 1]} : vector<2x8x384xf32> to vector<2x8x128xf32>
    %44 = vector.extract_strided_slice %42 {offsets = [0, 0, 128], sizes = [2, 8, 128], strides = [1, 1, 1]} : vector<2x8x384xf32> to vector<2x8x128xf32>
    %45 = vector.extract_strided_slice %42 {offsets = [0, 0, 256], sizes = [2, 8, 128], strides = [1, 1, 1]} : vector<2x8x384xf32> to vector<2x8x128xf32>
    %46 = arith.truncf %43 : vector<2x8x128xf32> to vector<2x8x128xbf16>
    %47 = arith.truncf %44 : vector<2x8x128xf32> to vector<2x8x128xbf16>
    %cst_22 = arith.constant dense<0.000000e+00> : vector<2x8x8xf32>
    %48 = tpu.matmul %46, %47, %cst_22 {dimension_numbers = #tpu.dot_dimension_numbers<[2], [2], [1], [1], [0, 0, 0, 1, 1, 1], [0], [0]>} : vector<2x8x128xbf16>, vector<2x8x128xbf16>, vector<2x8x8xf32> -> vector<2x8x8xf32>
    %cst_23 = arith.constant 0.0883883461 : f32
    %49 = vector.broadcast %cst_23 : f32 to vector<2x8x8xf32>
    %50 = arith.mulf %48, %49 : vector<2x8x8xf32>
    %c0_24 = arith.constant 0 : index
    %c0_25 = arith.constant 0 : index
    %51 = vector.load %arg4[%c0_24, %c0_25] : memref<8x8xf32, #tpu.memory_space<vmem>>, vector<8x8xf32>
    %52 = vector.shape_cast %51 : vector<8x8xf32> to vector<1x8x8xf32>
    %53 = vector.broadcast %52 : vector<1x8x8xf32> to vector<2x8x8xf32>
    %54 = arith.addf %50, %53 : vector<2x8x8xf32>
    %cst_26 = arith.constant dense<0xFF800000> : vector<2x8xf32>
    %55 = vector.multi_reduction <maximumf>, %54, %cst_26 [2] : vector<2x8x8xf32> to vector<2x8xf32>
    %56 = vector.shape_cast %55 : vector<2x8xf32> to vector<2x8x1xf32>
    %57 = vector.broadcast %56 : vector<2x8x1xf32> to vector<2x8x8xf32>
    %58 = arith.subf %54, %57 : vector<2x8x8xf32>
    %59 = math.exp %58 : vector<2x8x8xf32>
    %cst_27 = arith.constant dense<0.000000e+00> : vector<2x8xf32>
    %60 = vector.multi_reduction <add>, %59, %cst_27 [2] : vector<2x8x8xf32> to vector<2x8xf32>
    %61 = vector.shape_cast %60 : vector<2x8xf32> to vector<2x8x1xf32>
    %62 = tpu.reciprocal %61 {approx = true} : vector<2x8x1xf32> -> vector<2x8x1xf32>
    %63 = vector.broadcast %62 : vector<2x8x1xf32> to vector<2x8x8xf32>
    %64 = arith.mulf %59, %63 : vector<2x8x8xf32>
    %65 = arith.truncf %64 : vector<2x8x8xf32> to vector<2x8x8xbf16>
    %66 = arith.truncf %45 : vector<2x8x128xf32> to vector<2x8x128xbf16>
    %cst_28 = arith.constant dense<0.000000e+00> : vector<2x8x128xf32>
    %67 = tpu.matmul %65, %66, %cst_28 {dimension_numbers = #tpu.dot_dimension_numbers<[2], [1], [1], [2], [0, 0, 0, 1, 1, 2], [0], [0]>} : vector<2x8x8xbf16>, vector<2x8x128xbf16>, vector<2x8x128xf32> -> vector<2x8x128xf32>
    %68 = arith.truncf %67 : vector<2x8x128xf32> to vector<2x8x128xbf16>
    %c0_29 = arith.constant 0 : index
    %c0_30 = arith.constant 0 : index
    %c0_31 = arith.constant 0 : index
    %c0_32 = arith.constant 0 : index
    %69 = vector.load %arg9[%c0_29, %c0_30, %c0_31, %c0_32] : memref<1x2x128x256xbf16, #tpu.memory_space<vmem>>, vector<1x2x128x256xbf16>
    %70 = vector.shape_cast %69 : vector<1x2x128x256xbf16> to vector<2x128x256xbf16>
    %cst_33 = arith.constant dense<0.000000e+00> : vector<2x8x256xf32>
    %71 = tpu.matmul %68, %70, %cst_33 {dimension_numbers = #tpu.dot_dimension_numbers<[2], [1], [1], [2], [0, 0, 0, 1, 1, 2], [0], [0]>} : vector<2x8x128xbf16>, vector<2x128x256xbf16>, vector<2x8x256xf32> -> vector<2x8x256xf32>
    %cst_34 = arith.constant dense<0.000000e+00> : vector<8x256xf32>
    %72 = vector.multi_reduction <add>, %71, %cst_34 [0] : vector<2x8x256xf32> to vector<8x256xf32>
    %c0_35 = arith.constant 0 : index
    %c0_36 = arith.constant 0 : index
    %c0_37 = arith.constant 0 : index
    %73 = vector.load %arg10[%c0_35, %c0_36, %c0_37] : memref<1x1x256xf32, #tpu.memory_space<vmem>>, vector<1x1x256xf32>
    %74 = vector.shape_cast %73 : vector<1x1x256xf32> to vector<1x256xf32>
    %75 = vector.broadcast %74 : vector<1x256xf32> to vector<8x256xf32>
    %76 = arith.addf %72, %75 : vector<8x256xf32>
    %77 = arith.addf %6, %76 : vector<8x256xf32>
    %c0_38 = arith.constant 0 : index
    %c0_39 = arith.constant 0 : index
    %c0_40 = arith.constant 0 : index
    %78 = vector.load %arg11[%c0_38, %c0_39, %c0_40] : memref<1x1x256xf32, #tpu.memory_space<vmem>>, vector<1x1x256xf32>
    %79 = vector.shape_cast %78 : vector<1x1x256xf32> to vector<1x256xf32>
    %c0_41 = arith.constant 0 : index
    %c0_42 = arith.constant 0 : index
    %c0_43 = arith.constant 0 : index
    %80 = vector.load %arg12[%c0_41, %c0_42, %c0_43] : memref<1x1x256xf32, #tpu.memory_space<vmem>>, vector<1x1x256xf32>
    %81 = vector.shape_cast %80 : vector<1x1x256xf32> to vector<1x256xf32>
    %cst_44 = arith.constant dense<0.000000e+00> : vector<8xf32>
    %82 = vector.multi_reduction <add>, %77, %cst_44 [1] : vector<8x256xf32> to vector<8xf32>
    %83 = vector.shape_cast %82 : vector<8xf32> to vector<8x1xf32>
    %cst_45 = arith.constant 2.560000e+02 : f32
    %84 = vector.broadcast %cst_45 : f32 to vector<8x1xf32>
    %85 = arith.divf %83, %84 : vector<8x1xf32>
    %86 = vector.broadcast %85 : vector<8x1xf32> to vector<8x256xf32>
    %87 = arith.subf %77, %86 : vector<8x256xf32>
    %88 = arith.mulf %87, %87 : vector<8x256xf32>
    %cst_46 = arith.constant dense<0.000000e+00> : vector<8xf32>
    %89 = vector.multi_reduction <add>, %88, %cst_46 [1] : vector<8x256xf32> to vector<8xf32>
    %90 = vector.shape_cast %89 : vector<8xf32> to vector<8x1xf32>
    %cst_47 = arith.constant 2.560000e+02 : f32
    %91 = vector.broadcast %cst_47 : f32 to vector<8x1xf32>
    %92 = arith.divf %90, %91 : vector<8x1xf32>
    %93 = vector.broadcast %85 : vector<8x1xf32> to vector<8x256xf32>
    %94 = arith.subf %77, %93 : vector<8x256xf32>
    %cst_48 = arith.constant 9.99999974E-6 : f32
    %95 = vector.broadcast %cst_48 : f32 to vector<8x1xf32>
    %96 = arith.addf %92, %95 : vector<8x1xf32>
    %97 = math.rsqrt %96 : vector<8x1xf32>
    %98 = vector.broadcast %97 : vector<8x1xf32> to vector<8x256xf32>
    %99 = arith.mulf %94, %98 : vector<8x256xf32>
    %100 = vector.broadcast %79 : vector<1x256xf32> to vector<8x256xf32>
    %101 = arith.mulf %99, %100 : vector<8x256xf32>
    %102 = vector.broadcast %81 : vector<1x256xf32> to vector<8x256xf32>
    %103 = arith.addf %101, %102 : vector<8x256xf32>
    %104 = arith.truncf %103 : vector<8x256xf32> to vector<8x256xbf16>
    %c0_49 = arith.constant 0 : index
    %c0_50 = arith.constant 0 : index
    %c0_51 = arith.constant 0 : index
    %105 = vector.load %arg13[%c0_49, %c0_50, %c0_51] : memref<1x256x512xbf16, #tpu.memory_space<vmem>>, vector<1x256x512xbf16>
    %106 = vector.shape_cast %105 : vector<1x256x512xbf16> to vector<256x512xbf16>
    %cst_52 = arith.constant dense<0.000000e+00> : vector<8x512xf32>
    %107 = tpu.matmul %104, %106, %cst_52 {dimension_numbers = #tpu.dot_dimension_numbers<[1], [0], [0], [1], [0, 0, 1, 1], [], []>} : vector<8x256xbf16>, vector<256x512xbf16>, vector<8x512xf32> -> vector<8x512xf32>
    %c0_53 = arith.constant 0 : index
    %c0_54 = arith.constant 0 : index
    %c0_55 = arith.constant 0 : index
    %108 = vector.load %arg14[%c0_53, %c0_54, %c0_55] : memref<1x1x512xf32, #tpu.memory_space<vmem>>, vector<1x1x512xf32>
    %109 = vector.shape_cast %108 : vector<1x1x512xf32> to vector<1x512xf32>
    %110 = vector.broadcast %109 : vector<1x512xf32> to vector<8x512xf32>
    %111 = arith.addf %107, %110 : vector<8x512xf32>
    %cst_56 = arith.constant 1.702000e+00 : f32
    %112 = vector.broadcast %cst_56 : f32 to vector<8x512xf32>
    %113 = arith.mulf %112, %111 : vector<8x512xf32>
    %114 = arith.negf %113 : vector<8x512xf32>
    %115 = math.exp %114 : vector<8x512xf32>
    %cst_57 = arith.constant 1.000000e+00 : f32
    %116 = vector.broadcast %cst_57 : f32 to vector<8x512xf32>
    %117 = arith.addf %116, %115 : vector<8x512xf32>
    %118 = arith.divf %116, %117 : vector<8x512xf32>
    %119 = arith.mulf %111, %118 : vector<8x512xf32>
    %120 = arith.truncf %119 : vector<8x512xf32> to vector<8x512xbf16>
    %c0_58 = arith.constant 0 : index
    %c0_59 = arith.constant 0 : index
    %c0_60 = arith.constant 0 : index
    %121 = vector.load %arg15[%c0_58, %c0_59, %c0_60] : memref<1x512x256xbf16, #tpu.memory_space<vmem>>, vector<1x512x256xbf16>
    %122 = vector.shape_cast %121 : vector<1x512x256xbf16> to vector<512x256xbf16>
    %cst_61 = arith.constant dense<0.000000e+00> : vector<8x256xf32>
    %123 = tpu.matmul %120, %122, %cst_61 {dimension_numbers = #tpu.dot_dimension_numbers<[1], [0], [0], [1], [0, 0, 1, 1], [], []>} : vector<8x512xbf16>, vector<512x256xbf16>, vector<8x256xf32> -> vector<8x256xf32>
    %c0_62 = arith.constant 0 : index
    %c0_63 = arith.constant 0 : index
    %c0_64 = arith.constant 0 : index
    %124 = vector.load %arg16[%c0_62, %c0_63, %c0_64] : memref<1x1x256xf32, #tpu.memory_space<vmem>>, vector<1x1x256xf32>
    %125 = vector.shape_cast %124 : vector<1x1x256xf32> to vector<1x256xf32>
    %126 = vector.broadcast %125 : vector<1x256xf32> to vector<8x256xf32>
    %127 = arith.addf %123, %126 : vector<8x256xf32>
    %128 = arith.addf %77, %127 : vector<8x256xf32>
    %c0_65 = arith.constant 0 : index
    %c0_66 = arith.constant 0 : index
    %129 = vector.load %arg22[%c0_65, %c0_66] : memref<8x256xf32, #tpu.memory_space<vmem>>, vector<8x256xf32>
    tpu.vector_store %arg22[%c0_65, %c0_66], %128 {strides = array<i32>} : memref<8x256xf32, #tpu.memory_space<vmem>>, vector<8x256xf32>,
    %c2_i32_67 = arith.constant 2 : i32
    %130 = arith.cmpi eq, %arg1, %c2_i32_67 : i32
    %131 = arith.extui %130 : i1 to i32
    %c0_i32_68 = arith.constant 0 : i32
    %132 = arith.cmpi ne, %131, %c0_i32_68 : i32
    scf.if %132 {
      %133 = arith.index_cast %arg0 : i32 to index
      %134 = memref.load %arg2[%133] : memref<2xi32, #tpu.memory_space<smem>>
      %135 = tpu.iota {dimensions = array<i32: 0>} : vector<8x1xi32>
      %136 = vector.broadcast %134 : i32 to vector<8x1xi32>
      %137 = arith.cmpi eq, %135, %136 : vector<8x1xi32>
      %138 = arith.extui %137 : vector<8x1xi1> to vector<8x1xi32>
      %139 = arith.sitofp %138 : vector<8x1xi32> to vector<8x1xf32>
      %140 = vector.broadcast %139 : vector<8x1xf32> to vector<8x256xf32>
      %141 = arith.mulf %140, %128 : vector<8x256xf32>
      %cst_69 = arith.constant dense<0.000000e+00> : vector<256xf32>
      %142 = vector.multi_reduction <add>, %141, %cst_69 [0] : vector<8x256xf32> to vector<256xf32>
      %143 = vector.shape_cast %142 : vector<256xf32> to vector<1x256xf32>
      %c0_70 = arith.constant 0 : index
      %c0_71 = arith.constant 0 : index
      %144 = vector.load %arg17[%c0_70, %c0_71] : memref<1x256xf32, #tpu.memory_space<vmem>>, vector<1x256xf32>
      %c0_72 = arith.constant 0 : index
      %c0_73 = arith.constant 0 : index
      %145 = vector.load %arg18[%c0_72, %c0_73] : memref<1x256xf32, #tpu.memory_space<vmem>>, vector<1x256xf32>
      %cst_74 = arith.constant dense<0.000000e+00> : vector<1xf32>
      %146 = vector.multi_reduction <add>, %143, %cst_74 [1] : vector<1x256xf32> to vector<1xf32>
      %147 = vector.shape_cast %146 : vector<1xf32> to vector<1x1xf32>
      %cst_75 = arith.constant 2.560000e+02 : f32
      %148 = vector.broadcast %cst_75 : f32 to vector<1x1xf32>
      %149 = arith.divf %147, %148 : vector<1x1xf32>
      %150 = vector.broadcast %149 : vector<1x1xf32> to vector<1x256xf32>
      %151 = arith.subf %143, %150 : vector<1x256xf32>
      %152 = arith.mulf %151, %151 : vector<1x256xf32>
      %cst_76 = arith.constant dense<0.000000e+00> : vector<1xf32>
      %153 = vector.multi_reduction <add>, %152, %cst_76 [1] : vector<1x256xf32> to vector<1xf32>
      %154 = vector.shape_cast %153 : vector<1xf32> to vector<1x1xf32>
      %cst_77 = arith.constant 2.560000e+02 : f32
      %155 = vector.broadcast %cst_77 : f32 to vector<1x1xf32>
      %156 = arith.divf %154, %155 : vector<1x1xf32>
      %157 = vector.broadcast %149 : vector<1x1xf32> to vector<1x256xf32>
      %158 = arith.subf %143, %157 : vector<1x256xf32>
      %cst_78 = arith.constant 9.99999974E-6 : f32
      %159 = vector.broadcast %cst_78 : f32 to vector<1x1xf32>
      %160 = arith.addf %156, %159 : vector<1x1xf32>
      %161 = math.rsqrt %160 : vector<1x1xf32>
      %162 = vector.broadcast %161 : vector<1x1xf32> to vector<1x256xf32>
      %163 = arith.mulf %158, %162 : vector<1x256xf32>
      %164 = arith.mulf %163, %144 : vector<1x256xf32>
      %165 = arith.addf %164, %145 : vector<1x256xf32>
      %166 = arith.truncf %165 : vector<1x256xf32> to vector<1x256xbf16>
      %c0_79 = arith.constant 0 : index
      %c0_80 = arith.constant 0 : index
      %167 = vector.load %arg19[%c0_79, %c0_80] : memref<256x128xbf16, #tpu.memory_space<vmem>>, vector<256x128xbf16>
      %cst_81 = arith.constant dense<0.000000e+00> : vector<1x128xf32>
      %168 = tpu.matmul %166, %167, %cst_81 {dimension_numbers = #tpu.dot_dimension_numbers<[1], [0], [0], [1], [0, 0, 1, 1], [], []>} : vector<1x256xbf16>, vector<256x128xbf16>, vector<1x128xf32> -> vector<1x128xf32>
      %c0_82 = arith.constant 0 : index
      %c0_83 = arith.constant 0 : index
      %c0_84 = arith.constant 0 : index
      %169 = vector.load %arg21[%c0_82, %c0_83, %c0_84] : memref<1x1x128xf32, #tpu.memory_space<vmem>>, vector<1x1x128xf32>
      %170 = vector.shape_cast %169 : vector<1x1x128xf32> to vector<1x128xf32>
      %171 = vector.shape_cast %168 : vector<1x128xf32> to vector<1x1x128xf32>
      tpu.vector_store %arg21[%c0_82, %c0_83, %c0_84], %171 {strides = array<i32>} : memref<1x1x128xf32, #tpu.memory_space<vmem>>, vector<1x1x128xf32>,
    } else {
    }
    return
  }
  func.func @transform_0(%arg0: i32, %arg1: i32, %arg2: memref<2xi32, #tpu.memory_space<smem>>) -> (i32, i32, i32) {
    %c0_i32 = arith.constant 0 : i32
    %c0_i32_0 = arith.constant 0 : i32
    %c0_i32_1 = arith.constant 0 : i32
    return %arg0, %c0_i32, %c0_i32_0 : i32, i32, i32
  }
  func.func @transform_1(%arg0: i32, %arg1: i32, %arg2: memref<2xi32, #tpu.memory_space<smem>>) -> (i32, i32) {
    %c0_i32 = arith.constant 0 : i32
    %c0_i32_0 = arith.constant 0 : i32
    %c0_i32_1 = arith.constant 0 : i32
    return %c0_i32, %c0_i32_0 : i32, i32
  }
  func.func @transform_2(%arg0: i32, %arg1: i32, %arg2: memref<2xi32, #tpu.memory_space<smem>>) -> (i32, i32, i32) {
    %c0_i32 = arith.constant 0 : i32
    %c0_i32_0 = arith.constant 0 : i32
    %c0_i32_1 = arith.constant 0 : i32
    return %arg1, %c0_i32, %c0_i32_0 : i32, i32, i32
  }
  func.func @transform_3(%arg0: i32, %arg1: i32, %arg2: memref<2xi32, #tpu.memory_space<smem>>) -> (i32, i32, i32) {
    %c0_i32 = arith.constant 0 : i32
    %c0_i32_0 = arith.constant 0 : i32
    %c0_i32_1 = arith.constant 0 : i32
    return %arg1, %c0_i32, %c0_i32_0 : i32, i32, i32
  }
  func.func @transform_4(%arg0: i32, %arg1: i32, %arg2: memref<2xi32, #tpu.memory_space<smem>>) -> (i32, i32, i32, i32) {
    %c0_i32 = arith.constant 0 : i32
    %c0_i32_0 = arith.constant 0 : i32
    %c0_i32_1 = arith.constant 0 : i32
    %c0_i32_2 = arith.constant 0 : i32
    return %arg1, %c0_i32, %c0_i32_0, %c0_i32_1 : i32, i32, i32, i32
  }
  func.func @transform_5(%arg0: i32, %arg1: i32, %arg2: memref<2xi32, #tpu.memory_space<smem>>) -> (i32, i32, i32, i32) {
    %c0_i32 = arith.constant 0 : i32
    %c0_i32_0 = arith.constant 0 : i32
    %c0_i32_1 = arith.constant 0 : i32
    %c0_i32_2 = arith.constant 0 : i32
    return %arg1, %c0_i32, %c0_i32_0, %c0_i32_1 : i32, i32, i32, i32
  }
  func.func @transform_6(%arg0: i32, %arg1: i32, %arg2: memref<2xi32, #tpu.memory_space<smem>>) -> (i32, i32, i32, i32) {
    %c0_i32 = arith.constant 0 : i32
    %c0_i32_0 = arith.constant 0 : i32
    %c0_i32_1 = arith.constant 0 : i32
    %c0_i32_2 = arith.constant 0 : i32
    return %arg1, %c0_i32, %c0_i32_0, %c0_i32_1 : i32, i32, i32, i32
  }
  func.func @transform_7(%arg0: i32, %arg1: i32, %arg2: memref<2xi32, #tpu.memory_space<smem>>) -> (i32, i32, i32) {
    %c0_i32 = arith.constant 0 : i32
    %c0_i32_0 = arith.constant 0 : i32
    %c0_i32_1 = arith.constant 0 : i32
    return %arg1, %c0_i32, %c0_i32_0 : i32, i32, i32
  }
  func.func @transform_8(%arg0: i32, %arg1: i32, %arg2: memref<2xi32, #tpu.memory_space<smem>>) -> (i32, i32, i32) {
    %c0_i32 = arith.constant 0 : i32
    %c0_i32_0 = arith.constant 0 : i32
    %c0_i32_1 = arith.constant 0 : i32
    return %arg1, %c0_i32, %c0_i32_0 : i32, i32, i32
  }
  func.func @transform_9(%arg0: i32, %arg1: i32, %arg2: memref<2xi32, #tpu.memory_space<smem>>) -> (i32, i32, i32) {
    %c0_i32 = arith.constant 0 : i32
    %c0_i32_0 = arith.constant 0 : i32
    %c0_i32_1 = arith.constant 0 : i32
    return %arg1, %c0_i32, %c0_i32_0 : i32, i32, i32
  }
  func.func @transform_10(%arg0: i32, %arg1: i32, %arg2: memref<2xi32, #tpu.memory_space<smem>>) -> (i32, i32, i32) {
    %c0_i32 = arith.constant 0 : i32
    %c0_i32_0 = arith.constant 0 : i32
    %c0_i32_1 = arith.constant 0 : i32
    return %arg1, %c0_i32, %c0_i32_0 : i32, i32, i32
  }
  func.func @transform_11(%arg0: i32, %arg1: i32, %arg2: memref<2xi32, #tpu.memory_space<smem>>) -> (i32, i32, i32) {
    %c0_i32 = arith.constant 0 : i32
    %c0_i32_0 = arith.constant 0 : i32
    %c0_i32_1 = arith.constant 0 : i32
    return %arg1, %c0_i32, %c0_i32_0 : i32, i32, i32
  }
  func.func @transform_12(%arg0: i32, %arg1: i32, %arg2: memref<2xi32, #tpu.memory_space<smem>>) -> (i32, i32, i32) {
    %c0_i32 = arith.constant 0 : i32
    %c0_i32_0 = arith.constant 0 : i32
    %c0_i32_1 = arith.constant 0 : i32
    return %arg1, %c0_i32, %c0_i32_0 : i32, i32, i32
  }
  func.func @transform_13(%arg0: i32, %arg1: i32, %arg2: memref<2xi32, #tpu.memory_space<smem>>) -> (i32, i32, i32) {
    %c0_i32 = arith.constant 0 : i32
    %c0_i32_0 = arith.constant 0 : i32
    %c0_i32_1 = arith.constant 0 : i32
    return %arg1, %c0_i32, %c0_i32_0 : i32, i32, i32
  }
  func.func @transform_14(%arg0: i32, %arg1: i32, %arg2: memref<2xi32, #tpu.memory_space<smem>>) -> (i32, i32) {
    %c0_i32 = arith.constant 0 : i32
    %c0_i32_0 = arith.constant 0 : i32
    %c0_i32_1 = arith.constant 0 : i32
    return %c0_i32, %c0_i32_0 : i32, i32
  }
  func.func @transform_15(%arg0: i32, %arg1: i32, %arg2: memref<2xi32, #tpu.memory_space<smem>>) -> (i32, i32) {
    %c0_i32 = arith.constant 0 : i32
    %c0_i32_0 = arith.constant 0 : i32
    %c0_i32_1 = arith.constant 0 : i32
    return %c0_i32, %c0_i32_0 : i32, i32
  }
  func.func @transform_16(%arg0: i32, %arg1: i32, %arg2: memref<2xi32, #tpu.memory_space<smem>>) -> (i32, i32) {
    %c0_i32 = arith.constant 0 : i32
    %c0_i32_0 = arith.constant 0 : i32
    %c0_i32_1 = arith.constant 0 : i32
    return %c0_i32, %c0_i32_0 : i32, i32
  }
  func.func @transform_17(%arg0: i32, %arg1: i32, %arg2: memref<2xi32, #tpu.memory_space<smem>>) -> (i32, i32, i32) {
    %c0_i32 = arith.constant 0 : i32
    %c0_i32_0 = arith.constant 0 : i32
    %c0_i32_1 = arith.constant 0 : i32
    return %arg0, %c0_i32, %c0_i32_0 : i32, i32, i32
  }
  func.func @transform_18(%arg0: i32, %arg1: i32, %arg2: memref<2xi32, #tpu.memory_space<smem>>) -> (i32, i32, i32) {
    %c0_i32 = arith.constant 0 : i32
    %c0_i32_0 = arith.constant 0 : i32
    %c0_i32_1 = arith.constant 0 : i32
    return %arg0, %c0_i32, %c0_i32_0 : i32, i32, i32
  }
}

</mosaic_0001>

<llo_original>
// kernel: prompt_encoder_forward.2
$region0: #{prompt_encoder_forward.2}
  #allocation0 [shape = 'u32[]', space=smem, size = 0x4, offset = 0x4, fixed_abs, tag = 'smem constant byte address 0x4 - core index']
  #allocation1 [shape = 'u32[144,128]{1,0:T(1,128)}', space=vmem, size = 0x12000, scoped, tag = 'internal scratch']
  #allocation2 [shape = 'f32[8,128]{1,0:T(8,128)}', space=vmem, size = 0x1000, scoped, tag = 'scratch operand']
  #allocation3 [shape = 's32[1]{0}', space=sflag, size = 0x4, scoped, tag = 'scoped memory for prompt_encoder_forward.2']
  #allocation4 [shape = 'u8[512]{0}', space=smem, size = 0x200, scoped, tag = 'prefetched SMEM operand 0']
  %s0 = inlined_call_operand.vmem [shape: s32[2], index: 0, kind: input, shape index: {}]
  %s1 = inlined_call_operand.vmem [shape: f32[2,8,128], index: 1, kind: input, shape index: {}]
  %s2 = inlined_call_operand.vmem [shape: f32[8,8], index: 2, kind: input, shape index: {}]
  %s3 = inlined_call_operand.hbm [shape: f32[3,1,128], index: 3, kind: input, shape index: {}]
  %s4 = inlined_call_operand.hbm [shape: f32[3,1,128], index: 4, kind: input, shape index: {}]
  %s5 = inlined_call_operand.hbm [shape: bf16[3,1,128,384], index: 5, kind: input, shape index: {}]
  %s6 = inlined_call_operand.hbm [shape: f32[3,1,1,384], index: 6, kind: input, shape index: {}]
  %s7 = inlined_call_operand.hbm [shape: bf16[3,1,128,128], index: 7, kind: input, shape index: {}]
  %s8 = inlined_call_operand.hbm [shape: f32[3,1,128], index: 8, kind: input, shape index: {}]
  %s9 = inlined_call_operand.hbm [shape: f32[3,1,128], index: 9, kind: input, shape index: {}]
  %s10 = inlined_call_operand.hbm [shape: f32[3,1,128], index: 10, kind: input, shape index: {}]
  %s11 = inlined_call_operand.hbm [shape: bf16[3,128,256], index: 11, kind: input, shape index: {}]
  %s12 = inlined_call_operand.hbm [shape: f32[3,1,256], index: 12, kind: input, shape index: {}]
  %s13 = inlined_call_operand.hbm [shape: bf16[3,256,128], index: 13, kind: input, shape index: {}]
  %s14 = inlined_call_operand.hbm [shape: f32[3,1,128], index: 14, kind: input, shape index: {}]
  %s15 = inlined_call_operand.vmem [shape: f32[2,8,128], index: 15, kind: output, shape index: {}]
  %s16 = sld [smem:[#allocation0]]
  $region145: #{prompt_encoder_forward.2} parent=0
    _
  %s18 = ssub.s32 1, %s16
  %s19 = scalar_select 0, %s18, %s16
  %s20 = sshll.u32 %s0, 4
  %s21 = int_to_ptr.vmem [resolvable:$true] %s20
  %23 = dma.vmem_to_smem %s21, 16, [#allocation4], [#allocation3]
  %24 = dma.done [#allocation3], 16
  %25 = sfence
  $region1: #{prompt_encoder_forward.2} parent=0
    #allocation5 [shape = 'u8[1024]{0}', space=vmem, size = 0x400, scoped, tag = 'input window, operand 3']
    #allocation6 [shape = 's32[2]{0}', space=sflag, size = 0x8, scoped, tag = 'scoped memory for prompt_encoder_forward.2']
    #allocation7 [shape = 'u8[1024]{0}', space=vmem, size = 0x400, scoped, tag = 'input window, operand 4']
    #allocation8 [shape = 's32[2]{0}', space=sflag, size = 0x8, scoped, tag = 'scoped memory for prompt_encoder_forward.2']
    #allocation9 [shape = 'u8[196608]{0}', space=vmem, size = 0x30000, scoped, tag = 'input window, operand 5']
    #allocation10 [shape = 'u8[3072]{0}', space=vmem, size = 0xc00, scoped, tag = 'input window, operand 6']
    #allocation11 [shape = 's32[2]{0}', space=sflag, size = 0x8, scoped, tag = 'scoped memory for prompt_encoder_forward.2']
    #allocation12 [shape = 'u8[65536]{0}', space=vmem, size = 0x10000, scoped, tag = 'input window, operand 7']
    #allocation13 [shape = 'u8[1024]{0}', space=vmem, size = 0x400, scoped, tag = 'input window, operand 8']
    #allocation14 [shape = 's32[2]{0}', space=sflag, size = 0x8, scoped, tag = 'scoped memory for prompt_encoder_forward.2']
    #allocation15 [shape = 'u8[1024]{0}', space=vmem, size = 0x400, scoped, tag = 'input window, operand 9']
    #allocation16 [shape = 'u8[1024]{0}', space=vmem, size = 0x400, scoped, tag = 'input window, operand 10']
    #allocation17 [shape = 's32[2]{0}', space=sflag, size = 0x8, scoped, tag = 'scoped memory for prompt_encoder_forward.2']
    #allocation18 [shape = 'u8[131072]{0}', space=vmem, size = 0x20000, scoped, tag = 'input window, operand 11']
    #allocation19 [shape = 'u8[2048]{0}', space=vmem, size = 0x800, scoped, tag = 'input window, operand 12']
    #allocation20 [shape = 's32[2]{0}', space=sflag, size = 0x8, scoped, tag = 'scoped memory for prompt_encoder_forward.2']
    #allocation21 [shape = 'u8[131072]{0}', space=vmem, size = 0x20000, scoped, tag = 'input window, operand 13']
    #allocation22 [shape = 'u8[1024]{0}', space=vmem, size = 0x400, scoped, tag = 'input window, operand 14']
    #allocation23 [shape = 's32[2]{0}', space=sflag, size = 0x8, scoped, tag = 'scoped memory for prompt_encoder_forward.2']
    %26 = vsyncpa [#allocation6], 0
    %s27 = scalar_lea.sflag [#allocation6], 1
    %28 = vsyncpa %s27, 0
    %29 = vsyncpa [#allocation8], 0
    %s30 = scalar_lea.sflag [#allocation8], 1
    %31 = vsyncpa %s30, 0
    %32 = vsyncpa [#allocation11], 0
    %s33 = scalar_lea.sflag [#allocation11], 1
    %34 = vsyncpa %s33, 0
    %35 = vsyncpa [#allocation14], 0
    %s36 = scalar_lea.sflag [#allocation14], 1
    %37 = vsyncpa %s36, 0
    %38 = vsyncpa [#allocation17], 0
    %s39 = scalar_lea.sflag [#allocation17], 1
    %40 = vsyncpa %s39, 0
    %41 = vsyncpa [#allocation20], 0
    %s42 = scalar_lea.sflag [#allocation20], 1
    %43 = vsyncpa %s42, 0
    %44 = vsyncpa [#allocation23], 0
    %s45 = scalar_lea.sflag [#allocation23], 1
    %46 = vsyncpa %s45, 0
    loop: start=0, step=1, limit=8
    $region2: #{prompt_encoder_forward.2} parent=1 // loop_pre_header
      _
    $region3: #{prompt_encoder_forward.2} parent=1 // loop_header
      %s48 = sphi 0, %s52
      %p49 = scmp.ge.s32.totalorder %s48, 8
      %s55 = sphi 0, %s67
      %s56 = sphi 0, %s63
      %s57 = sphi 0, %s55
      %s58 = sphi 0, %s56
      %s59 = sphi 0, %s57
      %s60 = sphi 0, %s58
      %s70 = sphi 0, %s72
      %s73 = sphi 0, %s70
      %s74 = sphi 0, %s73
      %s90 = sphi 0, %s74
      %s94 = sphi 0, %s94
      %s96 = sphi 0, %s94
      %s97 = sphi 0, %s96
      %s111 = sphi 0, %s97
      %s117 = sphi 0, %s119
      %s120 = sphi 0, %s117
      %s121 = sphi 0, %s120
      %s137 = sphi 0, %s121
      %s143 = sphi 0, %s145
      %s146 = sphi 0, %s143
      %s147 = sphi 0, %s146
      %s163 = sphi 0, %s147
      %s169 = sphi 0, %s171
      %s172 = sphi 0, %s169
      %s173 = sphi 0, %s172
      %s189 = sphi 0, %s173
      %s195 = sphi 0, %s197
      %s198 = sphi 0, %s195
      %s199 = sphi 0, %s198
      %s215 = sphi 0, %s199
      %s221 = sphi 0, %s223
      %s224 = sphi 0, %s221
      %s225 = sphi 0, %s224
      %s241 = sphi 0, %s225
      %s247 = sphi 0, %s249
      %s250 = sphi 0, %s247
      %s251 = sphi 0, %s250
      %s267 = sphi 0, %s251
      %s273 = sphi 0, %s275
      %s276 = sphi 0, %s273
      %s277 = sphi 0, %s276
      %s293 = sphi 0, %s277
      %s299 = sphi 0, %s301
      %s302 = sphi 0, %s299
      %s303 = sphi 0, %s302
      %s319 = sphi 0, %s303
      %s325 = sphi 0, %s327
      %s328 = sphi 0, %s325
      %s329 = sphi 0, %s328
      %s345 = sphi 0, %s329
      %s351 = sphi 0, %s353
      %s354 = sphi 0, %s351
      %s355 = sphi 0, %s354
      %s371 = sphi 0, %s355
      %s377 = sphi 0, %s379
      %s380 = sphi 0, %s377
      %s381 = sphi 0, %s380
      %s397 = sphi 0, %s381
      %s403 = sphi 0, %s405
      %s406 = sphi 0, %s403
      %s407 = sphi 0, %s406
      %s423 = sphi 0, %s407
      %s429 = sphi 0, %s431
      %s432 = sphi 0, %s429
      %s433 = sphi 0, %s432
      %s449 = sphi 0, %s433
    $region4: #{prompt_encoder_forward.2} parent=1 // loop_header_branch
      %51 = sbr.rel (%p49) target = $region8
    $region5: #{prompt_encoder_forward.2} parent=1 // loop_body
      %s53 = ssub.s32 %s48, 1
      %s54 = ssub.s32 %s48, 2
      %s61 = sadd.s32 1, %s56
      %p62 = scmp.ge.s32.totalorder %s61, 3
      %s63 = scalar_select %p62, 0, %s61
      %s64 = sadd.s32 1, %s55
      %s65 = scalar_select %p62, %s64, %s55
      %p66 = scmp.ge.s32.totalorder %s65, 2
      %s67 = scalar_select %p66, 0, %s65
      %s68 = ssub.s32 %s55, %s67
      %p69 = scmp.eq.s32.totalorder %s68, 0
      %s71 = sadd.s32 %s70, 1
      %s72 = scalar_select %p69, %s70, %s71
      %p75 = pneg %p69
      %p76 = scmp.eq.s32.totalorder %s48, 5
      %p77 = por %p75, %p76
      %p78 = scmp.ne.s32.totalorder %s70, %s73
      %p79 = scmp.eq.s32.totalorder %s48, 0
      %p80 = por %p78, %p79
      %p81 = scmp.ne.s32.totalorder %s70, %s73
      %p82 = scmp.eq.s32.totalorder %s53, 5
      %p83 = por %p81, %p82
      %p84 = scmp.ne.s32.totalorder %s73, %s74
      %p85 = scmp.eq.s32.totalorder %s53, 0
      %p86 = por %p84, %p85
      %p87 = scmp.ne.s32.totalorder %s73, %s74
      %p88 = scmp.eq.s32.totalorder %s54, 5
      %p89 = por %p87, %p88
      %p91 = scmp.ne.s32.totalorder %s74, %s90
      %p92 = scmp.eq.s32.totalorder %s54, 0
      %p93 = por %p91, %p92
      %s95 = sadd.s32 %s94, 1
      %p98 = scmp.eq.s32.totalorder %s48, 5
      %p99 = scmp.ne.s32.totalorder %s94, %s96
      %p100 = scmp.eq.s32.totalorder %s48, 0
      %p101 = por %p99, %p100
      %p102 = scmp.ne.s32.totalorder %s94, %s96
      %p103 = scmp.eq.s32.totalorder %s53, 5
      %p104 = por %p102, %p103
      %p105 = scmp.ne.s32.totalorder %s96, %s97
      %p106 = scmp.eq.s32.totalorder %s53, 0
      %p107 = por %p105, %p106
      %p108 = scmp.ne.s32.totalorder %s96, %s97
      %p109 = scmp.eq.s32.totalorder %s54, 5
      %p110 = por %p108, %p109
      %p112 = scmp.ne.s32.totalorder %s97, %s111
      %p113 = scmp.eq.s32.totalorder %s54, 0
      %p114 = por %p112, %p113
      %s115 = ssub.s32 %s56, %s63
      %p116 = scmp.eq.s32.totalorder %s115, 0
      %s118 = sadd.s32 %s117, 1
      %s119 = scalar_select %p116, %s117, %s118
      %p122 = pneg %p116
      %p123 = scmp.eq.s32.totalorder %s48, 5
      %p124 = por %p122, %p123
      %p125 = scmp.ne.s32.totalorder %s117, %s120
      %p126 = scmp.eq.s32.totalorder %s48, 0
      %p127 = por %p125, %p126
      %p128 = scmp.ne.s32.totalorder %s117, %s120
      %p129 = scmp.eq.s32.totalorder %s53, 5
      %p130 = por %p128, %p129
      %p131 = scmp.ne.s32.totalorder %s120, %s121
      %p132 = scmp.eq.s32.totalorder %s53, 0
      %p133 = por %p131, %p132
      %p134 = scmp.ne.s32.totalorder %s120, %s121
      %p135 = scmp.eq.s32.totalorder %s54, 5
      %p136 = por %p134, %p135
      %p138 = scmp.ne.s32.totalorder %s121, %s137
      %p139 = scmp.eq.s32.totalorder %s54, 0
      %p140 = por %p138, %p139
      %s141 = ssub.s32 %s56, %s63
      %p142 = scmp.eq.s32.totalorder %s141, 0
      %s144 = sadd.s32 %s143, 1
      %s145 = scalar_select %p142, %s143, %s144
      %p148 = pneg %p142
      %p149 = scmp.eq.s32.totalorder %s48, 5
      %p150 = por %p148, %p149
      %p151 = scmp.ne.s32.totalorder %s143, %s146
      %p152 = scmp.eq.s32.totalorder %s48, 0
      %p153 = por %p151, %p152
      %p154 = scmp.ne.s32.totalorder %s143, %s146
      %p155 = scmp.eq.s32.totalorder %s53, 5
      %p156 = por %p154, %p155
      %p157 = scmp.ne.s32.totalorder %s146, %s147
      %p158 = scmp.eq.s32.totalorder %s53, 0
      %p159 = por %p157, %p158
      %p160 = scmp.ne.s32.totalorder %s146, %s147
      %p161 = scmp.eq.s32.totalorder %s54, 5
      %p162 = por %p160, %p161
      %p164 = scmp.ne.s32.totalorder %s147, %s163
      %p165 = scmp.eq.s32.totalorder %s54, 0
      %p166 = por %p164, %p165
      %s167 = ssub.s32 %s56, %s63
      %p168 = scmp.eq.s32.totalorder %s167, 0
      %s170 = sadd.s32 %s169, 1
      %s171 = scalar_select %p168, %s169, %s170
      %p174 = pneg %p168
      %p175 = scmp.eq.s32.totalorder %s48, 5
      %p176 = por %p174, %p175
      %p177 = scmp.ne.s32.totalorder %s169, %s172
      %p178 = scmp.eq.s32.totalorder %s48, 0
      %p179 = por %p177, %p178
      %p180 = scmp.ne.s32.totalorder %s169, %s172
      %p181 = scmp.eq.s32.totalorder %s53, 5
      %p182 = por %p180, %p181
      %p183 = scmp.ne.s32.totalorder %s172, %s173
      %p184 = scmp.eq.s32.totalorder %s53, 0
      %p185 = por %p183, %p184
      %p186 = scmp.ne.s32.totalorder %s172, %s173
      %p187 = scmp.eq.s32.totalorder %s54, 5
      %p188 = por %p186, %p187
      %p190 = scmp.ne.s32.totalorder %s173, %s189
      %p191 = scmp.eq.s32.totalorder %s54, 0
      %p192 = por %p190, %p191
      %s193 = ssub.s32 %s56, %s63
      %p194 = scmp.eq.s32.totalorder %s193, 0
      %s196 = sadd.s32 %s195, 1
      %s197 = scalar_select %p194, %s195, %s196
      %p200 = pneg %p194
      %p201 = scmp.eq.s32.totalorder %s48, 5
      %p202 = por %p200, %p201
      %p203 = scmp.ne.s32.totalorder %s195, %s198
      %p204 = scmp.eq.s32.totalorder %s48, 0
      %p205 = por %p203, %p204
      %p206 = scmp.ne.s32.totalorder %s195, %s198
      %p207 = scmp.eq.s32.totalorder %s53, 5
      %p208 = por %p206, %p207
      %p209 = scmp.ne.s32.totalorder %s198, %s199
      %p210 = scmp.eq.s32.totalorder %s53, 0
      %p211 = por %p209, %p210
      %p212 = scmp.ne.s32.totalorder %s198, %s199
      %p213 = scmp.eq.s32.totalorder %s54, 5
      %p214 = por %p212, %p213
      %p216 = scmp.ne.s32.totalorder %s199, %s215
      %p217 = scmp.eq.s32.totalorder %s54, 0
      %p218 = por %p216, %p217
      %s219 = ssub.s32 %s56, %s63
      %p220 = scmp.eq.s32.totalorder %s219, 0
      %s222 = sadd.s32 %s221, 1
      %s223 = scalar_select %p220, %s221, %s222
      %p226 = pneg %p220
      %p227 = scmp.eq.s32.totalorder %s48, 5
      %p228 = por %p226, %p227
      %p229 = scmp.ne.s32.totalorder %s221, %s224
      %p230 = scmp.eq.s32.totalorder %s48, 0
      %p231 = por %p229, %p230
      %p232 = scmp.ne.s32.totalorder %s221, %s224
      %p233 = scmp.eq.s32.totalorder %s53, 5
      %p234 = por %p232, %p233
      %p235 = scmp.ne.s32.totalorder %s224, %s225
      %p236 = scmp.eq.s32.totalorder %s53, 0
      %p237 = por %p235, %p236
      %p238 = scmp.ne.s32.totalorder %s224, %s225
      %p239 = scmp.eq.s32.totalorder %s54, 5
      %p240 = por %p238, %p239
      %p242 = scmp.ne.s32.totalorder %s225, %s241
      %p243 = scmp.eq.s32.totalorder %s54, 0
      %p244 = por %p242, %p243
      %s245 = ssub.s32 %s56, %s63
      %p246 = scmp.eq.s32.totalorder %s245, 0
      %s248 = sadd.s32 %s247, 1
      %s249 = scalar_select %p246, %s247, %s248
      %p252 = pneg %p246
      %p253 = scmp.eq.s32.totalorder %s48, 5
      %p254 = por %p252, %p253
      %p255 = scmp.ne.s32.totalorder %s247, %s250
      %p256 = scmp.eq.s32.totalorder %s48, 0
      %p257 = por %p255, %p256
      %p258 = scmp.ne.s32.totalorder %s247, %s250
      %p259 = scmp.eq.s32.totalorder %s53, 5
      %p260 = por %p258, %p259
      %p261 = scmp.ne.s32.totalorder %s250, %s251
      %p262 = scmp.eq.s32.totalorder %s53, 0
      %p263 = por %p261, %p262
      %p264 = scmp.ne.s32.totalorder %s250, %s251
      %p265 = scmp.eq.s32.totalorder %s54, 5
      %p266 = por %p264, %p265
      %p268 = scmp.ne.s32.totalorder %s251, %s267
      %p269 = scmp.eq.s32.totalorder %s54, 0
      %p270 = por %p268, %p269
      %s271 = ssub.s32 %s56, %s63
      %p272 = scmp.eq.s32.totalorder %s271, 0
      %s274 = sadd.s32 %s273, 1
      %s275 = scalar_select %p272, %s273, %s274
      %p278 = pneg %p272
      %p279 = scmp.eq.s32.totalorder %s48, 5
      %p280 = por %p278, %p279
      %p281 = scmp.ne.s32.totalorder %s273, %s276
      %p282 = scmp.eq.s32.totalorder %s48, 0
      %p283 = por %p281, %p282
      %p284 = scmp.ne.s32.totalorder %s273, %s276
      %p285 = scmp.eq.s32.totalorder %s53, 5
      %p286 = por %p284, %p285
      %p287 = scmp.ne.s32.totalorder %s276, %s277
      %p288 = scmp.eq.s32.totalorder %s53, 0
      %p289 = por %p287, %p288
      %p290 = scmp.ne.s32.totalorder %s276, %s277
      %p291 = scmp.eq.s32.totalorder %s54, 5
      %p292 = por %p290, %p291
      %p294 = scmp.ne.s32.totalorder %s277, %s293
      %p295 = scmp.eq.s32.totalorder %s54, 0
      %p296 = por %p294, %p295
      %s297 = ssub.s32 %s56, %s63
      %p298 = scmp.eq.s32.totalorder %s297, 0
      %s300 = sadd.s32 %s299, 1
      %s301 = scalar_select %p298, %s299, %s300
      %p304 = pneg %p298
      %p305 = scmp.eq.s32.totalorder %s48, 5
      %p306 = por %p304, %p305
      %p307 = scmp.ne.s32.totalorder %s299, %s302
      %p308 = scmp.eq.s32.totalorder %s48, 0
      %p309 = por %p307, %p308
      %p310 = scmp.ne.s32.totalorder %s299, %s302
      %p311 = scmp.eq.s32.totalorder %s53, 5
      %p312 = por %p310, %p311
      %p313 = scmp.ne.s32.totalorder %s302, %s303
      %p314 = scmp.eq.s32.totalorder %s53, 0
      %p315 = por %p313, %p314
      %p316 = scmp.ne.s32.totalorder %s302, %s303
      %p317 = scmp.eq.s32.totalorder %s54, 5
      %p318 = por %p316, %p317
      %p320 = scmp.ne.s32.totalorder %s303, %s319
      %p321 = scmp.eq.s32.totalorder %s54, 0
      %p322 = por %p320, %p321
      %s323 = ssub.s32 %s56, %s63
      %p324 = scmp.eq.s32.totalorder %s323, 0
      %s326 = sadd.s32 %s325, 1
      %s327 = scalar_select %p324, %s325, %s326
      %p330 = pneg %p324
      %p331 = scmp.eq.s32.totalorder %s48, 5
      %p332 = por %p330, %p331
      %p333 = scmp.ne.s32.totalorder %s325, %s328
      %p334 = scmp.eq.s32.totalorder %s48, 0
      %p335 = por %p333, %p334
      %p336 = scmp.ne.s32.totalorder %s325, %s328
      %p337 = scmp.eq.s32.totalorder %s53, 5
      %p338 = por %p336, %p337
      %p339 = scmp.ne.s32.totalorder %s328, %s329
      %p340 = scmp.eq.s32.totalorder %s53, 0
      %p341 = por %p339, %p340
      %p342 = scmp.ne.s32.totalorder %s328, %s329
      %p343 = scmp.eq.s32.totalorder %s54, 5
      %p344 = por %p342, %p343
      %p346 = scmp.ne.s32.totalorder %s329, %s345
      %p347 = scmp.eq.s32.totalorder %s54, 0
      %p348 = por %p346, %p347
      %s349 = ssub.s32 %s56, %s63
      %p350 = scmp.eq.s32.totalorder %s349, 0
      %s352 = sadd.s32 %s351, 1
      %s353 = scalar_select %p350, %s351, %s352
      %p356 = pneg %p350
      %p357 = scmp.eq.s32.totalorder %s48, 5
      %p358 = por %p356, %p357
      %p359 = scmp.ne.s32.totalorder %s351, %s354
      %p360 = scmp.eq.s32.totalorder %s48, 0
      %p361 = por %p359, %p360
      %p362 = scmp.ne.s32.totalorder %s351, %s354
      %p363 = scmp.eq.s32.totalorder %s53, 5
      %p364 = por %p362, %p363
      %p365 = scmp.ne.s32.totalorder %s354, %s355
      %p366 = scmp.eq.s32.totalorder %s53, 0
      %p367 = por %p365, %p366
      %p368 = scmp.ne.s32.totalorder %s354, %s355
      %p369 = scmp.eq.s32.totalorder %s54, 5
      %p370 = por %p368, %p369
      %p372 = scmp.ne.s32.totalorder %s355, %s371
      %p373 = scmp.eq.s32.totalorder %s54, 0
      %p374 = por %p372, %p373
      %s375 = ssub.s32 %s56, %s63
      %p376 = scmp.eq.s32.totalorder %s375, 0
      %s378 = sadd.s32 %s377, 1
      %s379 = scalar_select %p376, %s377, %s378
      %p382 = pneg %p376
      %p383 = scmp.eq.s32.totalorder %s48, 5
      %p384 = por %p382, %p383
      %p385 = scmp.ne.s32.totalorder %s377, %s380
      %p386 = scmp.eq.s32.totalorder %s48, 0
      %p387 = por %p385, %p386
      %p388 = scmp.ne.s32.totalorder %s377, %s380
      %p389 = scmp.eq.s32.totalorder %s53, 5
      %p390 = por %p388, %p389
      %p391 = scmp.ne.s32.totalorder %s380, %s381
      %p392 = scmp.eq.s32.totalorder %s53, 0
      %p393 = por %p391, %p392
      %p394 = scmp.ne.s32.totalorder %s380, %s381
      %p395 = scmp.eq.s32.totalorder %s54, 5
      %p396 = por %p394, %p395
      %p398 = scmp.ne.s32.totalorder %s381, %s397
      %p399 = scmp.eq.s32.totalorder %s54, 0
      %p400 = por %p398, %p399
      %s401 = ssub.s32 %s56, %s63
      %p402 = scmp.eq.s32.totalorder %s401, 0
      %s404 = sadd.s32 %s403, 1
      %s405 = scalar_select %p402, %s403, %s404
      %p408 = pneg %p402
      %p409 = scmp.eq.s32.totalorder %s48, 5
      %p410 = por %p408, %p409
      %p411 = scmp.ne.s32.totalorder %s403, %s406
      %p412 = scmp.eq.s32.totalorder %s48, 0
      %p413 = por %p411, %p412
      %p414 = scmp.ne.s32.totalorder %s403, %s406
      %p415 = scmp.eq.s32.totalorder %s53, 5
      %p416 = por %p414, %p415
      %p417 = scmp.ne.s32.totalorder %s406, %s407
      %p418 = scmp.eq.s32.totalorder %s53, 0
      %p419 = por %p417, %p418
      %p420 = scmp.ne.s32.totalorder %s406, %s407
      %p421 = scmp.eq.s32.totalorder %s54, 5
      %p422 = por %p420, %p421
      %p424 = scmp.ne.s32.totalorder %s407, %s423
      %p425 = scmp.eq.s32.totalorder %s54, 0
      %p426 = por %p424, %p425
      %s427 = ssub.s32 %s55, %s67
      %p428 = scmp.eq.s32.totalorder %s427, 0
      %s430 = sadd.s32 %s429, 1
      %s431 = scalar_select %p428, %s429, %s430
      %p434 = pneg %p428
      %p435 = scmp.eq.s32.totalorder %s48, 5
      %p436 = por %p434, %p435
      %p437 = scmp.ne.s32.totalorder %s429, %s432
      %p438 = scmp.eq.s32.totalorder %s48, 0
      %p439 = por %p437, %p438
      %p440 = scmp.ne.s32.totalorder %s429, %s432
      %p441 = scmp.eq.s32.totalorder %s53, 5
      %p442 = por %p440, %p441
      %p443 = scmp.ne.s32.totalorder %s432, %s433
      %p444 = scmp.eq.s32.totalorder %s53, 0
      %p445 = por %p443, %p444
      %p446 = scmp.ne.s32.totalorder %s432, %s433
      %p447 = scmp.eq.s32.totalorder %s54, 5
      %p448 = por %p446, %p447
      %p450 = scmp.ne.s32.totalorder %s433, %s449
      %p451 = scmp.eq.s32.totalorder %s54, 0
      %p452 = por %p450, %p451
      %p453 = scmp.le.s32.totalorder 1, %s48
      %p454 = scmp.lt.s32.totalorder %s48, 7
      %p455 = pnand %p453, %p454
      %p456 = pneg %p455
      // Predicated region
      $region9: #{prompt_encoder_forward.2} parent=5 // pred_check
        _
      $region10: #{prompt_encoder_forward.2} parent=5 // pred_check_branch
        %458 = sbr.rel (%p455) target = $region12
      $region11: #{prompt_encoder_forward.2} parent=5 // pred_region
        %s459 = ssub.s32 %s48, 1
        // Predicated region
        $region13: #{prompt_encoder_forward.2} parent=11 // pred_check
          %p460 = pneg %p107
        $region14: #{prompt_encoder_forward.2} parent=11 // pred_check_branch
          %462 = sbr.rel (%p460) target = $region16
        $region15: #{prompt_encoder_forward.2} parent=11 // pred_region
          _
        $region16: #{prompt_encoder_forward.2} parent=11 // pred_fallthru
          _
      $region12: #{prompt_encoder_forward.2} parent=5 // pred_fallthru
        _
      %p463 = scmp.lt.s32.totalorder %s48, 6
      // Predicated region
      $region17: #{prompt_encoder_forward.2} parent=5 // pred_check
        %p464 = pneg %p463
      $region18: #{prompt_encoder_forward.2} parent=5 // pred_check_branch
        %466 = sbr.rel (%p464) target = $region20
      $region19: #{prompt_encoder_forward.2} parent=5 // pred_region
        // Predicated region
        $region21: #{prompt_encoder_forward.2} parent=19 // pred_check
          %p467 = pneg %p80
        $region22: #{prompt_encoder_forward.2} parent=19 // pred_check_branch
          %469 = sbr.rel (%p467) target = $region24
        $region23: #{prompt_encoder_forward.2} parent=19 // pred_region
          %p470 = scmp.lt.s32.totalorder %s55, 1
          %s471 = scalar_select %p470, %s55, 1
          %s472 = smul.addr %s471, 8
          %s473 = scalar_lea.vmem %s1, %s472
        $region24: #{prompt_encoder_forward.2} parent=19 // pred_fallthru
          _
        // Predicated region
        $region25: #{prompt_encoder_forward.2} parent=19 // pred_check
          %p474 = pneg %p127
        $region26: #{prompt_encoder_forward.2} parent=19 // pred_check_branch
          %476 = sbr.rel (%p474) target = $region28
        $region27: #{prompt_encoder_forward.2} parent=19 // pred_region
          %s477 = sand.u32 %s117, 1
          %s478 = scalar_lea.sflag [#allocation6], %s477
          %s479 = sand.u32 %s117, 1
          %s480 = scalar_lea.vmem [#allocation5], %s479
          %s482 = ssub.s32 16, 16
          %483 = vsyncadd %s478, %s482
          %s484 = smul.addr %s56, 16
          %s485 = scalar_lea.hbm %s3, %s484
          %s487 = sshll.u32 %s480, 4
          %s488 = int_to_ptr.vmem [resolvable:$true] %s487
          %490 = dma.hbm_to_vmem [thread:$0]  %s485, 16, %s488, %s478
        $region28: #{prompt_encoder_forward.2} parent=19 // pred_fallthru
          _
        // Predicated region
        $region29: #{prompt_encoder_forward.2} parent=19 // pred_check
          %p491 = pneg %p153
        $region30: #{prompt_encoder_forward.2} parent=19 // pred_check_branch
          %493 = sbr.rel (%p491) target = $region32
        $region31: #{prompt_encoder_forward.2} parent=19 // pred_region
          %s494 = sand.u32 %s48, 1
          %s495 = scalar_lea.sflag [#allocation8], %s494
          %s496 = sand.u32 %s143, 1
          %s497 = scalar_lea.vmem [#allocation7], %s496
          %s499 = ssub.s32 16, 16
          %500 = vsyncadd %s495, %s499
          %s501 = smul.addr %s56, 16
          %s502 = scalar_lea.hbm %s4, %s501
          %s504 = sshll.u32 %s497, 4
          %s505 = int_to_ptr.vmem [resolvable:$true] %s504
          %507 = dma.hbm_to_vmem [thread:$0]  %s502, 16, %s505, %s495
        $region32: #{prompt_encoder_forward.2} parent=19 // pred_fallthru
          _
        // Predicated region
        $region33: #{prompt_encoder_forward.2} parent=19 // pred_check
          %p508 = pneg %p179
        $region34: #{prompt_encoder_forward.2} parent=19 // pred_check_branch
          %510 = sbr.rel (%p508) target = $region36
        $region35: #{prompt_encoder_forward.2} parent=19 // pred_region
          %s511 = sand.u32 %s48, 1
          %s512 = scalar_lea.sflag [#allocation8], %s511
          %s513 = sand.u32 %s169, 1
          %s514 = smul.addr %s513, 192
          %s515 = scalar_lea.vmem [#allocation9], %s514
          %s517 = ssub.s32 3072, 3072
          %518 = vsyncadd %s512, %s517
          %s519 = smul.addr %s56, 48
          %s520 = smul.addr %s519, 64
          %s521 = scalar_lea.hbm %s5, %s520
          %s522 = sshll.u32 %s515, 4
          %s523 = int_to_ptr.vmem [resolvable:$true] %s522
          %528 = dma.hbm_to_vmem [thread:$0]  %s521, 3072, %s523, %s512, 192, 192, 12
        $region36: #{prompt_encoder_forward.2} parent=19 // pred_fallthru
          _
        // Predicated region
        $region37: #{prompt_encoder_forward.2} parent=19 // pred_check
          %p529 = pneg %p205
        $region38: #{prompt_encoder_forward.2} parent=19 // pred_check_branch
          %531 = sbr.rel (%p529) target = $region40
        $region39: #{prompt_encoder_forward.2} parent=19 // pred_region
          %s532 = sand.u32 %s48, 1
          %s533 = scalar_lea.sflag [#allocation11], %s532
          %s534 = sand.u32 %s195, 1
          %s535 = smul.addr %s534, 3
          %s536 = scalar_lea.vmem [#allocation10], %s535
          %s538 = ssub.s32 48, 48
          %539 = vsyncadd %s533, %s538
          %s540 = smul.addr %s56, 3
          %s541 = smul.addr %s540, 16
          %s542 = scalar_lea.hbm %s6, %s541
          %s544 = sshll.u32 %s536, 4
          %s545 = int_to_ptr.vmem [resolvable:$true] %s544
          %547 = dma.hbm_to_vmem [thread:$0]  %s542, 48, %s545, %s533
        $region40: #{prompt_encoder_forward.2} parent=19 // pred_fallthru
          _
        // Predicated region
        $region41: #{prompt_encoder_forward.2} parent=19 // pred_check
          %p548 = pneg %p231
        $region42: #{prompt_encoder_forward.2} parent=19 // pred_check_branch
          %550 = sbr.rel (%p548) target = $region44
        $region43: #{prompt_encoder_forward.2} parent=19 // pred_region
          %s551 = sand.u32 %s48, 1
          %s552 = scalar_lea.sflag [#allocation11], %s551
          %s553 = sand.u32 %s221, 1
          %s554 = smul.addr %s553, 64
          %s555 = scalar_lea.vmem [#allocation12], %s554
          %s557 = ssub.s32 1024, 1024
          %558 = vsyncadd %s552, %s557
          %s559 = smul.addr %s56, 16
          %s560 = smul.addr %s559, 64
          %s561 = scalar_lea.hbm %s7, %s560
          %s562 = sshll.u32 %s555, 4
          %s563 = int_to_ptr.vmem [resolvable:$true] %s562
          %568 = dma.hbm_to_vmem [thread:$0]  %s561, 1024, %s563, %s552, 64, 64, 4
        $region44: #{prompt_encoder_forward.2} parent=19 // pred_fallthru
          _
        // Predicated region
        $region45: #{prompt_encoder_forward.2} parent=19 // pred_check
          %p569 = pneg %p257
        $region46: #{prompt_encoder_forward.2} parent=19 // pred_check_branch
          %571 = sbr.rel (%p569) target = $region48
        $region47: #{prompt_encoder_forward.2} parent=19 // pred_region
          %s572 = sand.u32 %s48, 1
          %s573 = scalar_lea.sflag [#allocation14], %s572
          %s574 = sand.u32 %s247, 1
          %s575 = scalar_lea.vmem [#allocation13], %s574
          %s577 = ssub.s32 16, 16
          %578 = vsyncadd %s573, %s577
          %s579 = smul.addr %s56, 16
          %s580 = scalar_lea.hbm %s8, %s579
          %s582 = sshll.u32 %s575, 4
          %s583 = int_to_ptr.vmem [resolvable:$true] %s582
          %585 = dma.hbm_to_vmem [thread:$0]  %s580, 16, %s583, %s573
        $region48: #{prompt_encoder_forward.2} parent=19 // pred_fallthru
          _
        // Predicated region
        $region49: #{prompt_encoder_forward.2} parent=19 // pred_check
          %p586 = pneg %p283
        $region50: #{prompt_encoder_forward.2} parent=19 // pred_check_branch
          %588 = sbr.rel (%p586) target = $region52
        $region51: #{prompt_encoder_forward.2} parent=19 // pred_region
          %s589 = sand.u32 %s48, 1
          %s590 = scalar_lea.sflag [#allocation14], %s589
          %s591 = sand.u32 %s273, 1
          %s592 = scalar_lea.vmem [#allocation15], %s591
          %s594 = ssub.s32 16, 16
          %595 = vsyncadd %s590, %s594
          %s596 = smul.addr %s56, 16
          %s597 = scalar_lea.hbm %s9, %s596
          %s599 = sshll.u32 %s592, 4
          %s600 = int_to_ptr.vmem [resolvable:$true] %s599
          %602 = dma.hbm_to_vmem [thread:$0]  %s597, 16, %s600, %s590
        $region52: #{prompt_encoder_forward.2} parent=19 // pred_fallthru
          _
        // Predicated region
        $region53: #{prompt_encoder_forward.2} parent=19 // pred_check
          %p603 = pneg %p309
        $region54: #{prompt_encoder_forward.2} parent=19 // pred_check_branch
          %605 = sbr.rel (%p603) target = $region56
        $region55: #{prompt_encoder_forward.2} parent=19 // pred_region
          %s606 = sand.u32 %s48, 1
          %s607 = scalar_lea.sflag [#allocation17], %s606
          %s608 = sand.u32 %s299, 1
          %s609 = scalar_lea.vmem [#allocation16], %s608
          %s611 = ssub.s32 16, 16
          %612 = vsyncadd %s607, %s611
          %s613 = smul.addr %s56, 16
          %s614 = scalar_lea.hbm %s10, %s613
          %s616 = sshll.u32 %s609, 4
          %s617 = int_to_ptr.vmem [resolvable:$true] %s616
          %619 = dma.hbm_to_vmem [thread:$0]  %s614, 16, %s617, %s607
        $region56: #{prompt_encoder_forward.2} parent=19 // pred_fallthru
          _
        // Predicated region
        $region57: #{prompt_encoder_forward.2} parent=19 // pred_check
          %p620 = pneg %p335
        $region58: #{prompt_encoder_forward.2} parent=19 // pred_check_branch
          %622 = sbr.rel (%p620) target = $region60
        $region59: #{prompt_encoder_forward.2} parent=19 // pred_region
          %s623 = sand.u32 %s48, 1
          %s624 = scalar_lea.sflag [#allocation17], %s623
          %s625 = sand.u32 %s325, 1
          %s626 = smul.addr %s625, 128
          %s627 = scalar_lea.vmem [#allocation18], %s626
          %s629 = ssub.s32 2048, 2048
          %630 = vsyncadd %s624, %s629
          %s631 = smul.addr %s56, 32
          %s632 = smul.addr %s631, 64
          %s633 = scalar_lea.hbm %s11, %s632
          %s634 = sshll.u32 %s627, 4
          %s635 = int_to_ptr.vmem [resolvable:$true] %s634
          %640 = dma.hbm_to_vmem [thread:$0]  %s633, 2048, %s635, %s624, 128, 128, 8
        $region60: #{prompt_encoder_forward.2} parent=19 // pred_fallthru
          _
        // Predicated region
        $region61: #{prompt_encoder_forward.2} parent=19 // pred_check
          %p641 = pneg %p361
        $region62: #{prompt_encoder_forward.2} parent=19 // pred_check_branch
          %643 = sbr.rel (%p641) target = $region64
        $region63: #{prompt_encoder_forward.2} parent=19 // pred_region
          %s644 = sand.u32 %s48, 1
          %s645 = scalar_lea.sflag [#allocation20], %s644
          %s646 = sand.u32 %s351, 1
          %s647 = smul.addr %s646, 2
          %s648 = scalar_lea.vmem [#allocation19], %s647
          %s650 = ssub.s32 32, 32
          %651 = vsyncadd %s645, %s650
          %s652 = smul.addr %s56, 2
          %s653 = smul.addr %s652, 16
          %s654 = scalar_lea.hbm %s12, %s653
          %s656 = sshll.u32 %s648, 4
          %s657 = int_to_ptr.vmem [resolvable:$true] %s656
          %659 = dma.hbm_to_vmem [thread:$0]  %s654, 32, %s657, %s645
        $region64: #{prompt_encoder_forward.2} parent=19 // pred_fallthru
          _
        // Predicated region
        $region65: #{prompt_encoder_forward.2} parent=19 // pred_check
          %p660 = pneg %p387
        $region66: #{prompt_encoder_forward.2} parent=19 // pred_check_branch
          %662 = sbr.rel (%p660) target = $region68
        $region67: #{prompt_encoder_forward.2} parent=19 // pred_region
          %s663 = sand.u32 %s48, 1
          %s664 = scalar_lea.sflag [#allocation20], %s663
          %s665 = sand.u32 %s377, 1
          %s666 = smul.addr %s665, 128
          %s667 = scalar_lea.vmem [#allocation21], %s666
          %s669 = ssub.s32 2048, 2048
          %670 = vsyncadd %s664, %s669
          %s671 = smul.addr %s56, 32
          %s672 = smul.addr %s671, 64
          %s673 = scalar_lea.hbm %s13, %s672
          %s674 = sshll.u32 %s667, 4
          %s675 = int_to_ptr.vmem [resolvable:$true] %s674
          %680 = dma.hbm_to_vmem [thread:$0]  %s673, 2048, %s675, %s664, 64, 64, 4
        $region68: #{prompt_encoder_forward.2} parent=19 // pred_fallthru
          _
        // Predicated region
        $region69: #{prompt_encoder_forward.2} parent=19 // pred_check
          %p681 = pneg %p413
        $region70: #{prompt_encoder_forward.2} parent=19 // pred_check_branch
          %683 = sbr.rel (%p681) target = $region72
        $region71: #{prompt_encoder_forward.2} parent=19 // pred_region
          %s684 = sand.u32 %s403, 1
          %s685 = scalar_lea.sflag [#allocation23], %s684
          %s686 = sand.u32 %s403, 1
          %s687 = scalar_lea.vmem [#allocation22], %s686
          %s689 = ssub.s32 16, 16
          %690 = vsyncadd %s685, %s689
          %s691 = smul.addr %s56, 16
          %s692 = scalar_lea.hbm %s14, %s691
          %s694 = sshll.u32 %s687, 4
          %s695 = int_to_ptr.vmem [resolvable:$true] %s694
          %697 = dma.hbm_to_vmem [thread:$0]  %s692, 16, %s695, %s685
        $region72: #{prompt_encoder_forward.2} parent=19 // pred_fallthru
          _
      $region20: #{prompt_encoder_forward.2} parent=5 // pred_fallthru
        _
      %p698 = scmp.le.s32.totalorder 1, %s48
      %p699 = scmp.lt.s32.totalorder %s48, 7
      %p700 = pnand %p698, %p699
      %p701 = pneg %p700
      // Predicated region
      $region73: #{prompt_encoder_forward.2} parent=5 // pred_check
        _
      $region74: #{prompt_encoder_forward.2} parent=5 // pred_check_branch
        %703 = sbr.rel (%p700) target = $region76
      $region75: #{prompt_encoder_forward.2} parent=5 // pred_region
        %s704 = ssub.s32 %s48, 1
        %s705 = sand.u32 %s120, 1
        %s706 = scalar_lea.sflag [#allocation6], %s705
        %s707 = sand.u32 %s120, 1
        %s708 = scalar_lea.vmem [#allocation5], %s707
        // Predicated region
        $region77: #{prompt_encoder_forward.2} parent=75 // pred_check
          %p709 = pneg %p133
        $region78: #{prompt_encoder_forward.2} parent=75 // pred_check_branch
          %711 = sbr.rel (%p709) target = $region80
        $region79: #{prompt_encoder_forward.2} parent=75 // pred_region
          %712 = dma.done %s706, 16
        $region80: #{prompt_encoder_forward.2} parent=75 // pred_fallthru
          _
        %s713 = sand.u32 %s53, 1
        %s714 = scalar_lea.sflag [#allocation8], %s713
        %s715 = sand.u32 %s146, 1
        %s716 = scalar_lea.vmem [#allocation7], %s715
        // Predicated region
        $region81: #{prompt_encoder_forward.2} parent=75 // pred_check
          %p717 = pneg %p159
        $region82: #{prompt_encoder_forward.2} parent=75 // pred_check_branch
          %719 = sbr.rel (%p717) target = $region84
        $region83: #{prompt_encoder_forward.2} parent=75 // pred_region
          %720 = dma.done %s714, 16
        $region84: #{prompt_encoder_forward.2} parent=75 // pred_fallthru
          _
        %s721 = sand.u32 %s53, 1
        %s722 = scalar_lea.sflag [#allocation8], %s721
        %s723 = sand.u32 %s172, 1
        %s724 = smul.addr %s723, 192
        %s725 = scalar_lea.vmem [#allocation9], %s724
        // Predicated region
        $region85: #{prompt_encoder_forward.2} parent=75 // pred_check
          %p726 = pneg %p185
        $region86: #{prompt_encoder_forward.2} parent=75 // pred_check_branch
          %728 = sbr.rel (%p726) target = $region88
        $region87: #{prompt_encoder_forward.2} parent=75 // pred_region
          %729 = dma.done %s722, 3072
        $region88: #{prompt_encoder_forward.2} parent=75 // pred_fallthru
          _
        %s730 = sand.u32 %s53, 1
        %s731 = scalar_lea.sflag [#allocation11], %s730
        %s732 = sand.u32 %s198, 1
        %s733 = smul.addr %s732, 3
        %s734 = scalar_lea.vmem [#allocation10], %s733
        // Predicated region
        $region89: #{prompt_encoder_forward.2} parent=75 // pred_check
          %p735 = pneg %p211
        $region90: #{prompt_encoder_forward.2} parent=75 // pred_check_branch
          %737 = sbr.rel (%p735) target = $region92
        $region91: #{prompt_encoder_forward.2} parent=75 // pred_region
          %738 = dma.done %s731, 48
        $region92: #{prompt_encoder_forward.2} parent=75 // pred_fallthru
          _
        %s739 = sand.u32 %s53, 1
        %s740 = scalar_lea.sflag [#allocation11], %s739
        %s741 = sand.u32 %s224, 1
        %s742 = smul.addr %s741, 64
        %s743 = scalar_lea.vmem [#allocation12], %s742
        // Predicated region
        $region93: #{prompt_encoder_forward.2} parent=75 // pred_check
          %p744 = pneg %p237
        $region94: #{prompt_encoder_forward.2} parent=75 // pred_check_branch
          %746 = sbr.rel (%p744) target = $region96
        $region95: #{prompt_encoder_forward.2} parent=75 // pred_region
          %747 = dma.done %s740, 1024
        $region96: #{prompt_encoder_forward.2} parent=75 // pred_fallthru
          _
        %s748 = sand.u32 %s53, 1
        %s749 = scalar_lea.sflag [#allocation14], %s748
        %s750 = sand.u32 %s250, 1
        %s751 = scalar_lea.vmem [#allocation13], %s750
        // Predicated region
        $region97: #{prompt_encoder_forward.2} parent=75 // pred_check
          %p752 = pneg %p263
        $region98: #{prompt_encoder_forward.2} parent=75 // pred_check_branch
          %754 = sbr.rel (%p752) target = $region100
        $region99: #{prompt_encoder_forward.2} parent=75 // pred_region
          %755 = dma.done %s749, 16
        $region100: #{prompt_encoder_forward.2} parent=75 // pred_fallthru
          _
        %s756 = sand.u32 %s53, 1
        %s757 = scalar_lea.sflag [#allocation14], %s756
        %s758 = sand.u32 %s276, 1
        %s759 = scalar_lea.vmem [#allocation15], %s758
        // Predicated region
        $region101: #{prompt_encoder_forward.2} parent=75 // pred_check
          %p760 = pneg %p289
        $region102: #{prompt_encoder_forward.2} parent=75 // pred_check_branch
          %762 = sbr.rel (%p760) target = $region104
        $region103: #{prompt_encoder_forward.2} parent=75 // pred_region
          %763 = dma.done %s757, 16
        $region104: #{prompt_encoder_forward.2} parent=75 // pred_fallthru
          _
        %s764 = sand.u32 %s53, 1
        %s765 = scalar_lea.sflag [#allocation17], %s764
        %s766 = sand.u32 %s302, 1
        %s767 = scalar_lea.vmem [#allocation16], %s766
        // Predicated region
        $region105: #{prompt_encoder_forward.2} parent=75 // pred_check
          %p768 = pneg %p315
        $region106: #{prompt_encoder_forward.2} parent=75 // pred_check_branch
          %770 = sbr.rel (%p768) target = $region108
        $region107: #{prompt_encoder_forward.2} parent=75 // pred_region
          %771 = dma.done %s765, 16
        $region108: #{prompt_encoder_forward.2} parent=75 // pred_fallthru
          _
        %s772 = sand.u32 %s53, 1
        %s773 = scalar_lea.sflag [#allocation17], %s772
        %s774 = sand.u32 %s328, 1
        %s775 = smul.addr %s774, 128
        %s776 = scalar_lea.vmem [#allocation18], %s775
        // Predicated region
        $region109: #{prompt_encoder_forward.2} parent=75 // pred_check
          %p777 = pneg %p341
        $region110: #{prompt_encoder_forward.2} parent=75 // pred_check_branch
          %779 = sbr.rel (%p777) target = $region112
        $region111: #{prompt_encoder_forward.2} parent=75 // pred_region
          %780 = dma.done %s773, 2048
        $region112: #{prompt_encoder_forward.2} parent=75 // pred_fallthru
          _
        %s781 = sand.u32 %s53, 1
        %s782 = scalar_lea.sflag [#allocation20], %s781
        %s783 = sand.u32 %s354, 1
        %s784 = smul.addr %s783, 2
        %s785 = scalar_lea.vmem [#allocation19], %s784
        // Predicated region
        $region113: #{prompt_encoder_forward.2} parent=75 // pred_check
          %p786 = pneg %p367
        $region114: #{prompt_encoder_forward.2} parent=75 // pred_check_branch
          %788 = sbr.rel (%p786) target = $region116
        $region115: #{prompt_encoder_forward.2} parent=75 // pred_region
          %789 = dma.done %s782, 32
        $region116: #{prompt_encoder_forward.2} parent=75 // pred_fallthru
          _
        %s790 = sand.u32 %s53, 1
        %s791 = scalar_lea.sflag [#allocation20], %s790
        %s792 = sand.u32 %s380, 1
        %s793 = smul.addr %s792, 128
        %s794 = scalar_lea.vmem [#allocation21], %s793
        // Predicated region
        $region117: #{prompt_encoder_forward.2} parent=75 // pred_check
          %p795 = pneg %p393
        $region118: #{prompt_encoder_forward.2} parent=75 // pred_check_branch
          %797 = sbr.rel (%p795) target = $region120
        $region119: #{prompt_encoder_forward.2} parent=75 // pred_region
          %798 = dma.done %s791, 2048
        $region120: #{prompt_encoder_forward.2} parent=75 // pred_fallthru
          _
        %s799 = sand.u32 %s406, 1
        %s800 = scalar_lea.sflag [#allocation23], %s799
        %s801 = sand.u32 %s406, 1
        %s802 = scalar_lea.vmem [#allocation22], %s801
        // Predicated region
        $region121: #{prompt_encoder_forward.2} parent=75 // pred_check
          %p803 = pneg %p419
        $region122: #{prompt_encoder_forward.2} parent=75 // pred_check_branch
          %805 = sbr.rel (%p803) target = $region124
        $region123: #{prompt_encoder_forward.2} parent=75 // pred_region
          %806 = dma.done %s800, 16
        $region124: #{prompt_encoder_forward.2} parent=75 // pred_fallthru
          _
        %p807 = scmp.lt.s32.totalorder %s57, 1
        %s808 = scalar_select %p807, %s57, 1
        %s809 = smul.addr %s808, 8
        %s810 = scalar_lea.vmem %s1, %s809
        %p811 = pneg %p86
        %p812 = pneg %p83
        %p813 = pneg %p107
        %p814 = pneg %p104
        %s815 = sand.u32 %s120, 1
        %s816 = scalar_lea.sflag [#allocation6], %s815
        %s817 = sand.u32 %s120, 1
        %s818 = scalar_lea.vmem [#allocation5], %s817
        %p819 = pneg %p133
        %p820 = pneg %p130
        %s821 = sand.u32 %s53, 1
        %s822 = scalar_lea.sflag [#allocation8], %s821
        %s823 = sand.u32 %s146, 1
        %s824 = scalar_lea.vmem [#allocation7], %s823
        %p825 = pneg %p159
        %p826 = pneg %p156
        %s827 = sand.u32 %s53, 1
        %s828 = scalar_lea.sflag [#allocation8], %s827
        %s829 = sand.u32 %s172, 1
        %s830 = smul.addr %s829, 192
        %s831 = scalar_lea.vmem [#allocation9], %s830
        %p832 = pneg %p185
        %p833 = pneg %p182
        %s834 = sand.u32 %s53, 1
        %s835 = scalar_lea.sflag [#allocation11], %s834
        %s836 = sand.u32 %s198, 1
        %s837 = smul.addr %s836, 3
        %s838 = scalar_lea.vmem [#allocation10], %s837
        %p839 = pneg %p211
        %p840 = pneg %p208
        %s841 = sand.u32 %s53, 1
        %s842 = scalar_lea.sflag [#allocation11], %s841
        %s843 = sand.u32 %s224, 1
        %s844 = smul.addr %s843, 64
        %s845 = scalar_lea.vmem [#allocation12], %s844
        %p846 = pneg %p237
        %p847 = pneg %p234
        %s848 = sand.u32 %s53, 1
        %s849 = scalar_lea.sflag [#allocation14], %s848
        %s850 = sand.u32 %s250, 1
        %s851 = scalar_lea.vmem [#allocation13], %s850
        %p852 = pneg %p263
        %p853 = pneg %p260
        %s854 = sand.u32 %s53, 1
        %s855 = scalar_lea.sflag [#allocation14], %s854
        %s856 = sand.u32 %s276, 1
        %s857 = scalar_lea.vmem [#allocation15], %s856
        %p858 = pneg %p289
        %p859 = pneg %p286
        %s860 = sand.u32 %s53, 1
        %s861 = scalar_lea.sflag [#allocation17], %s860
        %s862 = sand.u32 %s302, 1
        %s863 = scalar_lea.vmem [#allocation16], %s862
        %p864 = pneg %p315
        %p865 = pneg %p312
        %s866 = sand.u32 %s53, 1
        %s867 = scalar_lea.sflag [#allocation17], %s866
        %s868 = sand.u32 %s328, 1
        %s869 = smul.addr %s868, 128
        %s870 = scalar_lea.vmem [#allocation18], %s869
        %p871 = pneg %p341
        %p872 = pneg %p338
        %s873 = sand.u32 %s53, 1
        %s874 = scalar_lea.sflag [#allocation20], %s873
        %s875 = sand.u32 %s354, 1
        %s876 = smul.addr %s875, 2
        %s877 = scalar_lea.vmem [#allocation19], %s876
        %p878 = pneg %p367
        %p879 = pneg %p364
        %s880 = sand.u32 %s53, 1
        %s881 = scalar_lea.sflag [#allocation20], %s880
        %s882 = sand.u32 %s380, 1
        %s883 = smul.addr %s882, 128
        %s884 = scalar_lea.vmem [#allocation21], %s883
        %p885 = pneg %p393
        %p886 = pneg %p390
        %s887 = sand.u32 %s406, 1
        %s888 = scalar_lea.sflag [#allocation23], %s887
        %s889 = sand.u32 %s406, 1
        %s890 = scalar_lea.vmem [#allocation22], %s889
        %p891 = pneg %p419
        %p892 = pneg %p416
        %p893 = pneg %p445
        %p894 = pneg %p442
        %p895 = scmp.lt.s32.totalorder %s57, 1
        %s896 = scalar_select %p895, %s57, 1
        %s897 = smul.addr %s896, 8
        %s898 = scalar_lea.vmem %s15, %s897
        %p899 = scmp.lt.s32.totalorder %s57, 1
        %s900 = scalar_select %p899, %s57, 1
        %s901 = smul.addr %s900, 8
        %s902 = scalar_lea.vmem %s1, %s901
        %p903 = scmp.lt.s32.totalorder %s57, 1
        %s904 = scalar_select %p903, %s57, 1
        %s905 = smul.addr %s904, 8
        %s906 = scalar_lea.vmem %s15, %s905
        %p908 = scmp.eq.s32.totalorder %s58, 0
        // Predicated region
        $region125: #{prompt_encoder_forward.2} parent=75 // pred_check
          %p909 = pneg %p908
        $region126: #{prompt_encoder_forward.2} parent=75 // pred_check_branch
          %911 = sbr.rel (%p909) target = $region128
        $region127: #{prompt_encoder_forward.2} parent=75 // pred_region
          %v912 = vld [vmem:[%s902] sm:$0xff]
          %913 = vst [vmem:[#allocation2] sm:$0xff] %v912
        $region128: #{prompt_encoder_forward.2} parent=75 // pred_fallthru
          _
        %p914 = scmp.eq.s32.totalorder %s58, 2
        // Predicated region
        $region129: #{prompt_encoder_forward.2} parent=75 // pred_check
          %p915 = pneg %p914
        $region130: #{prompt_encoder_forward.2} parent=75 // pred_check_branch
          %917 = sbr.rel (%p915) target = $region132
        $region131: #{prompt_encoder_forward.2} parent=75 // pred_region
          %v918 = vld [vmem:[#allocation2] sm:$0xff]
          %919 = vst [vmem:[%s906] sm:$0xff] %v918
        $region132: #{prompt_encoder_forward.2} parent=75 // pred_fallthru
          _
        %v920 = vld [vmem:[#allocation2] sm:$0xff]
        %v921 = vld [vmem:[%s708] sm:$0x1]
        %v922 = vld [vmem:[%s716] sm:$0x1]
        %923 = vadd.xlane.f32.xlu0 %v920
        %v924 = vpop.xlane.xlu0 %923
        %v925 = vrcp.pop 128.0
        %v926 = vmul.f32 %v924, %v925
        %v927 = vsub.f32 %v920, %v926
        %v928 = vmul.f32 %v927, %v927
        %929 = vadd.xlane.f32.xlu0 %v928
        %v930 = vpop.xlane.xlu0 %929
        %v931 = vmul.f32 %v930, %v925
        %v932 = vadd.f32 %v931, 1e-05
        %v933 = vrsqrt.pop %v932
        %v934 = vmul.f32 %v927, %v933
        %v936 = vlaneseq
        %v937 = vshrl.u32 %v936, 7
        %v938 = vsub.s32 0, %v937
        %v939 = vrot.slane %v921, %v938
        %v941 = vmul.f32 %v934, %v939
        %v943 = vlaneseq
        %v944 = vshrl.u32 %v943, 7
        %v945 = vsub.s32 0, %v944
        %v946 = vrot.slane %v922, %v945
        %v948 = vadd.f32 %v941, %v946
        %v949 = vpack.c.bf16 %v948, %v948
        %v950 = vld [vmem:[%s725] sm:$0xff]
        %v951 = vld [vmem:[%s725 + $0x8] sm:$0xf]
        %v952 = vld [vmem:[%s725 + $0xc] sm:$0xff]
        %v953 = vld [vmem:[%s725 + $0x14] sm:$0xf]
        %v954 = vld [vmem:[%s725 + $0x18] sm:$0xff]
        %v955 = vld [vmem:[%s725 + $0x20] sm:$0xf]
        %v956 = vld [vmem:[%s725 + $0x24] sm:$0xff]
        %v957 = vld [vmem:[%s725 + $0x2c] sm:$0xf]
        %v958 = vld [vmem:[%s725 + $0x30] sm:$0xff]
        %v959 = vld [vmem:[%s725 + $0x38] sm:$0xf]
        %v960 = vld [vmem:[%s725 + $0x3c] sm:$0xff]
        %v961 = vld [vmem:[%s725 + $0x44] sm:$0xf]
        %v962 = vld [vmem:[%s725 + $0x48] sm:$0xff]
        %v963 = vld [vmem:[%s725 + $0x50] sm:$0xf]
        %v964 = vld [vmem:[%s725 + $0x54] sm:$0xff]
        %v965 = vld [vmem:[%s725 + $0x5c] sm:$0xf]
        %v966 = vld [vmem:[%s725 + $0x60] sm:$0xff]
        %v967 = vld [vmem:[%s725 + $0x68] sm:$0xf]
        %v968 = vld [vmem:[%s725 + $0x6c] sm:$0xff]
        %v969 = vld [vmem:[%s725 + $0x74] sm:$0xf]
        %v970 = vld [vmem:[%s725 + $0x78] sm:$0xff]
        %v971 = vld [vmem:[%s725 + $0x80] sm:$0xf]
        %v972 = vld [vmem:[%s725 + $0x84] sm:$0xff]
        %v973 = vld [vmem:[%s725 + $0x8c] sm:$0xf]
        %v974 = vld [vmem:[%s725 + $0x90] sm:$0xff]
        %v975 = vld [vmem:[%s725 + $0x98] sm:$0xf]
        %v976 = vld [vmem:[%s725 + $0x9c] sm:$0xff]
        %v977 = vld [vmem:[%s725 + $0xa4] sm:$0xf]
        %v978 = vld [vmem:[%s725 + $0xa8] sm:$0xff]
        %v979 = vld [vmem:[%s725 + $0xb0] sm:$0xf]
        %v980 = vld [vmem:[%s725 + $0xb4] sm:$0xff]
        %v981 = vld [vmem:[%s725 + $0xbc] sm:$0xf]
        %v982 = vld [vmem:[%s734] sm:$0x7]
        %v984 = vlaneseq
        %v985 = vshrl.u32 %v984, 7
        %v986 = vsub.s32 0, %v985
        %v987 = vrot.slane %v982, %v986
        %v988 = vlaneseq
        %v989 = vshrl.u32 %v988, 7
        %v990 = vsub.s32 1, %v989
        %v991 = vrot.slane %v982, %v990
        %v992 = vlaneseq
        %v993 = vshrl.u32 %v992, 7
        %v994 = vsub.s32 2, %v993
        %v995 = vrot.slane %v982, %v994
        %v1031 = vunpack.c.l.b16 %v950
        %v1032 = vunpack.c.h.b16 %v950
        %v1033 = vunpack.c.l.b16 %v951
        %v1034 = vunpack.c.l.b16 %v952
        %v1035 = vunpack.c.h.b16 %v952
        %v1036 = vunpack.c.l.b16 %v953
        %v1037 = vunpack.c.l.b16 %v954
        %v1038 = vunpack.c.h.b16 %v954
        %v1039 = vunpack.c.l.b16 %v955
        %v1040 = vunpack.c.l.b16 %v956
        %v1041 = vunpack.c.h.b16 %v956
        %v1042 = vunpack.c.l.b16 %v957
        %v1043 = vunpack.c.l.b16 %v958
        %v1044 = vunpack.c.h.b16 %v958
        %v1045 = vunpack.c.l.b16 %v959
        %v1046 = vunpack.c.l.b16 %v960
        %v1047 = vunpack.c.h.b16 %v960
        %v1048 = vunpack.c.l.b16 %v961
        %v1049 = vunpack.c.l.b16 %v962
        %v1050 = vunpack.c.h.b16 %v962
        %v1051 = vunpack.c.l.b16 %v963
        %v1052 = vunpack.c.l.b16 %v964
        %v1053 = vunpack.c.h.b16 %v964
        %v1054 = vunpack.c.l.b16 %v965
        %v1055 = vunpack.c.l.b16 %v966
        %v1056 = vunpack.c.h.b16 %v966
        %v1057 = vunpack.c.l.b16 %v967
        %v1058 = vunpack.c.l.b16 %v968
        %v1059 = vunpack.c.h.b16 %v968
        %v1060 = vunpack.c.l.b16 %v969
        %v1061 = vunpack.c.l.b16 %v970
        %v1062 = vunpack.c.h.b16 %v970
        %v1063 = vunpack.c.l.b16 %v971
        %v1064 = vunpack.c.l.b16 %v972
        %v1065 = vunpack.c.h.b16 %v972
        %v1066 = vunpack.c.l.b16 %v973
        %v1067 = vunpack.c.l.b16 %v974
        %v1068 = vunpack.c.h.b16 %v974
        %v1069 = vunpack.c.l.b16 %v975
        %v1070 = vunpack.c.l.b16 %v976
        %v1071 = vunpack.c.h.b16 %v976
        %v1072 = vunpack.c.l.b16 %v977
        %v1073 = vunpack.c.l.b16 %v978
        %v1074 = vunpack.c.h.b16 %v978
        %v1075 = vunpack.c.l.b16 %v979
        %v1076 = vunpack.c.l.b16 %v980
        %v1077 = vunpack.c.h.b16 %v980
        %v1078 = vunpack.c.l.b16 %v981
        %v1079 = vpack.c.b16 %v1034, %v1031
        %v1080 = vpack.c.b16 %v1035, %v1032
        %v1081 = vpack.c.b16 %v1036, %v1033
        %v1082 = vpack.c.b16 %v1040, %v1037
        %v1083 = vpack.c.b16 %v1041, %v1038
        %v1084 = vpack.c.b16 %v1042, %v1039
        %v1085 = vpack.c.b16 %v1046, %v1043
        %v1086 = vpack.c.b16 %v1047, %v1044
        %v1087 = vpack.c.b16 %v1048, %v1045
        %v1088 = vpack.c.b16 %v1052, %v1049
        %v1089 = vpack.c.b16 %v1053, %v1050
        %v1090 = vpack.c.b16 %v1054, %v1051
        %v1091 = vpack.c.b16 %v1058, %v1055
        %v1092 = vpack.c.b16 %v1059, %v1056
        %v1093 = vpack.c.b16 %v1060, %v1057
        %v1094 = vpack.c.b16 %v1064, %v1061
        %v1095 = vpack.c.b16 %v1065, %v1062
        %v1096 = vpack.c.b16 %v1066, %v1063
        %v1097 = vpack.c.b16 %v1070, %v1067
        %v1098 = vpack.c.b16 %v1071, %v1068
        %v1099 = vpack.c.b16 %v1072, %v1069
        %v1100 = vpack.c.b16 %v1076, %v1073
        %v1101 = vpack.c.b16 %v1077, %v1074
        %v1102 = vpack.c.b16 %v1078, %v1075
        %1127 = vmatprep.subr.bf16.mxu0 %v1101
        %1128 = vmatpush1.bf16.msra.mxu0 %v1100
        %1129 = vmatprep.subr.bf16.mxu0 %v1098
        %1130 = vmatpush1.bf16.msra.mxu0 %v1097
        %1131 = vmatprep.subr.bf16.mxu0 %v1095
        %1132 = vmatpush1.bf16.msra.mxu0 %v1094
        %1133 = vmatprep.subr.bf16.mxu0 %v1092
        %1134 = vmatpush1.bf16.msra.mxu0 %v1091
        %1135 = vmatprep.subr.bf16.mxu0 %v1089
        %1136 = vmatpush1.bf16.msra.mxu0 %v1088
        %1137 = vmatprep.subr.bf16.mxu0 %v1086
        %1138 = vmatpush1.bf16.msra.mxu0 %v1085
        %1139 = vmatprep.subr.bf16.mxu0 %v1083
        %1140 = vmatpush1.bf16.msra.mxu0 %v1082
        %1141 = vmatprep.subr.bf16.mxu0 %v1080
        %1142 = vmatpush1.bf16.msra.mxu0 %v1079
        %1143 = vmatprep.subr.bf16.mxu0 0
        %1144 = vmatpush2.bf16.msra.mxu0 0
        %1145 = vmatprep.subr.bf16.mxu0 0
        %1146 = vmatpush2.bf16.msra.mxu0 0
        %1147 = vmatprep.subr.bf16.mxu0 0
        %1148 = vmatpush2.bf16.msra.mxu0 0
        %1149 = vmatprep.subr.bf16.mxu0 0
        %1150 = vmatpush2.bf16.msra.mxu0 0
        %1151 = vmatprep.subr.bf16.mxu0 0
        %1152 = vmatpush2.bf16.msra.mxu0 0
        %1153 = vmatprep.subr.bf16.mxu0 0
        %1154 = vmatpush2.bf16.msra.mxu0 0
        %1155 = vmatprep.subr.bf16.mxu0 0
        %1156 = vmatpush2.bf16.msra.mxu0 0
        %1157 = vmatprep.subr.bf16.mxu0 0
        %1158 = vmatpush2.bf16.msra.mxu0 0
        %1159 = vmatprep.mubr.bf16.mxu0 0
        %1160 = vmatmul.mubr.bf16.gmra.mxu0 %v949
        %v1161 = vpop.f32.mrf.mxu0
        %v1162 = vadd.f32 %v987, %v1161
        %v1163 = vpop.f32.mrf.mxu0
        %v1164 = vadd.f32 %v991, %v1163
        %v1165 = vpop.f32.mrf.mxu0
        %v1166 = vpop.f32.mrf.mxu0
        %1167 = vdwg.mxu0
        %1168 = vmatprep.subr.bf16.mxu0 0
        %1169 = vmatpush1.bf16.msra.mxu0 %v1102
        %1170 = vmatprep.subr.bf16.mxu0 0
        %1171 = vmatpush1.bf16.msra.mxu0 %v1099
        %1172 = vmatprep.subr.bf16.mxu0 0
        %1173 = vmatpush1.bf16.msra.mxu0 %v1096
        %1174 = vmatprep.subr.bf16.mxu0 0
        %1175 = vmatpush1.bf16.msra.mxu0 %v1093
        %1176 = vmatprep.subr.bf16.mxu0 0
        %1177 = vmatpush1.bf16.msra.mxu0 %v1090
        %1178 = vmatprep.subr.bf16.mxu0 0
        %1179 = vmatpush1.bf16.msra.mxu0 %v1087
        %1180 = vmatprep.subr.bf16.mxu0 0
        %1181 = vmatpush1.bf16.msra.mxu0 %v1084
        %1182 = vmatprep.subr.bf16.mxu0 0
        %1183 = vmatpush1.bf16.msra.mxu0 %v1081
        %1184 = vmatprep.subr.bf16.mxu0 0
        %1185 = vmatpush2.bf16.msra.mxu0 0
        %1186 = vmatprep.subr.bf16.mxu0 0
        %1187 = vmatpush2.bf16.msra.mxu0 0
        %1188 = vmatprep.subr.bf16.mxu0 0
        %1189 = vmatpush2.bf16.msra.mxu0 0
        %1190 = vmatprep.subr.bf16.mxu0 0
        %1191 = vmatpush2.bf16.msra.mxu0 0
        %1192 = vmatprep.subr.bf16.mxu0 0
        %1193 = vmatpush2.bf16.msra.mxu0 0
        %1194 = vmatprep.subr.bf16.mxu0 0
        %1195 = vmatpush2.bf16.msra.mxu0 0
        %1196 = vmatprep.subr.bf16.mxu0 0
        %1197 = vmatpush2.bf16.msra.mxu0 0
        %1198 = vmatprep.subr.bf16.mxu0 0
        %1199 = vmatpush2.bf16.msra.mxu0 0
        %1200 = vmatprep.mubr.bf16.mxu0 0
        %1201 = vmatmul.mubr.bf16.gmra.mxu0 %v949
        %v1202 = vpop.f32.mrf.mxu0
        %v1203 = vadd.f32 %v995, %v1202
        %v1204 = vpop.f32.mrf.mxu0
        %v1205 = vpop.f32.mrf.mxu0
        %v1206 = vpop.f32.mrf.mxu0
        %1207 = vdwg.mxu0
        %v1208 = vpack.c.bf16 %v1162, %v1162
        %v1209 = vpack.c.bf16 %v1164, %v1164
        %1210 = vmatprep.subr.bf16.mxu0 0
        %1211 = vmatpush1.bf16.xpose.msra.mxu0 0
        %1212 = vmatprep.subr.bf16.mxu0 0
        %1213 = vmatpush1.bf16.xpose.msra.mxu0 0
        %1214 = vmatprep.subr.bf16.mxu0 0
        %1215 = vmatpush1.bf16.xpose.msra.mxu0 0
        %1216 = vmatprep.subr.bf16.mxu0 0
        %1217 = vmatpush1.bf16.xpose.msra.mxu0 0
        %1218 = vmatprep.subr.bf16.mxu0 0
        %1219 = vmatpush1.bf16.xpose.msra.mxu0 0
        %1220 = vmatprep.subr.bf16.mxu0 0
        %1221 = vmatpush1.bf16.xpose.msra.mxu0 0
        %1222 = vmatprep.subr.bf16.mxu0 0
        %1223 = vmatpush1.bf16.xpose.msra.mxu0 0
        %1224 = vmatprep.subr.bf16.mxu0 0
        %1225 = vmatpush1.bf16.xpose.msra.mxu0 %v1209
        %1226 = vmatprep.subr.bf16.mxu0 0
        %1227 = vmatpush2.bf16.xpose.msra.mxu0 0
        %1228 = vmatprep.subr.bf16.mxu0 0
        %1229 = vmatpush2.bf16.xpose.msra.mxu0 0
        %1230 = vmatprep.subr.bf16.mxu0 0
        %1231 = vmatpush2.bf16.xpose.msra.mxu0 0
        %1232 = vmatprep.subr.bf16.mxu0 0
        %1233 = vmatpush2.bf16.xpose.msra.mxu0 0
        %1234 = vmatprep.subr.bf16.mxu0 0
        %1235 = vmatpush2.bf16.xpose.msra.mxu0 0
        %1236 = vmatprep.subr.bf16.mxu0 0
        %1237 = vmatpush2.bf16.xpose.msra.mxu0 0
        %1238 = vmatprep.subr.bf16.mxu0 0
        %1239 = vmatpush2.bf16.xpose.msra.mxu0 0
        %1240 = vmatprep.subr.bf16.mxu0 0
        %1241 = vmatpush2.bf16.xpose.msra.mxu0 0
        %1242 = vmatprep.mubr.bf16.mxu0 0
        %1243 = vmatmul.mubr.bf16.gmra.mxu0 %v1208
        %v1244 = vpop.f32.mrf.mxu0
        %v1245 = vadd.f32 0.0, %v1244
        %v1246 = vpop.f32.mrf.mxu0
        %v1247 = vpop.f32.mrf.mxu0
        %v1248 = vpop.f32.mrf.mxu0
        %1249 = vdwg.mxu0
        %v1250 = vmul.f32 %v1245, 0.088388346
        %v1251 = vld [vmem:[%s2] sm:$0xff]
        %v1252 = vadd.f32 %v1250, %v1251
        %vm1253 = vcmask 64512
        %v1254 = vsel %vm1253, %v1252, -inf
        %1255 = vmax.xlane.f32.xlu0 %v1254
        %v1256 = vpop.xlane.xlu0 %1255
        %v1257 = vsub.f32 %v1252, %v1256
        %v1258 = vmul.f32 %v1257, 1.442695
        %v1259 = vpow.pop %v1258
        %v1260 = vsel %vm1253, %v1259, 0.0
        %1261 = vadd.xlane.f32.xlu0 %v1260
        %v1262 = vpop.xlane.xlu0 %1261
        %v1263 = vrcp.pop %v1262
        %v1264 = vmul.f32 %v1259, %v1263
        %v1265 = vpack.c.bf16 %v1264, %v1264
        %v1266 = vpack.c.bf16 %v1203, %v1203
        %v1268 = vsel %vm1253, %v1265, 0
        %vm1270 = vcmask 1043456
        %v1272 = vsel %vm1270, %v1266, 0
        %1274 = vmatprep.subr.bf16.mxu0 0
        %1275 = vmatpush1.bf16.msra.mxu0 0
        %1276 = vmatprep.subr.bf16.mxu0 0
        %1277 = vmatpush1.bf16.msra.mxu0 0
        %1278 = vmatprep.subr.bf16.mxu0 0
        %1279 = vmatpush1.bf16.msra.mxu0 0
        %1280 = vmatprep.subr.bf16.mxu0 0
        %1281 = vmatpush1.bf16.msra.mxu0 0
        %1282 = vmatprep.subr.bf16.mxu0 0
        %1283 = vmatpush1.bf16.msra.mxu0 0
        %1284 = vmatprep.subr.bf16.mxu0 0
        %1285 = vmatpush1.bf16.msra.mxu0 0
        %1286 = vmatprep.subr.bf16.mxu0 0
        %1287 = vmatpush1.bf16.msra.mxu0 0
        %1288 = vmatprep.subr.bf16.mxu0 0
        %1289 = vmatpush1.bf16.msra.mxu0 %v1272
        %1290 = vmatprep.subr.bf16.mxu0 0
        %1291 = vmatpush2.bf16.msra.mxu0 0
        %1292 = vmatprep.subr.bf16.mxu0 0
        %1293 = vmatpush2.bf16.msra.mxu0 0
        %1294 = vmatprep.subr.bf16.mxu0 0
        %1295 = vmatpush2.bf16.msra.mxu0 0
        %1296 = vmatprep.subr.bf16.mxu0 0
        %1297 = vmatpush2.bf16.msra.mxu0 0
        %1298 = vmatprep.subr.bf16.mxu0 0
        %1299 = vmatpush2.bf16.msra.mxu0 0
        %1300 = vmatprep.subr.bf16.mxu0 0
        %1301 = vmatpush2.bf16.msra.mxu0 0
        %1302 = vmatprep.subr.bf16.mxu0 0
        %1303 = vmatpush2.bf16.msra.mxu0 0
        %1304 = vmatprep.subr.bf16.mxu0 0
        %1305 = vmatpush2.bf16.msra.mxu0 0
        %1306 = vmatprep.mubr.bf16.mxu0 0
        %1307 = vmatmul.mubr.bf16.gmra.mxu0 %v1268
        %v1308 = vpop.f32.mrf.mxu0
        %v1309 = vadd.f32 0.0, %v1308
        %v1310 = vpop.f32.mrf.mxu0
        %v1311 = vpop.f32.mrf.mxu0
        %v1312 = vpop.f32.mrf.mxu0
        %1313 = vdwg.mxu0
        %v1314 = vpack.c.bf16 %v1309, %v1309
        %v1315 = vld [vmem:[%s743] sm:$0xf]
        %v1316 = vld [vmem:[%s743 + $0x4] sm:$0xf]
        %v1317 = vld [vmem:[%s743 + $0x8] sm:$0xf]
        %v1318 = vld [vmem:[%s743 + $0xc] sm:$0xf]
        %v1319 = vld [vmem:[%s743 + $0x10] sm:$0xf]
        %v1320 = vld [vmem:[%s743 + $0x14] sm:$0xf]
        %v1321 = vld [vmem:[%s743 + $0x18] sm:$0xf]
        %v1322 = vld [vmem:[%s743 + $0x1c] sm:$0xf]
        %v1323 = vld [vmem:[%s743 + $0x20] sm:$0xf]
        %v1324 = vld [vmem:[%s743 + $0x24] sm:$0xf]
        %v1325 = vld [vmem:[%s743 + $0x28] sm:$0xf]
        %v1326 = vld [vmem:[%s743 + $0x2c] sm:$0xf]
        %v1327 = vld [vmem:[%s743 + $0x30] sm:$0xf]
        %v1328 = vld [vmem:[%s743 + $0x34] sm:$0xf]
        %v1329 = vld [vmem:[%s743 + $0x38] sm:$0xf]
        %v1330 = vld [vmem:[%s743 + $0x3c] sm:$0xf]
        %v1331 = vld [vmem:[%s751] sm:$0x1]
        %v1333 = vlaneseq
        %v1334 = vshrl.u32 %v1333, 7
        %v1335 = vsub.s32 0, %v1334
        %v1336 = vrot.slane %v1331, %v1335
        %v1354 = vunpack.c.l.b16 %v1315
        %v1355 = vunpack.c.l.b16 %v1316
        %v1356 = vunpack.c.l.b16 %v1317
        %v1357 = vunpack.c.l.b16 %v1318
        %v1358 = vunpack.c.l.b16 %v1319
        %v1359 = vunpack.c.l.b16 %v1320
        %v1360 = vunpack.c.l.b16 %v1321
        %v1361 = vunpack.c.l.b16 %v1322
        %v1362 = vunpack.c.l.b16 %v1323
        %v1363 = vunpack.c.l.b16 %v1324
        %v1364 = vunpack.c.l.b16 %v1325
        %v1365 = vunpack.c.l.b16 %v1326
        %v1366 = vunpack.c.l.b16 %v1327
        %v1367 = vunpack.c.l.b16 %v1328
        %v1368 = vunpack.c.l.b16 %v1329
        %v1369 = vunpack.c.l.b16 %v1330
        %v1370 = vpack.c.b16 %v1355, %v1354
        %v1371 = vpack.c.b16 %v1357, %v1356
        %v1372 = vpack.c.b16 %v1359, %v1358
        %v1373 = vpack.c.b16 %v1361, %v1360
        %v1374 = vpack.c.b16 %v1363, %v1362
        %v1375 = vpack.c.b16 %v1365, %v1364
        %v1376 = vpack.c.b16 %v1367, %v1366
        %v1377 = vpack.c.b16 %v1369, %v1368
        %1386 = vmatprep.subr.bf16.mxu0 0
        %1387 = vmatpush1.bf16.msra.mxu0 %v1377
        %1388 = vmatprep.subr.bf16.mxu0 0
        %1389 = vmatpush1.bf16.msra.mxu0 %v1376
        %1390 = vmatprep.subr.bf16.mxu0 0
        %1391 = vmatpush1.bf16.msra.mxu0 %v1375
        %1392 = vmatprep.subr.bf16.mxu0 0
        %1393 = vmatpush1.bf16.msra.mxu0 %v1374
        %1394 = vmatprep.subr.bf16.mxu0 0
        %1395 = vmatpush1.bf16.msra.mxu0 %v1373
        %1396 = vmatprep.subr.bf16.mxu0 0
        %1397 = vmatpush1.bf16.msra.mxu0 %v1372
        %1398 = vmatprep.subr.bf16.mxu0 0
        %1399 = vmatpush1.bf16.msra.mxu0 %v1371
        %1400 = vmatprep.subr.bf16.mxu0 0
        %1401 = vmatpush1.bf16.msra.mxu0 %v1370
        %1402 = vmatprep.subr.bf16.mxu0 0
        %1403 = vmatpush2.bf16.msra.mxu0 0
        %1404 = vmatprep.subr.bf16.mxu0 0
        %1405 = vmatpush2.bf16.msra.mxu0 0
        %1406 = vmatprep.subr.bf16.mxu0 0
        %1407 = vmatpush2.bf16.msra.mxu0 0
        %1408 = vmatprep.subr.bf16.mxu0 0
        %1409 = vmatpush2.bf16.msra.mxu0 0
        %1410 = vmatprep.subr.bf16.mxu0 0
        %1411 = vmatpush2.bf16.msra.mxu0 0
        %1412 = vmatprep.subr.bf16.mxu0 0
        %1413 = vmatpush2.bf16.msra.mxu0 0
        %1414 = vmatprep.subr.bf16.mxu0 0
        %1415 = vmatpush2.bf16.msra.mxu0 0
        %1416 = vmatprep.subr.bf16.mxu0 0
        %1417 = vmatpush2.bf16.msra.mxu0 0
        %1418 = vmatprep.mubr.bf16.mxu0 0
        %1419 = vmatmul.mubr.bf16.gmra.mxu0 %v1314
        %v1420 = vpop.f32.mrf.mxu0
        %v1421 = vadd.f32 %v1336, %v1420
        %v1422 = vpop.f32.mrf.mxu0
        %v1423 = vpop.f32.mrf.mxu0
        %v1424 = vpop.f32.mrf.mxu0
        %1425 = vdwg.mxu0
        %v1426 = vadd.f32 %v920, %v1421
        %v1427 = vld [vmem:[%s759] sm:$0x1]
        %v1428 = vld [vmem:[%s767] sm:$0x1]
        %1429 = vadd.xlane.f32.xlu0 %v1426
        %v1430 = vpop.xlane.xlu0 %1429
        %v1431 = vmul.f32 %v1430, %v925
        %v1432 = vsub.f32 %v1426, %v1431
        %v1433 = vmul.f32 %v1432, %v1432
        %1434 = vadd.xlane.f32.xlu0 %v1433
        %v1435 = vpop.xlane.xlu0 %1434
        %v1436 = vmul.f32 %v1435, %v925
        %v1437 = vadd.f32 %v1436, 1e-05
        %v1438 = vrsqrt.pop %v1437
        %v1439 = vmul.f32 %v1432, %v1438
        %v1441 = vlaneseq
        %v1442 = vshrl.u32 %v1441, 7
        %v1443 = vsub.s32 0, %v1442
        %v1444 = vrot.slane %v1427, %v1443
        %v1446 = vmul.f32 %v1439, %v1444
        %v1448 = vlaneseq
        %v1449 = vshrl.u32 %v1448, 7
        %v1450 = vsub.s32 0, %v1449
        %v1451 = vrot.slane %v1428, %v1450
        %v1453 = vadd.f32 %v1446, %v1451
        %v1454 = vpack.c.bf16 %v1453, %v1453
        %v1455 = vld [vmem:[%s776] sm:$0xff]
        %v1456 = vld [vmem:[%s776 + $0x8] sm:$0xff]
        %v1457 = vld [vmem:[%s776 + $0x10] sm:$0xff]
        %v1458 = vld [vmem:[%s776 + $0x18] sm:$0xff]
        %v1459 = vld [vmem:[%s776 + $0x20] sm:$0xff]
        %v1460 = vld [vmem:[%s776 + $0x28] sm:$0xff]
        %v1461 = vld [vmem:[%s776 + $0x30] sm:$0xff]
        %v1462 = vld [vmem:[%s776 + $0x38] sm:$0xff]
        %v1463 = vld [vmem:[%s776 + $0x40] sm:$0xff]
        %v1464 = vld [vmem:[%s776 + $0x48] sm:$0xff]
        %v1465 = vld [vmem:[%s776 + $0x50] sm:$0xff]
        %v1466 = vld [vmem:[%s776 + $0x58] sm:$0xff]
        %v1467 = vld [vmem:[%s776 + $0x60] sm:$0xff]
        %v1468 = vld [vmem:[%s776 + $0x68] sm:$0xff]
        %v1469 = vld [vmem:[%s776 + $0x70] sm:$0xff]
        %v1470 = vld [vmem:[%s776 + $0x78] sm:$0xff]
        %v1471 = vld [vmem:[%s785] sm:$0x3]
        %v1473 = vlaneseq
        %v1474 = vshrl.u32 %v1473, 7
        %v1475 = vsub.s32 0, %v1474
        %v1476 = vrot.slane %v1471, %v1475
        %v1477 = vlaneseq
        %v1478 = vshrl.u32 %v1477, 7
        %v1479 = vsub.s32 1, %v1478
        %v1480 = vrot.slane %v1471, %v1479
        %v1499 = vunpack.c.l.b16 %v1455
        %v1500 = vunpack.c.h.b16 %v1455
        %v1501 = vunpack.c.l.b16 %v1456
        %v1502 = vunpack.c.h.b16 %v1456
        %v1503 = vunpack.c.l.b16 %v1457
        %v1504 = vunpack.c.h.b16 %v1457
        %v1505 = vunpack.c.l.b16 %v1458
        %v1506 = vunpack.c.h.b16 %v1458
        %v1507 = vunpack.c.l.b16 %v1459
        %v1508 = vunpack.c.h.b16 %v1459
        %v1509 = vunpack.c.l.b16 %v1460
        %v1510 = vunpack.c.h.b16 %v1460
        %v1511 = vunpack.c.l.b16 %v1461
        %v1512 = vunpack.c.h.b16 %v1461
        %v1513 = vunpack.c.l.b16 %v1462
        %v1514 = vunpack.c.h.b16 %v1462
        %v1515 = vunpack.c.l.b16 %v1463
        %v1516 = vunpack.c.h.b16 %v1463
        %v1517 = vunpack.c.l.b16 %v1464
        %v1518 = vunpack.c.h.b16 %v1464
        %v1519 = vunpack.c.l.b16 %v1465
        %v1520 = vunpack.c.h.b16 %v1465
        %v1521 = vunpack.c.l.b16 %v1466
        %v1522 = vunpack.c.h.b16 %v1466
        %v1523 = vunpack.c.l.b16 %v1467
        %v1524 = vunpack.c.h.b16 %v1467
        %v1525 = vunpack.c.l.b16 %v1468
        %v1526 = vunpack.c.h.b16 %v1468
        %v1527 = vunpack.c.l.b16 %v1469
        %v1528 = vunpack.c.h.b16 %v1469
        %v1529 = vunpack.c.l.b16 %v1470
        %v1530 = vunpack.c.h.b16 %v1470
        %v1531 = vpack.c.b16 %v1501, %v1499
        %v1532 = vpack.c.b16 %v1502, %v1500
        %v1533 = vpack.c.b16 %v1505, %v1503
        %v1534 = vpack.c.b16 %v1506, %v1504
        %v1535 = vpack.c.b16 %v1509, %v1507
        %v1536 = vpack.c.b16 %v1510, %v1508
        %v1537 = vpack.c.b16 %v1513, %v1511
        %v1538 = vpack.c.b16 %v1514, %v1512
        %v1539 = vpack.c.b16 %v1517, %v1515
        %v1540 = vpack.c.b16 %v1518, %v1516
        %v1541 = vpack.c.b16 %v1521, %v1519
        %v1542 = vpack.c.b16 %v1522, %v1520
        %v1543 = vpack.c.b16 %v1525, %v1523
        %v1544 = vpack.c.b16 %v1526, %v1524
        %v1545 = vpack.c.b16 %v1529, %v1527
        %v1546 = vpack.c.b16 %v1530, %v1528
        %1563 = vmatprep.subr.bf16.mxu0 %v1546
        %1564 = vmatpush1.bf16.msra.mxu0 %v1545
        %1565 = vmatprep.subr.bf16.mxu0 %v1544
        %1566 = vmatpush1.bf16.msra.mxu0 %v1543
        %1567 = vmatprep.subr.bf16.mxu0 %v1542
        %1568 = vmatpush1.bf16.msra.mxu0 %v1541
        %1569 = vmatprep.subr.bf16.mxu0 %v1540
        %1570 = vmatpush1.bf16.msra.mxu0 %v1539
        %1571 = vmatprep.subr.bf16.mxu0 %v1538
        %1572 = vmatpush1.bf16.msra.mxu0 %v1537
        %1573 = vmatprep.subr.bf16.mxu0 %v1536
        %1574 = vmatpush1.bf16.msra.mxu0 %v1535
        %1575 = vmatprep.subr.bf16.mxu0 %v1534
        %1576 = vmatpush1.bf16.msra.mxu0 %v1533
        %1577 = vmatprep.subr.bf16.mxu0 %v1532
        %1578 = vmatpush1.bf16.msra.mxu0 %v1531
        %1579 = vmatprep.subr.bf16.mxu0 0
        %1580 = vmatpush2.bf16.msra.mxu0 0
        %1581 = vmatprep.subr.bf16.mxu0 0
        %1582 = vmatpush2.bf16.msra.mxu0 0
        %1583 = vmatprep.subr.bf16.mxu0 0
        %1584 = vmatpush2.bf16.msra.mxu0 0
        %1585 = vmatprep.subr.bf16.mxu0 0
        %1586 = vmatpush2.bf16.msra.mxu0 0
        %1587 = vmatprep.subr.bf16.mxu0 0
        %1588 = vmatpush2.bf16.msra.mxu0 0
        %1589 = vmatprep.subr.bf16.mxu0 0
        %1590 = vmatpush2.bf16.msra.mxu0 0
        %1591 = vmatprep.subr.bf16.mxu0 0
        %1592 = vmatpush2.bf16.msra.mxu0 0
        %1593 = vmatprep.subr.bf16.mxu0 0
        %1594 = vmatpush2.bf16.msra.mxu0 0
        %1595 = vmatprep.mubr.bf16.mxu0 0
        %1596 = vmatmul.mubr.bf16.gmra.mxu0 %v1454
        %v1597 = vpop.f32.mrf.mxu0
        %v1598 = vadd.f32 %v1476, %v1597
        %v1599 = vpop.f32.mrf.mxu0
        %v1600 = vadd.f32 %v1480, %v1599
        %v1601 = vpop.f32.mrf.mxu0
        %v1602 = vpop.f32.mrf.mxu0
        %1603 = vdwg.mxu0
        %v1604 = vmul.f32 %v1598, 1.702
        %v1605 = vmul.f32 %v1600, 1.702
        %v1606 = vxor.u32 %v1604, 2147483648
        %v1607 = vxor.u32 %v1605, 2147483648
        %v1608 = vmul.f32 %v1606, 1.442695
        %v1609 = vpow.pop %v1608
        %v1610 = vmul.f32 %v1607, 1.442695
        %v1611 = vpow.pop %v1610
        %v1612 = vadd.f32 %v1609, 1.0
        %v1613 = vadd.f32 %v1611, 1.0
        %v1614 = vrcp.pop %v1612
        %v1615 = vmul.f32 1.0, %v1614
        %v1616 = vrcp.pop %v1613
        %v1617 = vmul.f32 1.0, %v1616
        %v1618 = vmul.f32 %v1598, %v1615
        %v1619 = vmul.f32 %v1600, %v1617
        %v1620 = vpack.c.bf16 %v1618, %v1618
        %v1621 = vpack.c.bf16 %v1619, %v1619
        %v1622 = vld [vmem:[%s794] sm:$0xf]
        %v1623 = vld [vmem:[%s794 + $0x4] sm:$0xf]
        %v1624 = vld [vmem:[%s794 + $0x8] sm:$0xf]
        %v1625 = vld [vmem:[%s794 + $0xc] sm:$0xf]
        %v1626 = vld [vmem:[%s794 + $0x10] sm:$0xf]
        %v1627 = vld [vmem:[%s794 + $0x14] sm:$0xf]
        %v1628 = vld [vmem:[%s794 + $0x18] sm:$0xf]
        %v1629 = vld [vmem:[%s794 + $0x1c] sm:$0xf]
        %v1630 = vld [vmem:[%s794 + $0x20] sm:$0xf]
        %v1631 = vld [vmem:[%s794 + $0x24] sm:$0xf]
        %v1632 = vld [vmem:[%s794 + $0x28] sm:$0xf]
        %v1633 = vld [vmem:[%s794 + $0x2c] sm:$0xf]
        %v1634 = vld [vmem:[%s794 + $0x30] sm:$0xf]
        %v1635 = vld [vmem:[%s794 + $0x34] sm:$0xf]
        %v1636 = vld [vmem:[%s794 + $0x38] sm:$0xf]
        %v1637 = vld [vmem:[%s794 + $0x3c] sm:$0xf]
        %v1638 = vld [vmem:[%s794 + $0x40] sm:$0xf]
        %v1639 = vld [vmem:[%s794 + $0x44] sm:$0xf]
        %v1640 = vld [vmem:[%s794 + $0x48] sm:$0xf]
        %v1641 = vld [vmem:[%s794 + $0x4c] sm:$0xf]
        %v1642 = vld [vmem:[%s794 + $0x50] sm:$0xf]
        %v1643 = vld [vmem:[%s794 + $0x54] sm:$0xf]
        %v1644 = vld [vmem:[%s794 + $0x58] sm:$0xf]
        %v1645 = vld [vmem:[%s794 + $0x5c] sm:$0xf]
        %v1646 = vld [vmem:[%s794 + $0x60] sm:$0xf]
        %v1647 = vld [vmem:[%s794 + $0x64] sm:$0xf]
        %v1648 = vld [vmem:[%s794 + $0x68] sm:$0xf]
        %v1649 = vld [vmem:[%s794 + $0x6c] sm:$0xf]
        %v1650 = vld [vmem:[%s794 + $0x70] sm:$0xf]
        %v1651 = vld [vmem:[%s794 + $0x74] sm:$0xf]
        %v1652 = vld [vmem:[%s794 + $0x78] sm:$0xf]
        %v1653 = vld [vmem:[%s794 + $0x7c] sm:$0xf]
        %v1654 = vld [vmem:[%s802] sm:$0x1]
        %v1656 = vlaneseq
        %v1657 = vshrl.u32 %v1656, 7
        %v1658 = vsub.s32 0, %v1657
        %v1659 = vrot.slane %v1654, %v1658
        %v1693 = vunpack.c.l.b16 %v1622
        %v1694 = vunpack.c.l.b16 %v1623
        %v1695 = vunpack.c.l.b16 %v1624
        %v1696 = vunpack.c.l.b16 %v1625
        %v1697 = vunpack.c.l.b16 %v1626
        %v1698 = vunpack.c.l.b16 %v1627
        %v1699 = vunpack.c.l.b16 %v1628
        %v1700 = vunpack.c.l.b16 %v1629
        %v1701 = vunpack.c.l.b16 %v1630
        %v1702 = vunpack.c.l.b16 %v1631
        %v1703 = vunpack.c.l.b16 %v1632
        %v1704 = vunpack.c.l.b16 %v1633
        %v1705 = vunpack.c.l.b16 %v1634
        %v1706 = vunpack.c.l.b16 %v1635
        %v1707 = vunpack.c.l.b16 %v1636
        %v1708 = vunpack.c.l.b16 %v1637
        %v1709 = vunpack.c.l.b16 %v1638
        %v1710 = vunpack.c.l.b16 %v1639
        %v1711 = vunpack.c.l.b16 %v1640
        %v1712 = vunpack.c.l.b16 %v1641
        %v1713 = vunpack.c.l.b16 %v1642
        %v1714 = vunpack.c.l.b16 %v1643
        %v1715 = vunpack.c.l.b16 %v1644
        %v1716 = vunpack.c.l.b16 %v1645
        %v1717 = vunpack.c.l.b16 %v1646
        %v1718 = vunpack.c.l.b16 %v1647
        %v1719 = vunpack.c.l.b16 %v1648
        %v1720 = vunpack.c.l.b16 %v1649
        %v1721 = vunpack.c.l.b16 %v1650
        %v1722 = vunpack.c.l.b16 %v1651
        %v1723 = vunpack.c.l.b16 %v1652
        %v1724 = vunpack.c.l.b16 %v1653
        %v1725 = vpack.c.b16 %v1694, %v1693
        %v1726 = vpack.c.b16 %v1696, %v1695
        %v1727 = vpack.c.b16 %v1698, %v1697
        %v1728 = vpack.c.b16 %v1700, %v1699
        %v1729 = vpack.c.b16 %v1702, %v1701
        %v1730 = vpack.c.b16 %v1704, %v1703
        %v1731 = vpack.c.b16 %v1706, %v1705
        %v1732 = vpack.c.b16 %v1708, %v1707
        %v1733 = vpack.c.b16 %v1710, %v1709
        %v1734 = vpack.c.b16 %v1712, %v1711
        %v1735 = vpack.c.b16 %v1714, %v1713
        %v1736 = vpack.c.b16 %v1716, %v1715
        %v1737 = vpack.c.b16 %v1718, %v1717
        %v1738 = vpack.c.b16 %v1720, %v1719
        %v1739 = vpack.c.b16 %v1722, %v1721
        %v1740 = vpack.c.b16 %v1724, %v1723
        %1757 = vmatprep.subr.bf16.mxu0 0
        %1758 = vmatpush1.bf16.msra.mxu0 %v1732
        %1759 = vmatprep.subr.bf16.mxu0 0
        %1760 = vmatpush1.bf16.msra.mxu0 %v1731
        %1761 = vmatprep.subr.bf16.mxu0 0
        %1762 = vmatpush1.bf16.msra.mxu0 %v1730
        %1763 = vmatprep.subr.bf16.mxu0 0
        %1764 = vmatpush1.bf16.msra.mxu0 %v1729
        %1765 = vmatprep.subr.bf16.mxu0 0
        %1766 = vmatpush1.bf16.msra.mxu0 %v1728
        %1767 = vmatprep.subr.bf16.mxu0 0
        %1768 = vmatpush1.bf16.msra.mxu0 %v1727
        %1769 = vmatprep.subr.bf16.mxu0 0
        %1770 = vmatpush1.bf16.msra.mxu0 %v1726
        %1771 = vmatprep.subr.bf16.mxu0 0
        %1772 = vmatpush1.bf16.msra.mxu0 %v1725
        %1773 = vmatprep.subr.bf16.mxu0 0
        %1774 = vmatpush2.bf16.msra.mxu0 %v1740
        %1775 = vmatprep.subr.bf16.mxu0 0
        %1776 = vmatpush2.bf16.msra.mxu0 %v1739
        %1777 = vmatprep.subr.bf16.mxu0 0
        %1778 = vmatpush2.bf16.msra.mxu0 %v1738
        %1779 = vmatprep.subr.bf16.mxu0 0
        %1780 = vmatpush2.bf16.msra.mxu0 %v1737
        %1781 = vmatprep.subr.bf16.mxu0 0
        %1782 = vmatpush2.bf16.msra.mxu0 %v1736
        %1783 = vmatprep.subr.bf16.mxu0 0
        %1784 = vmatpush2.bf16.msra.mxu0 %v1735
        %1785 = vmatprep.subr.bf16.mxu0 0
        %1786 = vmatpush2.bf16.msra.mxu0 %v1734
        %1787 = vmatprep.subr.bf16.mxu0 0
        %1788 = vmatpush2.bf16.msra.mxu0 %v1733
        %1789 = vmatprep.mubr.bf16.mxu0 %v1621
        %1790 = vmatmul.mubr.bf16.gmra.mxu0 %v1620
        %v1791 = vpop.f32.mrf.mxu0
        %v1792 = vadd.f32 %v1659, %v1791
        %v1793 = vpop.f32.mrf.mxu0
        %v1794 = vpop.f32.mrf.mxu0
        %v1795 = vpop.f32.mrf.mxu0
        %1796 = vdwg.mxu0
        %v1797 = vadd.f32 %v1426, %v1792
        %1798 = vst [vmem:[#allocation2] sm:$0xff] %v1797
        %p1799 = scmp.lt.s32.totalorder %s57, 1
        %s1800 = scalar_select %p1799, %s57, 1
        %s1801 = smul.addr %s1800, 8
        %s1802 = scalar_lea.vmem %s15, %s1801
        // Predicated region
        $region133: #{prompt_encoder_forward.2} parent=75 // pred_check
          %p1803 = pneg %p442
        $region134: #{prompt_encoder_forward.2} parent=75 // pred_check_branch
          %1805 = sbr.rel (%p1803) target = $region136
        $region135: #{prompt_encoder_forward.2} parent=75 // pred_region
          _
        $region136: #{prompt_encoder_forward.2} parent=75 // pred_fallthru
          _
      $region76: #{prompt_encoder_forward.2} parent=5 // pred_fallthru
        _
      %p1806 = scmp.le.s32.totalorder 2, %s48
      // Predicated region
      $region137: #{prompt_encoder_forward.2} parent=5 // pred_check
        %p1807 = pneg %p1806
      $region138: #{prompt_encoder_forward.2} parent=5 // pred_check_branch
        %1809 = sbr.rel (%p1807) target = $region140
      $region139: #{prompt_encoder_forward.2} parent=5 // pred_region
        %s1810 = ssub.s32 %s48, 2
        // Predicated region
        $region141: #{prompt_encoder_forward.2} parent=139 // pred_check
          %p1811 = pneg %p448
        $region142: #{prompt_encoder_forward.2} parent=139 // pred_check_branch
          %1813 = sbr.rel (%p1811) target = $region144
        $region143: #{prompt_encoder_forward.2} parent=139 // pred_region
          %p1814 = scmp.lt.s32.totalorder %s59, 1
          %s1815 = scalar_select %p1814, %s59, 1
          %s1816 = smul.addr %s1815, 8
          %s1817 = scalar_lea.vmem %s15, %s1816
        $region144: #{prompt_encoder_forward.2} parent=139 // pred_fallthru
          _
      $region140: #{prompt_encoder_forward.2} parent=5 // pred_fallthru
        _
    $region6: #{prompt_encoder_forward.2} parent=1 // loop_footer
      %s52 = sadd.s32 1, %s48
    $region7: #{prompt_encoder_forward.2} parent=1 // loop_footer_branch
      %47 = sbr.rel target = $region3
    $region8: #{prompt_encoder_forward.2} parent=1 // loop_exit
      _
    %1818 = vsyncpa [#allocation6], 1
    %s1819 = scalar_lea.sflag [#allocation6], 1
    %1820 = vsyncpa %s1819, 1
    %1821 = vsyncpa [#allocation8], 1
    %s1822 = scalar_lea.sflag [#allocation8], 1
    %1823 = vsyncpa %s1822, 1
    %1824 = vsyncpa [#allocation11], 1
    %s1825 = scalar_lea.sflag [#allocation11], 1
    %1826 = vsyncpa %s1825, 1
    %1827 = vsyncpa [#allocation14], 1
    %s1828 = scalar_lea.sflag [#allocation14], 1
    %1829 = vsyncpa %s1828, 1
    %1830 = vsyncpa [#allocation17], 1
    %s1831 = scalar_lea.sflag [#allocation17], 1
    %1832 = vsyncpa %s1831, 1
    %1833 = vsyncpa [#allocation20], 1
    %s1834 = scalar_lea.sflag [#allocation20], 1
    %1835 = vsyncpa %s1834, 1
    %1836 = vsyncpa [#allocation23], 1
    %s1837 = scalar_lea.sflag [#allocation23], 1
    %1838 = vsyncpa %s1837, 1

// kernel: prompt_encoder_forward.3
$region0: #{prompt_encoder_forward.3}
  #allocation0 [shape = 'u32[]', space=smem, size = 0x4, offset = 0x4, fixed_abs, tag = 'smem constant byte address 0x4 - core index']
  #allocation1 [shape = 'u32[144,128]{1,0:T(1,128)}', space=vmem, size = 0x12000, scoped, tag = 'internal scratch']
  #allocation2 [shape = 'f32[8,256]{1,0:T(8,128)}', space=vmem, size = 0x2000, scoped, tag = 'scratch operand']
  #allocation3 [shape = 's32[1]{0}', space=sflag, size = 0x4, scoped, tag = 'scoped memory for prompt_encoder_forward.3']
  #allocation4 [shape = 'u8[512]{0}', space=smem, size = 0x200, scoped, tag = 'prefetched SMEM operand 0']
  %s0 = inlined_call_operand.vmem [shape: s32[2], index: 0, kind: input, shape index: {}]
  %s1 = inlined_call_operand.vmem [shape: f32[2,8,256], index: 1, kind: input, shape index: {}]
  %s2 = inlined_call_operand.vmem [shape: f32[8,8], index: 2, kind: input, shape index: {}]
  %s3 = inlined_call_operand.hbm [shape: f32[3,1,256], index: 3, kind: input, shape index: {}]
  %s4 = inlined_call_operand.hbm [shape: f32[3,1,256], index: 4, kind: input, shape index: {}]
  %s5 = inlined_call_operand.hbm [shape: bf16[3,2,256,384], index: 5, kind: input, shape index: {}]
  %s6 = inlined_call_operand.hbm [shape: f32[3,2,1,384], index: 6, kind: input, shape index: {}]
  %s7 = inlined_call_operand.hbm [shape: bf16[3,2,128,256], index: 7, kind: input, shape index: {}]
  %s8 = inlined_call_operand.hbm [shape: f32[3,1,256], index: 8, kind: input, shape index: {}]
  %s9 = inlined_call_operand.hbm [shape: f32[3,1,256], index: 9, kind: input, shape index: {}]
  %s10 = inlined_call_operand.hbm [shape: f32[3,1,256], index: 10, kind: input, shape index: {}]
  %s11 = inlined_call_operand.vmem [shape: bf16[3,256,512], index: 11, kind: input, shape index: {}]
  %s12 = inlined_call_operand.hbm [shape: f32[3,1,512], index: 12, kind: input, shape index: {}]
  %s13 = inlined_call_operand.hbm [shape: bf16[3,512,256], index: 13, kind: input, shape index: {}]
  %s14 = inlined_call_operand.hbm [shape: f32[3,1,256], index: 14, kind: input, shape index: {}]
  %s15 = inlined_call_operand.hbm [shape: f32[1,256], index: 15, kind: input, shape index: {}]
  %s16 = inlined_call_operand.hbm [shape: f32[1,256], index: 16, kind: input, shape index: {}]
  %s17 = inlined_call_operand.vmem [shape: bf16[256,128], index: 17, kind: input, shape index: {}]
  %s18 = inlined_call_operand.vmem [shape: f32[2,8,256], index: 18, kind: output, shape index: {0}]
  %s19 = inlined_call_operand.vmem [shape: f32[2,1,128], index: 19, kind: output, shape index: {1}]
  %20 = xla_tuple %s18, %s19
  %s21 = sld [smem:[#allocation0]]
  $region173: #{prompt_encoder_forward.3} parent=0
    _
  %s23 = ssub.s32 1, %s21
  %s24 = scalar_select 0, %s23, %s21
  %s25 = sshll.u32 %s0, 4
  %s26 = int_to_ptr.vmem [resolvable:$true] %s25
  %28 = dma.vmem_to_smem %s26, 16, [#allocation4], [#allocation3]
  %29 = dma.done [#allocation3], 16
  %30 = sfence
  $region1: #{prompt_encoder_forward.3} parent=0
    #allocation5 [shape = 'u8[2048]{0}', space=vmem, size = 0x800, scoped, tag = 'input window, operand 3']
    #allocation6 [shape = 's32[2]{0}', space=sflag, size = 0x8, scoped, tag = 'scoped memory for prompt_encoder_forward.3']
    #allocation7 [shape = 'u8[2048]{0}', space=vmem, size = 0x800, scoped, tag = 'input window, operand 4']
    #allocation8 [shape = 's32[2]{0}', space=sflag, size = 0x8, scoped, tag = 'scoped memory for prompt_encoder_forward.3']
    #allocation9 [shape = 'u8[786432]{0}', space=vmem, size = 0xc0000, scoped, tag = 'input window, operand 5']
    #allocation10 [shape = 'u8[6144]{0}', space=vmem, size = 0x1800, scoped, tag = 'input window, operand 6']
    #allocation11 [shape = 's32[2]{0}', space=sflag, size = 0x8, scoped, tag = 'scoped memory for prompt_encoder_forward.3']
    #allocation12 [shape = 'u8[262144]{0}', space=vmem, size = 0x40000, scoped, tag = 'input window, operand 7']
    #allocation13 [shape = 'u8[2048]{0}', space=vmem, size = 0x800, scoped, tag = 'input window, operand 8']
    #allocation14 [shape = 's32[2]{0}', space=sflag, size = 0x8, scoped, tag = 'scoped memory for prompt_encoder_forward.3']
    #allocation15 [shape = 'u8[2048]{0}', space=vmem, size = 0x800, scoped, tag = 'input window, operand 9']
    #allocation16 [shape = 'u8[2048]{0}', space=vmem, size = 0x800, scoped, tag = 'input window, operand 10']
    #allocation17 [shape = 's32[2]{0}', space=sflag, size = 0x8, scoped, tag = 'scoped memory for prompt_encoder_forward.3']
    #allocation18 [shape = 'u8[4096]{0}', space=vmem, size = 0x1000, scoped, tag = 'input window, operand 12']
    #allocation19 [shape = 'u8[524288]{0}', space=vmem, size = 0x80000, scoped, tag = 'input window, operand 13']
    #allocation20 [shape = 's32[2]{0}', space=sflag, size = 0x8, scoped, tag = 'scoped memory for prompt_encoder_forward.3']
    #allocation21 [shape = 'u8[2048]{0}', space=vmem, size = 0x800, scoped, tag = 'input window, operand 14']
    #allocation22 [shape = 'u8[1024]{0}', space=vmem, size = 0x400, scoped, tag = 'input window, operand 15, single buffered']
    #allocation23 [shape = 's32[1]{0}', space=sflag, size = 0x4, scoped, tag = 'scoped memory for prompt_encoder_forward.3']
    #allocation24 [shape = 'u8[1024]{0}', space=vmem, size = 0x400, scoped, tag = 'input window, operand 16, single buffered']
    %31 = vsyncpa [#allocation6], 0
    %s32 = scalar_lea.sflag [#allocation6], 1
    %33 = vsyncpa %s32, 0
    %34 = vsyncpa [#allocation8], 0
    %s35 = scalar_lea.sflag [#allocation8], 1
    %36 = vsyncpa %s35, 0
    %37 = vsyncpa [#allocation11], 0
    %s38 = scalar_lea.sflag [#allocation11], 1
    %39 = vsyncpa %s38, 0
    %40 = vsyncpa [#allocation14], 0
    %s41 = scalar_lea.sflag [#allocation14], 1
    %42 = vsyncpa %s41, 0
    %43 = vsyncpa [#allocation17], 0
    %s44 = scalar_lea.sflag [#allocation17], 1
    %45 = vsyncpa %s44, 0
    %46 = vsyncpa [#allocation20], 0
    %s47 = scalar_lea.sflag [#allocation20], 1
    %48 = vsyncpa %s47, 0
    %49 = vsyncpa [#allocation23], 0
    loop: start=0, step=1, limit=8
    $region2: #{prompt_encoder_forward.3} parent=1 // loop_pre_header
      _
    $region3: #{prompt_encoder_forward.3} parent=1 // loop_header
      %s51 = sphi 0, %s55
      %p52 = scmp.ge.s32.totalorder %s51, 8
      %s58 = sphi 0, %s70
      %s59 = sphi 0, %s66
      %s60 = sphi 0, %s58
      %s61 = sphi 0, %s59
      %s62 = sphi 0, %s60
      %s63 = sphi 0, %s61
      %s73 = sphi 0, %s75
      %s76 = sphi 0, %s73
      %s77 = sphi 0, %s76
      %s93 = sphi 0, %s77
      %s97 = sphi 0, %s97
      %s99 = sphi 0, %s97
      %s100 = sphi 0, %s99
      %s114 = sphi 0, %s100
      %s120 = sphi 0, %s122
      %s123 = sphi 0, %s120
      %s124 = sphi 0, %s123
      %s140 = sphi 0, %s124
      %s146 = sphi 0, %s148
      %s149 = sphi 0, %s146
      %s150 = sphi 0, %s149
      %s166 = sphi 0, %s150
      %s172 = sphi 0, %s174
      %s175 = sphi 0, %s172
      %s176 = sphi 0, %s175
      %s192 = sphi 0, %s176
      %s198 = sphi 0, %s200
      %s201 = sphi 0, %s198
      %s202 = sphi 0, %s201
      %s218 = sphi 0, %s202
      %s224 = sphi 0, %s226
      %s227 = sphi 0, %s224
      %s228 = sphi 0, %s227
      %s244 = sphi 0, %s228
      %s250 = sphi 0, %s252
      %s253 = sphi 0, %s250
      %s254 = sphi 0, %s253
      %s270 = sphi 0, %s254
      %s276 = sphi 0, %s278
      %s279 = sphi 0, %s276
      %s280 = sphi 0, %s279
      %s296 = sphi 0, %s280
      %s302 = sphi 0, %s304
      %s305 = sphi 0, %s302
      %s306 = sphi 0, %s305
      %s322 = sphi 0, %s306
      %s328 = sphi 0, %s330
      %s331 = sphi 0, %s328
      %s332 = sphi 0, %s331
      %s348 = sphi 0, %s332
      %s354 = sphi 0, %s356
      %s357 = sphi 0, %s354
      %s358 = sphi 0, %s357
      %s374 = sphi 0, %s358
      %s380 = sphi 0, %s382
      %s383 = sphi 0, %s380
      %s384 = sphi 0, %s383
      %s400 = sphi 0, %s384
      %s406 = sphi 0, %s408
      %s409 = sphi 0, %s406
      %s410 = sphi 0, %s409
      %s426 = sphi 0, %s410
      %s430 = sphi 0, %s430
      %s432 = sphi 0, %s430
      %s433 = sphi 0, %s432
      %s447 = sphi 0, %s433
      %s451 = sphi 0, %s451
      %s453 = sphi 0, %s451
      %s454 = sphi 0, %s453
      %s468 = sphi 0, %s454
      %s472 = sphi 0, %s472
      %s474 = sphi 0, %s472
      %s475 = sphi 0, %s474
      %s489 = sphi 0, %s475
      %s495 = sphi 0, %s497
      %s498 = sphi 0, %s495
      %s499 = sphi 0, %s498
      %s515 = sphi 0, %s499
      %s521 = sphi 0, %s523
      %s524 = sphi 0, %s521
      %s525 = sphi 0, %s524
      %s541 = sphi 0, %s525
    $region4: #{prompt_encoder_forward.3} parent=1 // loop_header_branch
      %54 = sbr.rel (%p52) target = $region8
    $region5: #{prompt_encoder_forward.3} parent=1 // loop_body
      %s56 = ssub.s32 %s51, 1
      %s57 = ssub.s32 %s51, 2
      %s64 = sadd.s32 1, %s59
      %p65 = scmp.ge.s32.totalorder %s64, 3
      %s66 = scalar_select %p65, 0, %s64
      %s67 = sadd.s32 1, %s58
      %s68 = scalar_select %p65, %s67, %s58
      %p69 = scmp.ge.s32.totalorder %s68, 2
      %s70 = scalar_select %p69, 0, %s68
      %s71 = ssub.s32 %s58, %s70
      %p72 = scmp.eq.s32.totalorder %s71, 0
      %s74 = sadd.s32 %s73, 1
      %s75 = scalar_select %p72, %s73, %s74
      %p78 = pneg %p72
      %p79 = scmp.eq.s32.totalorder %s51, 5
      %p80 = por %p78, %p79
      %p81 = scmp.ne.s32.totalorder %s73, %s76
      %p82 = scmp.eq.s32.totalorder %s51, 0
      %p83 = por %p81, %p82
      %p84 = scmp.ne.s32.totalorder %s73, %s76
      %p85 = scmp.eq.s32.totalorder %s56, 5
      %p86 = por %p84, %p85
      %p87 = scmp.ne.s32.totalorder %s76, %s77
      %p88 = scmp.eq.s32.totalorder %s56, 0
      %p89 = por %p87, %p88
      %p90 = scmp.ne.s32.totalorder %s76, %s77
      %p91 = scmp.eq.s32.totalorder %s57, 5
      %p92 = por %p90, %p91
      %p94 = scmp.ne.s32.totalorder %s77, %s93
      %p95 = scmp.eq.s32.totalorder %s57, 0
      %p96 = por %p94, %p95
      %s98 = sadd.s32 %s97, 1
      %p101 = scmp.eq.s32.totalorder %s51, 5
      %p102 = scmp.ne.s32.totalorder %s97, %s99
      %p103 = scmp.eq.s32.totalorder %s51, 0
      %p104 = por %p102, %p103
      %p105 = scmp.ne.s32.totalorder %s97, %s99
      %p106 = scmp.eq.s32.totalorder %s56, 5
      %p107 = por %p105, %p106
      %p108 = scmp.ne.s32.totalorder %s99, %s100
      %p109 = scmp.eq.s32.totalorder %s56, 0
      %p110 = por %p108, %p109
      %p111 = scmp.ne.s32.totalorder %s99, %s100
      %p112 = scmp.eq.s32.totalorder %s57, 5
      %p113 = por %p111, %p112
      %p115 = scmp.ne.s32.totalorder %s100, %s114
      %p116 = scmp.eq.s32.totalorder %s57, 0
      %p117 = por %p115, %p116
      %s118 = ssub.s32 %s59, %s66
      %p119 = scmp.eq.s32.totalorder %s118, 0
      %s121 = sadd.s32 %s120, 1
      %s122 = scalar_select %p119, %s120, %s121
      %p125 = pneg %p119
      %p126 = scmp.eq.s32.totalorder %s51, 5
      %p127 = por %p125, %p126
      %p128 = scmp.ne.s32.totalorder %s120, %s123
      %p129 = scmp.eq.s32.totalorder %s51, 0
      %p130 = por %p128, %p129
      %p131 = scmp.ne.s32.totalorder %s120, %s123
      %p132 = scmp.eq.s32.totalorder %s56, 5
      %p133 = por %p131, %p132
      %p134 = scmp.ne.s32.totalorder %s123, %s124
      %p135 = scmp.eq.s32.totalorder %s56, 0
      %p136 = por %p134, %p135
      %p137 = scmp.ne.s32.totalorder %s123, %s124
      %p138 = scmp.eq.s32.totalorder %s57, 5
      %p139 = por %p137, %p138
      %p141 = scmp.ne.s32.totalorder %s124, %s140
      %p142 = scmp.eq.s32.totalorder %s57, 0
      %p143 = por %p141, %p142
      %s144 = ssub.s32 %s59, %s66
      %p145 = scmp.eq.s32.totalorder %s144, 0
      %s147 = sadd.s32 %s146, 1
      %s148 = scalar_select %p145, %s146, %s147
      %p151 = pneg %p145
      %p152 = scmp.eq.s32.totalorder %s51, 5
      %p153 = por %p151, %p152
      %p154 = scmp.ne.s32.totalorder %s146, %s149
      %p155 = scmp.eq.s32.totalorder %s51, 0
      %p156 = por %p154, %p155
      %p157 = scmp.ne.s32.totalorder %s146, %s149
      %p158 = scmp.eq.s32.totalorder %s56, 5
      %p159 = por %p157, %p158
      %p160 = scmp.ne.s32.totalorder %s149, %s150
      %p161 = scmp.eq.s32.totalorder %s56, 0
      %p162 = por %p160, %p161
      %p163 = scmp.ne.s32.totalorder %s149, %s150
      %p164 = scmp.eq.s32.totalorder %s57, 5
      %p165 = por %p163, %p164
      %p167 = scmp.ne.s32.totalorder %s150, %s166
      %p168 = scmp.eq.s32.totalorder %s57, 0
      %p169 = por %p167, %p168
      %s170 = ssub.s32 %s59, %s66
      %p171 = scmp.eq.s32.totalorder %s170, 0
      %s173 = sadd.s32 %s172, 1
      %s174 = scalar_select %p171, %s172, %s173
      %p177 = pneg %p171
      %p178 = scmp.eq.s32.totalorder %s51, 5
      %p179 = por %p177, %p178
      %p180 = scmp.ne.s32.totalorder %s172, %s175
      %p181 = scmp.eq.s32.totalorder %s51, 0
      %p182 = por %p180, %p181
      %p183 = scmp.ne.s32.totalorder %s172, %s175
      %p184 = scmp.eq.s32.totalorder %s56, 5
      %p185 = por %p183, %p184
      %p186 = scmp.ne.s32.totalorder %s175, %s176
      %p187 = scmp.eq.s32.totalorder %s56, 0
      %p188 = por %p186, %p187
      %p189 = scmp.ne.s32.totalorder %s175, %s176
      %p190 = scmp.eq.s32.totalorder %s57, 5
      %p191 = por %p189, %p190
      %p193 = scmp.ne.s32.totalorder %s176, %s192
      %p194 = scmp.eq.s32.totalorder %s57, 0
      %p195 = por %p193, %p194
      %s196 = ssub.s32 %s59, %s66
      %p197 = scmp.eq.s32.totalorder %s196, 0
      %s199 = sadd.s32 %s198, 1
      %s200 = scalar_select %p197, %s198, %s199
      %p203 = pneg %p197
      %p204 = scmp.eq.s32.totalorder %s51, 5
      %p205 = por %p203, %p204
      %p206 = scmp.ne.s32.totalorder %s198, %s201
      %p207 = scmp.eq.s32.totalorder %s51, 0
      %p208 = por %p206, %p207
      %p209 = scmp.ne.s32.totalorder %s198, %s201
      %p210 = scmp.eq.s32.totalorder %s56, 5
      %p211 = por %p209, %p210
      %p212 = scmp.ne.s32.totalorder %s201, %s202
      %p213 = scmp.eq.s32.totalorder %s56, 0
      %p214 = por %p212, %p213
      %p215 = scmp.ne.s32.totalorder %s201, %s202
      %p216 = scmp.eq.s32.totalorder %s57, 5
      %p217 = por %p215, %p216
      %p219 = scmp.ne.s32.totalorder %s202, %s218
      %p220 = scmp.eq.s32.totalorder %s57, 0
      %p221 = por %p219, %p220
      %s222 = ssub.s32 %s59, %s66
      %p223 = scmp.eq.s32.totalorder %s222, 0
      %s225 = sadd.s32 %s224, 1
      %s226 = scalar_select %p223, %s224, %s225
      %p229 = pneg %p223
      %p230 = scmp.eq.s32.totalorder %s51, 5
      %p231 = por %p229, %p230
      %p232 = scmp.ne.s32.totalorder %s224, %s227
      %p233 = scmp.eq.s32.totalorder %s51, 0
      %p234 = por %p232, %p233
      %p235 = scmp.ne.s32.totalorder %s224, %s227
      %p236 = scmp.eq.s32.totalorder %s56, 5
      %p237 = por %p235, %p236
      %p238 = scmp.ne.s32.totalorder %s227, %s228
      %p239 = scmp.eq.s32.totalorder %s56, 0
      %p240 = por %p238, %p239
      %p241 = scmp.ne.s32.totalorder %s227, %s228
      %p242 = scmp.eq.s32.totalorder %s57, 5
      %p243 = por %p241, %p242
      %p245 = scmp.ne.s32.totalorder %s228, %s244
      %p246 = scmp.eq.s32.totalorder %s57, 0
      %p247 = por %p245, %p246
      %s248 = ssub.s32 %s59, %s66
      %p249 = scmp.eq.s32.totalorder %s248, 0
      %s251 = sadd.s32 %s250, 1
      %s252 = scalar_select %p249, %s250, %s251
      %p255 = pneg %p249
      %p256 = scmp.eq.s32.totalorder %s51, 5
      %p257 = por %p255, %p256
      %p258 = scmp.ne.s32.totalorder %s250, %s253
      %p259 = scmp.eq.s32.totalorder %s51, 0
      %p260 = por %p258, %p259
      %p261 = scmp.ne.s32.totalorder %s250, %s253
      %p262 = scmp.eq.s32.totalorder %s56, 5
      %p263 = por %p261, %p262
      %p264 = scmp.ne.s32.totalorder %s253, %s254
      %p265 = scmp.eq.s32.totalorder %s56, 0
      %p266 = por %p264, %p265
      %p267 = scmp.ne.s32.totalorder %s253, %s254
      %p268 = scmp.eq.s32.totalorder %s57, 5
      %p269 = por %p267, %p268
      %p271 = scmp.ne.s32.totalorder %s254, %s270
      %p272 = scmp.eq.s32.totalorder %s57, 0
      %p273 = por %p271, %p272
      %s274 = ssub.s32 %s59, %s66
      %p275 = scmp.eq.s32.totalorder %s274, 0
      %s277 = sadd.s32 %s276, 1
      %s278 = scalar_select %p275, %s276, %s277
      %p281 = pneg %p275
      %p282 = scmp.eq.s32.totalorder %s51, 5
      %p283 = por %p281, %p282
      %p284 = scmp.ne.s32.totalorder %s276, %s279
      %p285 = scmp.eq.s32.totalorder %s51, 0
      %p286 = por %p284, %p285
      %p287 = scmp.ne.s32.totalorder %s276, %s279
      %p288 = scmp.eq.s32.totalorder %s56, 5
      %p289 = por %p287, %p288
      %p290 = scmp.ne.s32.totalorder %s279, %s280
      %p291 = scmp.eq.s32.totalorder %s56, 0
      %p292 = por %p290, %p291
      %p293 = scmp.ne.s32.totalorder %s279, %s280
      %p294 = scmp.eq.s32.totalorder %s57, 5
      %p295 = por %p293, %p294
      %p297 = scmp.ne.s32.totalorder %s280, %s296
      %p298 = scmp.eq.s32.totalorder %s57, 0
      %p299 = por %p297, %p298
      %s300 = ssub.s32 %s59, %s66
      %p301 = scmp.eq.s32.totalorder %s300, 0
      %s303 = sadd.s32 %s302, 1
      %s304 = scalar_select %p301, %s302, %s303
      %p307 = pneg %p301
      %p308 = scmp.eq.s32.totalorder %s51, 5
      %p309 = por %p307, %p308
      %p310 = scmp.ne.s32.totalorder %s302, %s305
      %p311 = scmp.eq.s32.totalorder %s51, 0
      %p312 = por %p310, %p311
      %p313 = scmp.ne.s32.totalorder %s302, %s305
      %p314 = scmp.eq.s32.totalorder %s56, 5
      %p315 = por %p313, %p314
      %p316 = scmp.ne.s32.totalorder %s305, %s306
      %p317 = scmp.eq.s32.totalorder %s56, 0
      %p318 = por %p316, %p317
      %p319 = scmp.ne.s32.totalorder %s305, %s306
      %p320 = scmp.eq.s32.totalorder %s57, 5
      %p321 = por %p319, %p320
      %p323 = scmp.ne.s32.totalorder %s306, %s322
      %p324 = scmp.eq.s32.totalorder %s57, 0
      %p325 = por %p323, %p324
      %s326 = ssub.s32 %s59, %s66
      %p327 = scmp.eq.s32.totalorder %s326, 0
      %s329 = sadd.s32 %s328, 1
      %s330 = scalar_select %p327, %s328, %s329
      %p333 = pneg %p327
      %p334 = scmp.eq.s32.totalorder %s51, 5
      %p335 = por %p333, %p334
      %p336 = scmp.ne.s32.totalorder %s328, %s331
      %p337 = scmp.eq.s32.totalorder %s51, 0
      %p338 = por %p336, %p337
      %p339 = scmp.ne.s32.totalorder %s328, %s331
      %p340 = scmp.eq.s32.totalorder %s56, 5
      %p341 = por %p339, %p340
      %p342 = scmp.ne.s32.totalorder %s331, %s332
      %p343 = scmp.eq.s32.totalorder %s56, 0
      %p344 = por %p342, %p343
      %p345 = scmp.ne.s32.totalorder %s331, %s332
      %p346 = scmp.eq.s32.totalorder %s57, 5
      %p347 = por %p345, %p346
      %p349 = scmp.ne.s32.totalorder %s332, %s348
      %p350 = scmp.eq.s32.totalorder %s57, 0
      %p351 = por %p349, %p350
      %s352 = ssub.s32 %s59, %s66
      %p353 = scmp.eq.s32.totalorder %s352, 0
      %s355 = sadd.s32 %s354, 1
      %s356 = scalar_select %p353, %s354, %s355
      %p359 = pneg %p353
      %p360 = scmp.eq.s32.totalorder %s51, 5
      %p361 = por %p359, %p360
      %p362 = scmp.ne.s32.totalorder %s354, %s357
      %p363 = scmp.eq.s32.totalorder %s51, 0
      %p364 = por %p362, %p363
      %p365 = scmp.ne.s32.totalorder %s354, %s357
      %p366 = scmp.eq.s32.totalorder %s56, 5
      %p367 = por %p365, %p366
      %p368 = scmp.ne.s32.totalorder %s357, %s358
      %p369 = scmp.eq.s32.totalorder %s56, 0
      %p370 = por %p368, %p369
      %p371 = scmp.ne.s32.totalorder %s357, %s358
      %p372 = scmp.eq.s32.totalorder %s57, 5
      %p373 = por %p371, %p372
      %p375 = scmp.ne.s32.totalorder %s358, %s374
      %p376 = scmp.eq.s32.totalorder %s57, 0
      %p377 = por %p375, %p376
      %s378 = ssub.s32 %s59, %s66
      %p379 = scmp.eq.s32.totalorder %s378, 0
      %s381 = sadd.s32 %s380, 1
      %s382 = scalar_select %p379, %s380, %s381
      %p385 = pneg %p379
      %p386 = scmp.eq.s32.totalorder %s51, 5
      %p387 = por %p385, %p386
      %p388 = scmp.ne.s32.totalorder %s380, %s383
      %p389 = scmp.eq.s32.totalorder %s51, 0
      %p390 = por %p388, %p389
      %p391 = scmp.ne.s32.totalorder %s380, %s383
      %p392 = scmp.eq.s32.totalorder %s56, 5
      %p393 = por %p391, %p392
      %p394 = scmp.ne.s32.totalorder %s383, %s384
      %p395 = scmp.eq.s32.totalorder %s56, 0
      %p396 = por %p394, %p395
      %p397 = scmp.ne.s32.totalorder %s383, %s384
      %p398 = scmp.eq.s32.totalorder %s57, 5
      %p399 = por %p397, %p398
      %p401 = scmp.ne.s32.totalorder %s384, %s400
      %p402 = scmp.eq.s32.totalorder %s57, 0
      %p403 = por %p401, %p402
      %s404 = ssub.s32 %s59, %s66
      %p405 = scmp.eq.s32.totalorder %s404, 0
      %s407 = sadd.s32 %s406, 1
      %s408 = scalar_select %p405, %s406, %s407
      %p411 = pneg %p405
      %p412 = scmp.eq.s32.totalorder %s51, 5
      %p413 = por %p411, %p412
      %p414 = scmp.ne.s32.totalorder %s406, %s409
      %p415 = scmp.eq.s32.totalorder %s51, 0
      %p416 = por %p414, %p415
      %p417 = scmp.ne.s32.totalorder %s406, %s409
      %p418 = scmp.eq.s32.totalorder %s56, 5
      %p419 = por %p417, %p418
      %p420 = scmp.ne.s32.totalorder %s409, %s410
      %p421 = scmp.eq.s32.totalorder %s56, 0
      %p422 = por %p420, %p421
      %p423 = scmp.ne.s32.totalorder %s409, %s410
      %p424 = scmp.eq.s32.totalorder %s57, 5
      %p425 = por %p423, %p424
      %p427 = scmp.ne.s32.totalorder %s410, %s426
      %p428 = scmp.eq.s32.totalorder %s57, 0
      %p429 = por %p427, %p428
      %s431 = sadd.s32 %s430, 1
      %p434 = scmp.eq.s32.totalorder %s51, 5
      %p435 = scmp.ne.s32.totalorder %s430, %s432
      %p436 = scmp.eq.s32.totalorder %s51, 0
      %p437 = por %p435, %p436
      %p438 = scmp.ne.s32.totalorder %s430, %s432
      %p439 = scmp.eq.s32.totalorder %s56, 5
      %p440 = por %p438, %p439
      %p441 = scmp.ne.s32.totalorder %s432, %s433
      %p442 = scmp.eq.s32.totalorder %s56, 0
      %p443 = por %p441, %p442
      %p444 = scmp.ne.s32.totalorder %s432, %s433
      %p445 = scmp.eq.s32.totalorder %s57, 5
      %p446 = por %p444, %p445
      %p448 = scmp.ne.s32.totalorder %s433, %s447
      %p449 = scmp.eq.s32.totalorder %s57, 0
      %p450 = por %p448, %p449
      %s452 = sadd.s32 %s451, 1
      %p455 = scmp.eq.s32.totalorder %s51, 5
      %p456 = scmp.ne.s32.totalorder %s451, %s453
      %p457 = scmp.eq.s32.totalorder %s51, 0
      %p458 = por %p456, %p457
      %p459 = scmp.ne.s32.totalorder %s451, %s453
      %p460 = scmp.eq.s32.totalorder %s56, 5
      %p461 = por %p459, %p460
      %p462 = scmp.ne.s32.totalorder %s453, %s454
      %p463 = scmp.eq.s32.totalorder %s56, 0
      %p464 = por %p462, %p463
      %p465 = scmp.ne.s32.totalorder %s453, %s454
      %p466 = scmp.eq.s32.totalorder %s57, 5
      %p467 = por %p465, %p466
      %p469 = scmp.ne.s32.totalorder %s454, %s468
      %p470 = scmp.eq.s32.totalorder %s57, 0
      %p471 = por %p469, %p470
      %s473 = sadd.s32 %s472, 1
      %p476 = scmp.eq.s32.totalorder %s51, 5
      %p477 = scmp.ne.s32.totalorder %s472, %s474
      %p478 = scmp.eq.s32.totalorder %s51, 0
      %p479 = por %p477, %p478
      %p480 = scmp.ne.s32.totalorder %s472, %s474
      %p481 = scmp.eq.s32.totalorder %s56, 5
      %p482 = por %p480, %p481
      %p483 = scmp.ne.s32.totalorder %s474, %s475
      %p484 = scmp.eq.s32.totalorder %s56, 0
      %p485 = por %p483, %p484
      %p486 = scmp.ne.s32.totalorder %s474, %s475
      %p487 = scmp.eq.s32.totalorder %s57, 5
      %p488 = por %p486, %p487
      %p490 = scmp.ne.s32.totalorder %s475, %s489
      %p491 = scmp.eq.s32.totalorder %s57, 0
      %p492 = por %p490, %p491
      %s493 = ssub.s32 %s58, %s70
      %p494 = scmp.eq.s32.totalorder %s493, 0
      %s496 = sadd.s32 %s495, 1
      %s497 = scalar_select %p494, %s495, %s496
      %p500 = pneg %p494
      %p501 = scmp.eq.s32.totalorder %s51, 5
      %p502 = por %p500, %p501
      %p503 = scmp.ne.s32.totalorder %s495, %s498
      %p504 = scmp.eq.s32.totalorder %s51, 0
      %p505 = por %p503, %p504
      %p506 = scmp.ne.s32.totalorder %s495, %s498
      %p507 = scmp.eq.s32.totalorder %s56, 5
      %p508 = por %p506, %p507
      %p509 = scmp.ne.s32.totalorder %s498, %s499
      %p510 = scmp.eq.s32.totalorder %s56, 0
      %p511 = por %p509, %p510
      %p512 = scmp.ne.s32.totalorder %s498, %s499
      %p513 = scmp.eq.s32.totalorder %s57, 5
      %p514 = por %p512, %p513
      %p516 = scmp.ne.s32.totalorder %s499, %s515
      %p517 = scmp.eq.s32.totalorder %s57, 0
      %p518 = por %p516, %p517
      %s519 = ssub.s32 %s58, %s70
      %p520 = scmp.eq.s32.totalorder %s519, 0
      %s522 = sadd.s32 %s521, 1
      %s523 = scalar_select %p520, %s521, %s522
      %p526 = pneg %p520
      %p527 = scmp.eq.s32.totalorder %s51, 5
      %p528 = por %p526, %p527
      %p529 = scmp.ne.s32.totalorder %s521, %s524
      %p530 = scmp.eq.s32.totalorder %s51, 0
      %p531 = por %p529, %p530
      %p532 = scmp.ne.s32.totalorder %s521, %s524
      %p533 = scmp.eq.s32.totalorder %s56, 5
      %p534 = por %p532, %p533
      %p535 = scmp.ne.s32.totalorder %s524, %s525
      %p536 = scmp.eq.s32.totalorder %s56, 0
      %p537 = por %p535, %p536
      %p538 = scmp.ne.s32.totalorder %s524, %s525
      %p539 = scmp.eq.s32.totalorder %s57, 5
      %p540 = por %p538, %p539
      %p542 = scmp.ne.s32.totalorder %s525, %s541
      %p543 = scmp.eq.s32.totalorder %s57, 0
      %p544 = por %p542, %p543
      %p545 = scmp.le.s32.totalorder 1, %s51
      %p546 = scmp.lt.s32.totalorder %s51, 7
      %p547 = pnand %p545, %p546
      %p548 = pneg %p547
      // Predicated region
      $region9: #{prompt_encoder_forward.3} parent=5 // pred_check
        _
      $region10: #{prompt_encoder_forward.3} parent=5 // pred_check_branch
        %550 = sbr.rel (%p547) target = $region12
      $region11: #{prompt_encoder_forward.3} parent=5 // pred_region
        %s551 = ssub.s32 %s51, 1
        // Predicated region
        $region13: #{prompt_encoder_forward.3} parent=11 // pred_check
          %p552 = pneg %p110
        $region14: #{prompt_encoder_forward.3} parent=11 // pred_check_branch
          %554 = sbr.rel (%p552) target = $region16
        $region15: #{prompt_encoder_forward.3} parent=11 // pred_region
          _
        $region16: #{prompt_encoder_forward.3} parent=11 // pred_fallthru
          _
        // Predicated region
        $region17: #{prompt_encoder_forward.3} parent=11 // pred_check
          %p555 = pneg %p443
        $region18: #{prompt_encoder_forward.3} parent=11 // pred_check_branch
          %557 = sbr.rel (%p555) target = $region20
        $region19: #{prompt_encoder_forward.3} parent=11 // pred_region
          %s559 = ssub.s32 32, 32
          %560 = vsyncadd [#allocation23], %s559
          %s562 = sshll.u32 [#allocation22], 4
          %s563 = int_to_ptr.vmem [resolvable:$true] %s562
          %565 = dma.hbm_to_vmem [thread:$0]  %s15, 32, %s563, [#allocation23]
        $region20: #{prompt_encoder_forward.3} parent=11 // pred_fallthru
          _
        // Predicated region
        $region21: #{prompt_encoder_forward.3} parent=11 // pred_check
          %p566 = pneg %p464
        $region22: #{prompt_encoder_forward.3} parent=11 // pred_check_branch
          %568 = sbr.rel (%p566) target = $region24
        $region23: #{prompt_encoder_forward.3} parent=11 // pred_region
          %s570 = ssub.s32 32, 32
          %571 = vsyncadd [#allocation23], %s570
          %s573 = sshll.u32 [#allocation24], 4
          %s574 = int_to_ptr.vmem [resolvable:$true] %s573
          %576 = dma.hbm_to_vmem [thread:$0]  %s16, 32, %s574, [#allocation23]
        $region24: #{prompt_encoder_forward.3} parent=11 // pred_fallthru
          _
        // Predicated region
        $region25: #{prompt_encoder_forward.3} parent=11 // pred_check
          %p577 = pneg %p485
        $region26: #{prompt_encoder_forward.3} parent=11 // pred_check_branch
          %579 = sbr.rel (%p577) target = $region28
        $region27: #{prompt_encoder_forward.3} parent=11 // pred_region
          _
        $region28: #{prompt_encoder_forward.3} parent=11 // pred_fallthru
          _
      $region12: #{prompt_encoder_forward.3} parent=5 // pred_fallthru
        _
      %p580 = scmp.lt.s32.totalorder %s51, 6
      // Predicated region
      $region29: #{prompt_encoder_forward.3} parent=5 // pred_check
        %p581 = pneg %p580
      $region30: #{prompt_encoder_forward.3} parent=5 // pred_check_branch
        %583 = sbr.rel (%p581) target = $region32
      $region31: #{prompt_encoder_forward.3} parent=5 // pred_region
        // Predicated region
        $region33: #{prompt_encoder_forward.3} parent=31 // pred_check
          %p584 = pneg %p83
        $region34: #{prompt_encoder_forward.3} parent=31 // pred_check_branch
          %586 = sbr.rel (%p584) target = $region36
        $region35: #{prompt_encoder_forward.3} parent=31 // pred_region
          %p587 = scmp.lt.s32.totalorder %s58, 1
          %s588 = scalar_select %p587, %s58, 1
          %s589 = smul.addr %s588, 2
          %s590 = smul.addr %s589, 8
          %s591 = scalar_lea.vmem %s1, %s590
        $region36: #{prompt_encoder_forward.3} parent=31 // pred_fallthru
          _
        // Predicated region
        $region37: #{prompt_encoder_forward.3} parent=31 // pred_check
          %p592 = pneg %p130
        $region38: #{prompt_encoder_forward.3} parent=31 // pred_check_branch
          %594 = sbr.rel (%p592) target = $region40
        $region39: #{prompt_encoder_forward.3} parent=31 // pred_region
          %s595 = sand.u32 %s120, 1
          %s596 = scalar_lea.sflag [#allocation6], %s595
          %s597 = sand.u32 %s120, 1
          %s598 = smul.addr %s597, 2
          %s599 = scalar_lea.vmem [#allocation5], %s598
          %s601 = ssub.s32 32, 32
          %602 = vsyncadd %s596, %s601
          %s603 = smul.addr %s59, 2
          %s604 = smul.addr %s603, 16
          %s605 = scalar_lea.hbm %s3, %s604
          %s607 = sshll.u32 %s599, 4
          %s608 = int_to_ptr.vmem [resolvable:$true] %s607
          %610 = dma.hbm_to_vmem [thread:$0]  %s605, 32, %s608, %s596
        $region40: #{prompt_encoder_forward.3} parent=31 // pred_fallthru
          _
        // Predicated region
        $region41: #{prompt_encoder_forward.3} parent=31 // pred_check
          %p611 = pneg %p156
        $region42: #{prompt_encoder_forward.3} parent=31 // pred_check_branch
          %613 = sbr.rel (%p611) target = $region44
        $region43: #{prompt_encoder_forward.3} parent=31 // pred_region
          %s614 = sand.u32 %s51, 1
          %s615 = scalar_lea.sflag [#allocation8], %s614
          %s616 = sand.u32 %s146, 1
          %s617 = smul.addr %s616, 2
          %s618 = scalar_lea.vmem [#allocation7], %s617
          %s620 = ssub.s32 32, 32
          %621 = vsyncadd %s615, %s620
          %s622 = smul.addr %s59, 2
          %s623 = smul.addr %s622, 16
          %s624 = scalar_lea.hbm %s4, %s623
          %s626 = sshll.u32 %s618, 4
          %s627 = int_to_ptr.vmem [resolvable:$true] %s626
          %629 = dma.hbm_to_vmem [thread:$0]  %s624, 32, %s627, %s615
        $region44: #{prompt_encoder_forward.3} parent=31 // pred_fallthru
          _
        // Predicated region
        $region45: #{prompt_encoder_forward.3} parent=31 // pred_check
          %p630 = pneg %p182
        $region46: #{prompt_encoder_forward.3} parent=31 // pred_check_branch
          %632 = sbr.rel (%p630) target = $region48
        $region47: #{prompt_encoder_forward.3} parent=31 // pred_region
          %s633 = sand.u32 %s51, 1
          %s634 = scalar_lea.sflag [#allocation8], %s633
          %s635 = sand.u32 %s172, 1
          %s636 = smul.addr %s635, 768
          %s637 = scalar_lea.vmem [#allocation9], %s636
          %s639 = ssub.s32 12288, 12288
          %640 = vsyncadd %s634, %s639
          %s641 = smul.addr %s59, 192
          %s642 = smul.addr %s641, 64
          %s643 = scalar_lea.hbm %s5, %s642
          %s644 = sshll.u32 %s637, 4
          %s645 = int_to_ptr.vmem [resolvable:$true] %s644
          %650 = dma.hbm_to_vmem [thread:$0]  %s643, 12288, %s645, %s634, 192, 192, 12
        $region48: #{prompt_encoder_forward.3} parent=31 // pred_fallthru
          _
        // Predicated region
        $region49: #{prompt_encoder_forward.3} parent=31 // pred_check
          %p651 = pneg %p208
        $region50: #{prompt_encoder_forward.3} parent=31 // pred_check_branch
          %653 = sbr.rel (%p651) target = $region52
        $region51: #{prompt_encoder_forward.3} parent=31 // pred_region
          %s654 = sand.u32 %s51, 1
          %s655 = scalar_lea.sflag [#allocation11], %s654
          %s656 = sand.u32 %s198, 1
          %s657 = smul.addr %s656, 6
          %s658 = scalar_lea.vmem [#allocation10], %s657
          %s660 = ssub.s32 96, 96
          %661 = vsyncadd %s655, %s660
          %s662 = smul.addr %s59, 6
          %s663 = smul.addr %s662, 16
          %s664 = scalar_lea.hbm %s6, %s663
          %s665 = sshll.u32 %s658, 4
          %s666 = int_to_ptr.vmem [resolvable:$true] %s665
          %671 = dma.hbm_to_vmem [thread:$0]  %s664, 96, %s666, %s655, 48, 48, 3
        $region52: #{prompt_encoder_forward.3} parent=31 // pred_fallthru
          _
        // Predicated region
        $region53: #{prompt_encoder_forward.3} parent=31 // pred_check
          %p672 = pneg %p234
        $region54: #{prompt_encoder_forward.3} parent=31 // pred_check_branch
          %674 = sbr.rel (%p672) target = $region56
        $region55: #{prompt_encoder_forward.3} parent=31 // pred_region
          %s675 = sand.u32 %s51, 1
          %s676 = scalar_lea.sflag [#allocation11], %s675
          %s677 = sand.u32 %s224, 1
          %s678 = smul.addr %s677, 256
          %s679 = scalar_lea.vmem [#allocation12], %s678
          %s681 = ssub.s32 4096, 4096
          %682 = vsyncadd %s676, %s681
          %s683 = smul.addr %s59, 64
          %s684 = smul.addr %s683, 64
          %s685 = scalar_lea.hbm %s7, %s684
          %s686 = sshll.u32 %s679, 4
          %s687 = int_to_ptr.vmem [resolvable:$true] %s686
          %692 = dma.hbm_to_vmem [thread:$0]  %s685, 4096, %s687, %s676, 128, 128, 8
        $region56: #{prompt_encoder_forward.3} parent=31 // pred_fallthru
          _
        // Predicated region
        $region57: #{prompt_encoder_forward.3} parent=31 // pred_check
          %p693 = pneg %p260
        $region58: #{prompt_encoder_forward.3} parent=31 // pred_check_branch
          %695 = sbr.rel (%p693) target = $region60
        $region59: #{prompt_encoder_forward.3} parent=31 // pred_region
          %s696 = sand.u32 %s51, 1
          %s697 = scalar_lea.sflag [#allocation14], %s696
          %s698 = sand.u32 %s250, 1
          %s699 = smul.addr %s698, 2
          %s700 = scalar_lea.vmem [#allocation13], %s699
          %s702 = ssub.s32 32, 32
          %703 = vsyncadd %s697, %s702
          %s704 = smul.addr %s59, 2
          %s705 = smul.addr %s704, 16
          %s706 = scalar_lea.hbm %s8, %s705
          %s708 = sshll.u32 %s700, 4
          %s709 = int_to_ptr.vmem [resolvable:$true] %s708
          %711 = dma.hbm_to_vmem [thread:$0]  %s706, 32, %s709, %s697
        $region60: #{prompt_encoder_forward.3} parent=31 // pred_fallthru
          _
        // Predicated region
        $region61: #{prompt_encoder_forward.3} parent=31 // pred_check
          %p712 = pneg %p286
        $region62: #{prompt_encoder_forward.3} parent=31 // pred_check_branch
          %714 = sbr.rel (%p712) target = $region64
        $region63: #{prompt_encoder_forward.3} parent=31 // pred_region
          %s715 = sand.u32 %s51, 1
          %s716 = scalar_lea.sflag [#allocation14], %s715
          %s717 = sand.u32 %s276, 1
          %s718 = smul.addr %s717, 2
          %s719 = scalar_lea.vmem [#allocation15], %s718
          %s721 = ssub.s32 32, 32
          %722 = vsyncadd %s716, %s721
          %s723 = smul.addr %s59, 2
          %s724 = smul.addr %s723, 16
          %s725 = scalar_lea.hbm %s9, %s724
          %s727 = sshll.u32 %s719, 4
          %s728 = int_to_ptr.vmem [resolvable:$true] %s727
          %730 = dma.hbm_to_vmem [thread:$0]  %s725, 32, %s728, %s716
        $region64: #{prompt_encoder_forward.3} parent=31 // pred_fallthru
          _
        // Predicated region
        $region65: #{prompt_encoder_forward.3} parent=31 // pred_check
          %p731 = pneg %p312
        $region66: #{prompt_encoder_forward.3} parent=31 // pred_check_branch
          %733 = sbr.rel (%p731) target = $region68
        $region67: #{prompt_encoder_forward.3} parent=31 // pred_region
          %s734 = sand.u32 %s51, 1
          %s735 = scalar_lea.sflag [#allocation17], %s734
          %s736 = sand.u32 %s302, 1
          %s737 = smul.addr %s736, 2
          %s738 = scalar_lea.vmem [#allocation16], %s737
          %s740 = ssub.s32 32, 32
          %741 = vsyncadd %s735, %s740
          %s742 = smul.addr %s59, 2
          %s743 = smul.addr %s742, 16
          %s744 = scalar_lea.hbm %s10, %s743
          %s746 = sshll.u32 %s738, 4
          %s747 = int_to_ptr.vmem [resolvable:$true] %s746
          %749 = dma.hbm_to_vmem [thread:$0]  %s744, 32, %s747, %s735
        $region68: #{prompt_encoder_forward.3} parent=31 // pred_fallthru
          _
        // Predicated region
        $region69: #{prompt_encoder_forward.3} parent=31 // pred_check
          %p750 = pneg %p338
        $region70: #{prompt_encoder_forward.3} parent=31 // pred_check_branch
          %752 = sbr.rel (%p750) target = $region72
        $region71: #{prompt_encoder_forward.3} parent=31 // pred_region
          %p753 = scmp.lt.s32.totalorder %s59, 2
          %s754 = scalar_select %p753, %s59, 2
          %s755 = smul.addr %s754, 128
          %s756 = smul.addr %s755, 4
          %s757 = scalar_lea.vmem %s11, %s756
        $region72: #{prompt_encoder_forward.3} parent=31 // pred_fallthru
          _
        // Predicated region
        $region73: #{prompt_encoder_forward.3} parent=31 // pred_check
          %p758 = pneg %p364
        $region74: #{prompt_encoder_forward.3} parent=31 // pred_check_branch
          %760 = sbr.rel (%p758) target = $region76
        $region75: #{prompt_encoder_forward.3} parent=31 // pred_region
          %s761 = sand.u32 %s51, 1
          %s762 = scalar_lea.sflag [#allocation17], %s761
          %s763 = sand.u32 %s354, 1
          %s764 = smul.addr %s763, 4
          %s765 = scalar_lea.vmem [#allocation18], %s764
          %s767 = ssub.s32 64, 64
          %768 = vsyncadd %s762, %s767
          %s769 = smul.addr %s59, 4
          %s770 = smul.addr %s769, 16
          %s771 = scalar_lea.hbm %s12, %s770
          %s773 = sshll.u32 %s765, 4
          %s774 = int_to_ptr.vmem [resolvable:$true] %s773
          %776 = dma.hbm_to_vmem [thread:$0]  %s771, 64, %s774, %s762
        $region76: #{prompt_encoder_forward.3} parent=31 // pred_fallthru
          _
        // Predicated region
        $region77: #{prompt_encoder_forward.3} parent=31 // pred_check
          %p777 = pneg %p390
        $region78: #{prompt_encoder_forward.3} parent=31 // pred_check_branch
          %779 = sbr.rel (%p777) target = $region80
        $region79: #{prompt_encoder_forward.3} parent=31 // pred_region
          %s780 = sand.u32 %s51, 1
          %s781 = scalar_lea.sflag [#allocation20], %s780
          %s782 = sand.u32 %s380, 1
          %s783 = smul.addr %s782, 512
          %s784 = scalar_lea.vmem [#allocation19], %s783
          %s786 = ssub.s32 8192, 8192
          %787 = vsyncadd %s781, %s786
          %s788 = smul.addr %s59, 128
          %s789 = smul.addr %s788, 64
          %s790 = scalar_lea.hbm %s13, %s789
          %s791 = sshll.u32 %s784, 4
          %s792 = int_to_ptr.vmem [resolvable:$true] %s791
          %797 = dma.hbm_to_vmem [thread:$0]  %s790, 8192, %s792, %s781, 128, 128, 8
        $region80: #{prompt_encoder_forward.3} parent=31 // pred_fallthru
          _
        // Predicated region
        $region81: #{prompt_encoder_forward.3} parent=31 // pred_check
          %p798 = pneg %p416
        $region82: #{prompt_encoder_forward.3} parent=31 // pred_check_branch
          %800 = sbr.rel (%p798) target = $region84
        $region83: #{prompt_encoder_forward.3} parent=31 // pred_region
          %s801 = sand.u32 %s51, 1
          %s802 = scalar_lea.sflag [#allocation20], %s801
          %s803 = sand.u32 %s406, 1
          %s804 = smul.addr %s803, 2
          %s805 = scalar_lea.vmem [#allocation21], %s804
          %s807 = ssub.s32 32, 32
          %808 = vsyncadd %s802, %s807
          %s809 = smul.addr %s59, 2
          %s810 = smul.addr %s809, 16
          %s811 = scalar_lea.hbm %s14, %s810
          %s813 = sshll.u32 %s805, 4
          %s814 = int_to_ptr.vmem [resolvable:$true] %s813
          %816 = dma.hbm_to_vmem [thread:$0]  %s811, 32, %s814, %s802
        $region84: #{prompt_encoder_forward.3} parent=31 // pred_fallthru
          _
      $region32: #{prompt_encoder_forward.3} parent=5 // pred_fallthru
        _
      %p817 = scmp.le.s32.totalorder 1, %s51
      %p818 = scmp.lt.s32.totalorder %s51, 7
      %p819 = pnand %p817, %p818
      %p820 = pneg %p819
      // Predicated region
      $region85: #{prompt_encoder_forward.3} parent=5 // pred_check
        _
      $region86: #{prompt_encoder_forward.3} parent=5 // pred_check_branch
        %822 = sbr.rel (%p819) target = $region88
      $region87: #{prompt_encoder_forward.3} parent=5 // pred_region
        %s823 = ssub.s32 %s51, 1
        %s824 = sand.u32 %s123, 1
        %s825 = scalar_lea.sflag [#allocation6], %s824
        %s826 = sand.u32 %s123, 1
        %s827 = smul.addr %s826, 2
        %s828 = scalar_lea.vmem [#allocation5], %s827
        // Predicated region
        $region89: #{prompt_encoder_forward.3} parent=87 // pred_check
          %p829 = pneg %p136
        $region90: #{prompt_encoder_forward.3} parent=87 // pred_check_branch
          %831 = sbr.rel (%p829) target = $region92
        $region91: #{prompt_encoder_forward.3} parent=87 // pred_region
          %832 = dma.done %s825, 32
        $region92: #{prompt_encoder_forward.3} parent=87 // pred_fallthru
          _
        %s833 = sand.u32 %s56, 1
        %s834 = scalar_lea.sflag [#allocation8], %s833
        %s835 = sand.u32 %s149, 1
        %s836 = smul.addr %s835, 2
        %s837 = scalar_lea.vmem [#allocation7], %s836
        // Predicated region
        $region93: #{prompt_encoder_forward.3} parent=87 // pred_check
          %p838 = pneg %p162
        $region94: #{prompt_encoder_forward.3} parent=87 // pred_check_branch
          %840 = sbr.rel (%p838) target = $region96
        $region95: #{prompt_encoder_forward.3} parent=87 // pred_region
          %841 = dma.done %s834, 32
        $region96: #{prompt_encoder_forward.3} parent=87 // pred_fallthru
          _
        %s842 = sand.u32 %s56, 1
        %s843 = scalar_lea.sflag [#allocation8], %s842
        %s844 = sand.u32 %s175, 1
        %s845 = smul.addr %s844, 768
        %s846 = scalar_lea.vmem [#allocation9], %s845
        // Predicated region
        $region97: #{prompt_encoder_forward.3} parent=87 // pred_check
          %p847 = pneg %p188
        $region98: #{prompt_encoder_forward.3} parent=87 // pred_check_branch
          %849 = sbr.rel (%p847) target = $region100
        $region99: #{prompt_encoder_forward.3} parent=87 // pred_region
          %850 = dma.done %s843, 12288
        $region100: #{prompt_encoder_forward.3} parent=87 // pred_fallthru
          _
        %s851 = sand.u32 %s56, 1
        %s852 = scalar_lea.sflag [#allocation11], %s851
        %s853 = sand.u32 %s201, 1
        %s854 = smul.addr %s853, 6
        %s855 = scalar_lea.vmem [#allocation10], %s854
        // Predicated region
        $region101: #{prompt_encoder_forward.3} parent=87 // pred_check
          %p856 = pneg %p214
        $region102: #{prompt_encoder_forward.3} parent=87 // pred_check_branch
          %858 = sbr.rel (%p856) target = $region104
        $region103: #{prompt_encoder_forward.3} parent=87 // pred_region
          %859 = dma.done %s852, 96
        $region104: #{prompt_encoder_forward.3} parent=87 // pred_fallthru
          _
        %s860 = sand.u32 %s56, 1
        %s861 = scalar_lea.sflag [#allocation11], %s860
        %s862 = sand.u32 %s227, 1
        %s863 = smul.addr %s862, 256
        %s864 = scalar_lea.vmem [#allocation12], %s863
        // Predicated region
        $region105: #{prompt_encoder_forward.3} parent=87 // pred_check
          %p865 = pneg %p240
        $region106: #{prompt_encoder_forward.3} parent=87 // pred_check_branch
          %867 = sbr.rel (%p865) target = $region108
        $region107: #{prompt_encoder_forward.3} parent=87 // pred_region
          %868 = dma.done %s861, 4096
        $region108: #{prompt_encoder_forward.3} parent=87 // pred_fallthru
          _
        %s869 = sand.u32 %s56, 1
        %s870 = scalar_lea.sflag [#allocation14], %s869
        %s871 = sand.u32 %s253, 1
        %s872 = smul.addr %s871, 2
        %s873 = scalar_lea.vmem [#allocation13], %s872
        // Predicated region
        $region109: #{prompt_encoder_forward.3} parent=87 // pred_check
          %p874 = pneg %p266
        $region110: #{prompt_encoder_forward.3} parent=87 // pred_check_branch
          %876 = sbr.rel (%p874) target = $region112
        $region111: #{prompt_encoder_forward.3} parent=87 // pred_region
          %877 = dma.done %s870, 32
        $region112: #{prompt_encoder_forward.3} parent=87 // pred_fallthru
          _
        %s878 = sand.u32 %s56, 1
        %s879 = scalar_lea.sflag [#allocation14], %s878
        %s880 = sand.u32 %s279, 1
        %s881 = smul.addr %s880, 2
        %s882 = scalar_lea.vmem [#allocation15], %s881
        // Predicated region
        $region113: #{prompt_encoder_forward.3} parent=87 // pred_check
          %p883 = pneg %p292
        $region114: #{prompt_encoder_forward.3} parent=87 // pred_check_branch
          %885 = sbr.rel (%p883) target = $region116
        $region115: #{prompt_encoder_forward.3} parent=87 // pred_region
          %886 = dma.done %s879, 32
        $region116: #{prompt_encoder_forward.3} parent=87 // pred_fallthru
          _
        %s887 = sand.u32 %s56, 1
        %s888 = scalar_lea.sflag [#allocation17], %s887
        %s889 = sand.u32 %s305, 1
        %s890 = smul.addr %s889, 2
        %s891 = scalar_lea.vmem [#allocation16], %s890
        // Predicated region
        $region117: #{prompt_encoder_forward.3} parent=87 // pred_check
          %p892 = pneg %p318
        $region118: #{prompt_encoder_forward.3} parent=87 // pred_check_branch
          %894 = sbr.rel (%p892) target = $region120
        $region119: #{prompt_encoder_forward.3} parent=87 // pred_region
          %895 = dma.done %s888, 32
        $region120: #{prompt_encoder_forward.3} parent=87 // pred_fallthru
          _
        %s896 = sand.u32 %s56, 1
        %s897 = scalar_lea.sflag [#allocation17], %s896
        %s898 = sand.u32 %s357, 1
        %s899 = smul.addr %s898, 4
        %s900 = scalar_lea.vmem [#allocation18], %s899
        // Predicated region
        $region121: #{prompt_encoder_forward.3} parent=87 // pred_check
          %p901 = pneg %p370
        $region122: #{prompt_encoder_forward.3} parent=87 // pred_check_branch
          %903 = sbr.rel (%p901) target = $region124
        $region123: #{prompt_encoder_forward.3} parent=87 // pred_region
          %904 = dma.done %s897, 64
        $region124: #{prompt_encoder_forward.3} parent=87 // pred_fallthru
          _
        %s905 = sand.u32 %s56, 1
        %s906 = scalar_lea.sflag [#allocation20], %s905
        %s907 = sand.u32 %s383, 1
        %s908 = smul.addr %s907, 512
        %s909 = scalar_lea.vmem [#allocation19], %s908
        // Predicated region
        $region125: #{prompt_encoder_forward.3} parent=87 // pred_check
          %p910 = pneg %p396
        $region126: #{prompt_encoder_forward.3} parent=87 // pred_check_branch
          %912 = sbr.rel (%p910) target = $region128
        $region127: #{prompt_encoder_forward.3} parent=87 // pred_region
          %913 = dma.done %s906, 8192
        $region128: #{prompt_encoder_forward.3} parent=87 // pred_fallthru
          _
        %s914 = sand.u32 %s56, 1
        %s915 = scalar_lea.sflag [#allocation20], %s914
        %s916 = sand.u32 %s409, 1
        %s917 = smul.addr %s916, 2
        %s918 = scalar_lea.vmem [#allocation21], %s917
        // Predicated region
        $region129: #{prompt_encoder_forward.3} parent=87 // pred_check
          %p919 = pneg %p422
        $region130: #{prompt_encoder_forward.3} parent=87 // pred_check_branch
          %921 = sbr.rel (%p919) target = $region132
        $region131: #{prompt_encoder_forward.3} parent=87 // pred_region
          %922 = dma.done %s915, 32
        $region132: #{prompt_encoder_forward.3} parent=87 // pred_fallthru
          _
        // Predicated region
        $region133: #{prompt_encoder_forward.3} parent=87 // pred_check
          %p923 = pneg %p443
        $region134: #{prompt_encoder_forward.3} parent=87 // pred_check_branch
          %925 = sbr.rel (%p923) target = $region136
        $region135: #{prompt_encoder_forward.3} parent=87 // pred_region
          %926 = dma.done [#allocation23], 32
        $region136: #{prompt_encoder_forward.3} parent=87 // pred_fallthru
          _
        // Predicated region
        $region137: #{prompt_encoder_forward.3} parent=87 // pred_check
          %p927 = pneg %p464
        $region138: #{prompt_encoder_forward.3} parent=87 // pred_check_branch
          %929 = sbr.rel (%p927) target = $region140
        $region139: #{prompt_encoder_forward.3} parent=87 // pred_region
          %930 = dma.done [#allocation23], 32
        $region140: #{prompt_encoder_forward.3} parent=87 // pred_fallthru
          _
        %p931 = scmp.lt.s32.totalorder %s60, 1
        %s932 = scalar_select %p931, %s60, 1
        %s933 = smul.addr %s932, 2
        %s934 = smul.addr %s933, 8
        %s935 = scalar_lea.vmem %s1, %s934
        %p936 = pneg %p89
        %p937 = pneg %p86
        %p938 = pneg %p110
        %p939 = pneg %p107
        %s940 = sand.u32 %s123, 1
        %s941 = scalar_lea.sflag [#allocation6], %s940
        %s942 = sand.u32 %s123, 1
        %s943 = smul.addr %s942, 2
        %s944 = scalar_lea.vmem [#allocation5], %s943
        %p945 = pneg %p136
        %p946 = pneg %p133
        %s947 = sand.u32 %s56, 1
        %s948 = scalar_lea.sflag [#allocation8], %s947
        %s949 = sand.u32 %s149, 1
        %s950 = smul.addr %s949, 2
        %s951 = scalar_lea.vmem [#allocation7], %s950
        %p952 = pneg %p162
        %p953 = pneg %p159
        %s954 = sand.u32 %s56, 1
        %s955 = scalar_lea.sflag [#allocation8], %s954
        %s956 = sand.u32 %s175, 1
        %s957 = smul.addr %s956, 768
        %s958 = scalar_lea.vmem [#allocation9], %s957
        %p959 = pneg %p188
        %p960 = pneg %p185
        %s961 = sand.u32 %s56, 1
        %s962 = scalar_lea.sflag [#allocation11], %s961
        %s963 = sand.u32 %s201, 1
        %s964 = smul.addr %s963, 6
        %s965 = scalar_lea.vmem [#allocation10], %s964
        %p966 = pneg %p214
        %p967 = pneg %p211
        %s968 = sand.u32 %s56, 1
        %s969 = scalar_lea.sflag [#allocation11], %s968
        %s970 = sand.u32 %s227, 1
        %s971 = smul.addr %s970, 256
        %s972 = scalar_lea.vmem [#allocation12], %s971
        %p973 = pneg %p240
        %p974 = pneg %p237
        %s975 = sand.u32 %s56, 1
        %s976 = scalar_lea.sflag [#allocation14], %s975
        %s977 = sand.u32 %s253, 1
        %s978 = smul.addr %s977, 2
        %s979 = scalar_lea.vmem [#allocation13], %s978
        %p980 = pneg %p266
        %p981 = pneg %p263
        %s982 = sand.u32 %s56, 1
        %s983 = scalar_lea.sflag [#allocation14], %s982
        %s984 = sand.u32 %s279, 1
        %s985 = smul.addr %s984, 2
        %s986 = scalar_lea.vmem [#allocation15], %s985
        %p987 = pneg %p292
        %p988 = pneg %p289
        %s989 = sand.u32 %s56, 1
        %s990 = scalar_lea.sflag [#allocation17], %s989
        %s991 = sand.u32 %s305, 1
        %s992 = smul.addr %s991, 2
        %s993 = scalar_lea.vmem [#allocation16], %s992
        %p994 = pneg %p318
        %p995 = pneg %p315
        %p996 = scmp.lt.s32.totalorder %s61, 2
        %s997 = scalar_select %p996, %s61, 2
        %s998 = smul.addr %s997, 128
        %s999 = smul.addr %s998, 4
        %s1000 = scalar_lea.vmem %s11, %s999
        %p1001 = pneg %p344
        %p1002 = pneg %p341
        %s1003 = sand.u32 %s56, 1
        %s1004 = scalar_lea.sflag [#allocation17], %s1003
        %s1005 = sand.u32 %s357, 1
        %s1006 = smul.addr %s1005, 4
        %s1007 = scalar_lea.vmem [#allocation18], %s1006
        %p1008 = pneg %p370
        %p1009 = pneg %p367
        %s1010 = sand.u32 %s56, 1
        %s1011 = scalar_lea.sflag [#allocation20], %s1010
        %s1012 = sand.u32 %s383, 1
        %s1013 = smul.addr %s1012, 512
        %s1014 = scalar_lea.vmem [#allocation19], %s1013
        %p1015 = pneg %p396
        %p1016 = pneg %p393
        %s1017 = sand.u32 %s56, 1
        %s1018 = scalar_lea.sflag [#allocation20], %s1017
        %s1019 = sand.u32 %s409, 1
        %s1020 = smul.addr %s1019, 2
        %s1021 = scalar_lea.vmem [#allocation21], %s1020
        %p1022 = pneg %p422
        %p1023 = pneg %p419
        %p1024 = pneg %p443
        %p1025 = pneg %p440
        %p1026 = pneg %p464
        %p1027 = pneg %p461
        %p1028 = pneg %p485
        %p1029 = pneg %p482
        %p1030 = pneg %p511
        %p1031 = pneg %p508
        %p1032 = scmp.lt.s32.totalorder %s60, 1
        %s1033 = scalar_select %p1032, %s60, 1
        %s1034 = smul.addr %s1033, 2
        %s1035 = smul.addr %s1034, 8
        %s1036 = scalar_lea.vmem %s18, %s1035
        %p1037 = pneg %p537
        %p1038 = pneg %p534
        %p1039 = scmp.lt.s32.totalorder %s60, 1
        %s1040 = scalar_select %p1039, %s60, 1
        %s1041 = scalar_lea.vmem %s19, %s1040
        %p1042 = scmp.lt.s32.totalorder %s60, 1
        %s1043 = scalar_select %p1042, %s60, 1
        %s1044 = smul.addr %s1043, 2
        %s1045 = smul.addr %s1044, 8
        %s1046 = scalar_lea.vmem %s1, %s1045
        %p1047 = scmp.lt.s32.totalorder %s61, 2
        %s1048 = scalar_select %p1047, %s61, 2
        %s1049 = smul.addr %s1048, 128
        %s1050 = smul.addr %s1049, 4
        %s1051 = scalar_lea.vmem %s11, %s1050
        %p1052 = scmp.lt.s32.totalorder %s60, 1
        %s1053 = scalar_select %p1052, %s60, 1
        %s1054 = smul.addr %s1053, 2
        %s1055 = smul.addr %s1054, 8
        %s1056 = scalar_lea.vmem %s18, %s1055
        %p1057 = scmp.lt.s32.totalorder %s60, 1
        %s1058 = scalar_select %p1057, %s60, 1
        %s1059 = scalar_lea.vmem %s19, %s1058
        %p1061 = scmp.eq.s32.totalorder %s61, 0
        // Predicated region
        $region141: #{prompt_encoder_forward.3} parent=87 // pred_check
          %p1062 = pneg %p1061
        $region142: #{prompt_encoder_forward.3} parent=87 // pred_check_branch
          %1064 = sbr.rel (%p1062) target = $region144
        $region143: #{prompt_encoder_forward.3} parent=87 // pred_region
          %v1065 = vld [vmem:[%s1046] sm:$0xff]
          %v1066 = vld [vmem:[%s1046 + $0x8] sm:$0xff]
          %1067 = vst [vmem:[#allocation2] sm:$0xff] %v1065
          %1068 = vst [vmem:[#allocation2 + $0x8] sm:$0xff] %v1066
        $region144: #{prompt_encoder_forward.3} parent=87 // pred_fallthru
          _
        %p1069 = scmp.eq.s32.totalorder %s61, 2
        // Predicated region
        $region145: #{prompt_encoder_forward.3} parent=87 // pred_check
          %p1070 = pneg %p1069
        $region146: #{prompt_encoder_forward.3} parent=87 // pred_check_branch
          %1072 = sbr.rel (%p1070) target = $region148
        $region147: #{prompt_encoder_forward.3} parent=87 // pred_region
          %v1073 = vld [vmem:[#allocation2] sm:$0xff]
          %v1074 = vld [vmem:[#allocation2 + $0x8] sm:$0xff]
          %1075 = vst [vmem:[%s1056] sm:$0xff] %v1073
          %1076 = vst [vmem:[%s1056 + $0x8] sm:$0xff] %v1074
        $region148: #{prompt_encoder_forward.3} parent=87 // pred_fallthru
          _
        %v1077 = vld [vmem:[#allocation2] sm:$0xff]
        %v1078 = vld [vmem:[#allocation2 + $0x8] sm:$0xff]
        %v1079 = vld [vmem:[%s828] sm:$0x3]
        %v1080 = vld [vmem:[%s837] sm:$0x3]
        %v1081 = vadd.f32 %v1077, %v1078
        %1082 = vadd.xlane.f32.xlu0 %v1081
        %v1083 = vpop.xlane.xlu0 %1082
        %v1084 = vrcp.pop 256.0
        %v1085 = vmul.f32 %v1083, %v1084
        %v1086 = vsub.f32 %v1077, %v1085
        %v1087 = vsub.f32 %v1078, %v1085
        %v1088 = vmul.f32 %v1086, %v1086
        %v1089 = vmul.f32 %v1087, %v1087
        %v1090 = vadd.f32 %v1088, %v1089
        %1091 = vadd.xlane.f32.xlu0 %v1090
        %v1092 = vpop.xlane.xlu0 %1091
        %v1093 = vmul.f32 %v1092, %v1084
        %v1094 = vadd.f32 %v1093, 1e-05
        %v1095 = vrsqrt.pop %v1094
        %v1096 = vmul.f32 %v1086, %v1095
        %v1097 = vmul.f32 %v1087, %v1095
        %v1099 = vlaneseq
        %v1100 = vshrl.u32 %v1099, 7
        %v1101 = vsub.s32 0, %v1100
        %v1102 = vrot.slane %v1079, %v1101
        %v1103 = vlaneseq
        %v1104 = vshrl.u32 %v1103, 7
        %v1105 = vsub.s32 1, %v1104
        %v1106 = vrot.slane %v1079, %v1105
        %v1109 = vmul.f32 %v1096, %v1102
        %v1110 = vmul.f32 %v1097, %v1106
        %v1112 = vlaneseq
        %v1113 = vshrl.u32 %v1112, 7
        %v1114 = vsub.s32 0, %v1113
        %v1115 = vrot.slane %v1080, %v1114
        %v1116 = vlaneseq
        %v1117 = vshrl.u32 %v1116, 7
        %v1118 = vsub.s32 1, %v1117
        %v1119 = vrot.slane %v1080, %v1118
        %v1122 = vadd.f32 %v1109, %v1115
        %v1123 = vadd.f32 %v1110, %v1119
        %v1124 = vpack.c.bf16 %v1122, %v1122
        %v1125 = vpack.c.bf16 %v1123, %v1123
        %v1126 = vld [vmem:[%s846] sm:$0xff]
        %v1127 = vld [vmem:[%s846 + $0x8] sm:$0xf]
        %v1128 = vld [vmem:[%s846 + $0xc] sm:$0xff]
        %v1129 = vld [vmem:[%s846 + $0x14] sm:$0xf]
        %v1130 = vld [vmem:[%s846 + $0x18] sm:$0xff]
        %v1131 = vld [vmem:[%s846 + $0x20] sm:$0xf]
        %v1132 = vld [vmem:[%s846 + $0x24] sm:$0xff]
        %v1133 = vld [vmem:[%s846 + $0x2c] sm:$0xf]
        %v1134 = vld [vmem:[%s846 + $0x30] sm:$0xff]
        %v1135 = vld [vmem:[%s846 + $0x38] sm:$0xf]
        %v1136 = vld [vmem:[%s846 + $0x3c] sm:$0xff]
        %v1137 = vld [vmem:[%s846 + $0x44] sm:$0xf]
        %v1138 = vld [vmem:[%s846 + $0x48] sm:$0xff]
        %v1139 = vld [vmem:[%s846 + $0x50] sm:$0xf]
        %v1140 = vld [vmem:[%s846 + $0x54] sm:$0xff]
        %v1141 = vld [vmem:[%s846 + $0x5c] sm:$0xf]
        %v1142 = vld [vmem:[%s846 + $0x60] sm:$0xff]
        %v1143 = vld [vmem:[%s846 + $0x68] sm:$0xf]
        %v1144 = vld [vmem:[%s846 + $0x6c] sm:$0xff]
        %v1145 = vld [vmem:[%s846 + $0x74] sm:$0xf]
        %v1146 = vld [vmem:[%s846 + $0x78] sm:$0xff]
        %v1147 = vld [vmem:[%s846 + $0x80] sm:$0xf]
        %v1148 = vld [vmem:[%s846 + $0x84] sm:$0xff]
        %v1149 = vld [vmem:[%s846 + $0x8c] sm:$0xf]
        %v1150 = vld [vmem:[%s846 + $0x90] sm:$0xff]
        %v1151 = vld [vmem:[%s846 + $0x98] sm:$0xf]
        %v1152 = vld [vmem:[%s846 + $0x9c] sm:$0xff]
        %v1153 = vld [vmem:[%s846 + $0xa4] sm:$0xf]
        %v1154 = vld [vmem:[%s846 + $0xa8] sm:$0xff]
        %v1155 = vld [vmem:[%s846 + $0xb0] sm:$0xf]
        %v1156 = vld [vmem:[%s846 + $0xb4] sm:$0xff]
        %v1157 = vld [vmem:[%s846 + $0xbc] sm:$0xf]
        %v1158 = vld [vmem:[%s846 + $0xc0] sm:$0xff]
        %v1159 = vld [vmem:[%s846 + $0xc8] sm:$0xf]
        %v1160 = vld [vmem:[%s846 + $0xcc] sm:$0xff]
        %v1161 = vld [vmem:[%s846 + $0xd4] sm:$0xf]
        %v1162 = vld [vmem:[%s846 + $0xd8] sm:$0xff]
        %v1163 = vld [vmem:[%s846 + $0xe0] sm:$0xf]
        %v1164 = vld [vmem:[%s846 + $0xe4] sm:$0xff]
        %v1165 = vld [vmem:[%s846 + $0xec] sm:$0xf]
        %v1166 = vld [vmem:[%s846 + $0xf0] sm:$0xff]
        %v1167 = vld [vmem:[%s846 + $0xf8] sm:$0xf]
        %v1168 = vld [vmem:[%s846 + $0xfc] sm:$0xff]
        %v1169 = vld [vmem:[%s846 + $0x104] sm:$0xf]
        %v1170 = vld [vmem:[%s846 + $0x108] sm:$0xff]
        %v1171 = vld [vmem:[%s846 + $0x110] sm:$0xf]
        %v1172 = vld [vmem:[%s846 + $0x114] sm:$0xff]
        %v1173 = vld [vmem:[%s846 + $0x11c] sm:$0xf]
        %v1174 = vld [vmem:[%s846 + $0x120] sm:$0xff]
        %v1175 = vld [vmem:[%s846 + $0x128] sm:$0xf]
        %v1176 = vld [vmem:[%s846 + $0x12c] sm:$0xff]
        %v1177 = vld [vmem:[%s846 + $0x134] sm:$0xf]
        %v1178 = vld [vmem:[%s846 + $0x138] sm:$0xff]
        %v1179 = vld [vmem:[%s846 + $0x140] sm:$0xf]
        %v1180 = vld [vmem:[%s846 + $0x144] sm:$0xff]
        %v1181 = vld [vmem:[%s846 + $0x14c] sm:$0xf]
        %v1182 = vld [vmem:[%s846 + $0x150] sm:$0xff]
        %v1183 = vld [vmem:[%s846 + $0x158] sm:$0xf]
        %v1184 = vld [vmem:[%s846 + $0x15c] sm:$0xff]
        %v1185 = vld [vmem:[%s846 + $0x164] sm:$0xf]
        %v1186 = vld [vmem:[%s846 + $0x168] sm:$0xff]
        %v1187 = vld [vmem:[%s846 + $0x170] sm:$0xf]
        %v1188 = vld [vmem:[%s846 + $0x174] sm:$0xff]
        %v1189 = vld [vmem:[%s846 + $0x17c] sm:$0xf]
        %v1190 = vld [vmem:[%s846 + $0x180] sm:$0xff]
        %v1191 = vld [vmem:[%s846 + $0x188] sm:$0xf]
        %v1192 = vld [vmem:[%s846 + $0x18c] sm:$0xff]
        %v1193 = vld [vmem:[%s846 + $0x194] sm:$0xf]
        %v1194 = vld [vmem:[%s846 + $0x198] sm:$0xff]
        %v1195 = vld [vmem:[%s846 + $0x1a0] sm:$0xf]
        %v1196 = vld [vmem:[%s846 + $0x1a4] sm:$0xff]
        %v1197 = vld [vmem:[%s846 + $0x1ac] sm:$0xf]
        %v1198 = vld [vmem:[%s846 + $0x1b0] sm:$0xff]
        %v1199 = vld [vmem:[%s846 + $0x1b8] sm:$0xf]
        %v1200 = vld [vmem:[%s846 + $0x1bc] sm:$0xff]
        %v1201 = vld [vmem:[%s846 + $0x1c4] sm:$0xf]
        %v1202 = vld [vmem:[%s846 + $0x1c8] sm:$0xff]
        %v1203 = vld [vmem:[%s846 + $0x1d0] sm:$0xf]
        %v1204 = vld [vmem:[%s846 + $0x1d4] sm:$0xff]
        %v1205 = vld [vmem:[%s846 + $0x1dc] sm:$0xf]
        %v1206 = vld [vmem:[%s846 + $0x1e0] sm:$0xff]
        %v1207 = vld [vmem:[%s846 + $0x1e8] sm:$0xf]
        %v1208 = vld [vmem:[%s846 + $0x1ec] sm:$0xff]
        %v1209 = vld [vmem:[%s846 + $0x1f4] sm:$0xf]
        %v1210 = vld [vmem:[%s846 + $0x1f8] sm:$0xff]
        %v1211 = vld [vmem:[%s846 + $0x200] sm:$0xf]
        %v1212 = vld [vmem:[%s846 + $0x204] sm:$0xff]
        %v1213 = vld [vmem:[%s846 + $0x20c] sm:$0xf]
        %v1214 = vld [vmem:[%s846 + $0x210] sm:$0xff]
        %v1215 = vld [vmem:[%s846 + $0x218] sm:$0xf]
        %v1216 = vld [vmem:[%s846 + $0x21c] sm:$0xff]
        %v1217 = vld [vmem:[%s846 + $0x224] sm:$0xf]
        %v1218 = vld [vmem:[%s846 + $0x228] sm:$0xff]
        %v1219 = vld [vmem:[%s846 + $0x230] sm:$0xf]
        %v1220 = vld [vmem:[%s846 + $0x234] sm:$0xff]
        %v1221 = vld [vmem:[%s846 + $0x23c] sm:$0xf]
        %v1222 = vld [vmem:[%s846 + $0x240] sm:$0xff]
        %v1223 = vld [vmem:[%s846 + $0x248] sm:$0xf]
        %v1224 = vld [vmem:[%s846 + $0x24c] sm:$0xff]
        %v1225 = vld [vmem:[%s846 + $0x254] sm:$0xf]
        %v1226 = vld [vmem:[%s846 + $0x258] sm:$0xff]
        %v1227 = vld [vmem:[%s846 + $0x260] sm:$0xf]
        %v1228 = vld [vmem:[%s846 + $0x264] sm:$0xff]
        %v1229 = vld [vmem:[%s846 + $0x26c] sm:$0xf]
        %v1230 = vld [vmem:[%s846 + $0x270] sm:$0xff]
        %v1231 = vld [vmem:[%s846 + $0x278] sm:$0xf]
        %v1232 = vld [vmem:[%s846 + $0x27c] sm:$0xff]
        %v1233 = vld [vmem:[%s846 + $0x284] sm:$0xf]
        %v1234 = vld [vmem:[%s846 + $0x288] sm:$0xff]
        %v1235 = vld [vmem:[%s846 + $0x290] sm:$0xf]
        %v1236 = vld [vmem:[%s846 + $0x294] sm:$0xff]
        %v1237 = vld [vmem:[%s846 + $0x29c] sm:$0xf]
        %v1238 = vld [vmem:[%s846 + $0x2a0] sm:$0xff]
        %v1239 = vld [vmem:[%s846 + $0x2a8] sm:$0xf]
        %v1240 = vld [vmem:[%s846 + $0x2ac] sm:$0xff]
        %v1241 = vld [vmem:[%s846 + $0x2b4] sm:$0xf]
        %v1242 = vld [vmem:[%s846 + $0x2b8] sm:$0xff]
        %v1243 = vld [vmem:[%s846 + $0x2c0] sm:$0xf]
        %v1244 = vld [vmem:[%s846 + $0x2c4] sm:$0xff]
        %v1245 = vld [vmem:[%s846 + $0x2cc] sm:$0xf]
        %v1246 = vld [vmem:[%s846 + $0x2d0] sm:$0xff]
        %v1247 = vld [vmem:[%s846 + $0x2d8] sm:$0xf]
        %v1248 = vld [vmem:[%s846 + $0x2dc] sm:$0xff]
        %v1249 = vld [vmem:[%s846 + $0x2e4] sm:$0xf]
        %v1250 = vld [vmem:[%s846 + $0x2e8] sm:$0xff]
        %v1251 = vld [vmem:[%s846 + $0x2f0] sm:$0xf]
        %v1252 = vld [vmem:[%s846 + $0x2f4] sm:$0xff]
        %v1253 = vld [vmem:[%s846 + $0x2fc] sm:$0xf]
        %v1254 = vld [vmem:[%s855] sm:$0x7]
        %v1255 = vld [vmem:[%s855 + $0x3] sm:$0x7]
        %v1258 = vlaneseq
        %v1259 = vshrl.u32 %v1258, 7
        %v1260 = vsub.s32 0, %v1259
        %v1261 = vrot.slane %v1254, %v1260
        %v1262 = vlaneseq
        %v1263 = vshrl.u32 %v1262, 7
        %v1264 = vsub.s32 1, %v1263
        %v1265 = vrot.slane %v1254, %v1264
        %v1266 = vlaneseq
        %v1267 = vshrl.u32 %v1266, 7
        %v1268 = vsub.s32 2, %v1267
        %v1269 = vrot.slane %v1254, %v1268
        %v1270 = vlaneseq
        %v1271 = vshrl.u32 %v1270, 7
        %v1272 = vsub.s32 0, %v1271
        %v1273 = vrot.slane %v1255, %v1272
        %v1274 = vlaneseq
        %v1275 = vshrl.u32 %v1274, 7
        %v1276 = vsub.s32 1, %v1275
        %v1277 = vrot.slane %v1255, %v1276
        %v1278 = vlaneseq
        %v1279 = vshrl.u32 %v1278, 7
        %v1280 = vsub.s32 2, %v1279
        %v1281 = vrot.slane %v1255, %v1280
        %v1352 = vunpack.c.l.b16 %v1126
        %v1353 = vunpack.c.h.b16 %v1126
        %v1354 = vunpack.c.l.b16 %v1127
        %v1355 = vunpack.c.l.b16 %v1128
        %v1356 = vunpack.c.h.b16 %v1128
        %v1357 = vunpack.c.l.b16 %v1129
        %v1358 = vunpack.c.l.b16 %v1130
        %v1359 = vunpack.c.h.b16 %v1130
        %v1360 = vunpack.c.l.b16 %v1131
        %v1361 = vunpack.c.l.b16 %v1132
        %v1362 = vunpack.c.h.b16 %v1132
        %v1363 = vunpack.c.l.b16 %v1133
        %v1364 = vunpack.c.l.b16 %v1134
        %v1365 = vunpack.c.h.b16 %v1134
        %v1366 = vunpack.c.l.b16 %v1135
        %v1367 = vunpack.c.l.b16 %v1136
        %v1368 = vunpack.c.h.b16 %v1136
        %v1369 = vunpack.c.l.b16 %v1137
        %v1370 = vunpack.c.l.b16 %v1138
        %v1371 = vunpack.c.h.b16 %v1138
        %v1372 = vunpack.c.l.b16 %v1139
        %v1373 = vunpack.c.l.b16 %v1140
        %v1374 = vunpack.c.h.b16 %v1140
        %v1375 = vunpack.c.l.b16 %v1141
        %v1376 = vunpack.c.l.b16 %v1142
        %v1377 = vunpack.c.h.b16 %v1142
        %v1378 = vunpack.c.l.b16 %v1143
        %v1379 = vunpack.c.l.b16 %v1144
        %v1380 = vunpack.c.h.b16 %v1144
        %v1381 = vunpack.c.l.b16 %v1145
        %v1382 = vunpack.c.l.b16 %v1146
        %v1383 = vunpack.c.h.b16 %v1146
        %v1384 = vunpack.c.l.b16 %v1147
        %v1385 = vunpack.c.l.b16 %v1148
        %v1386 = vunpack.c.h.b16 %v1148
        %v1387 = vunpack.c.l.b16 %v1149
        %v1388 = vunpack.c.l.b16 %v1150
        %v1389 = vunpack.c.h.b16 %v1150
        %v1390 = vunpack.c.l.b16 %v1151
        %v1391 = vunpack.c.l.b16 %v1152
        %v1392 = vunpack.c.h.b16 %v1152
        %v1393 = vunpack.c.l.b16 %v1153
        %v1394 = vunpack.c.l.b16 %v1154
        %v1395 = vunpack.c.h.b16 %v1154
        %v1396 = vunpack.c.l.b16 %v1155
        %v1397 = vunpack.c.l.b16 %v1156
        %v1398 = vunpack.c.h.b16 %v1156
        %v1399 = vunpack.c.l.b16 %v1157
        %v1400 = vunpack.c.l.b16 %v1158
        %v1401 = vunpack.c.h.b16 %v1158
        %v1402 = vunpack.c.l.b16 %v1159
        %v1403 = vunpack.c.l.b16 %v1160
        %v1404 = vunpack.c.h.b16 %v1160
        %v1405 = vunpack.c.l.b16 %v1161
        %v1406 = vunpack.c.l.b16 %v1162
        %v1407 = vunpack.c.h.b16 %v1162
        %v1408 = vunpack.c.l.b16 %v1163
        %v1409 = vunpack.c.l.b16 %v1164
        %v1410 = vunpack.c.h.b16 %v1164
        %v1411 = vunpack.c.l.b16 %v1165
        %v1412 = vunpack.c.l.b16 %v1166
        %v1413 = vunpack.c.h.b16 %v1166
        %v1414 = vunpack.c.l.b16 %v1167
        %v1415 = vunpack.c.l.b16 %v1168
        %v1416 = vunpack.c.h.b16 %v1168
        %v1417 = vunpack.c.l.b16 %v1169
        %v1418 = vunpack.c.l.b16 %v1170
        %v1419 = vunpack.c.h.b16 %v1170
        %v1420 = vunpack.c.l.b16 %v1171
        %v1421 = vunpack.c.l.b16 %v1172
        %v1422 = vunpack.c.h.b16 %v1172
        %v1423 = vunpack.c.l.b16 %v1173
        %v1424 = vunpack.c.l.b16 %v1174
        %v1425 = vunpack.c.h.b16 %v1174
        %v1426 = vunpack.c.l.b16 %v1175
        %v1427 = vunpack.c.l.b16 %v1176
        %v1428 = vunpack.c.h.b16 %v1176
        %v1429 = vunpack.c.l.b16 %v1177
        %v1430 = vunpack.c.l.b16 %v1178
        %v1431 = vunpack.c.h.b16 %v1178
        %v1432 = vunpack.c.l.b16 %v1179
        %v1433 = vunpack.c.l.b16 %v1180
        %v1434 = vunpack.c.h.b16 %v1180
        %v1435 = vunpack.c.l.b16 %v1181
        %v1436 = vunpack.c.l.b16 %v1182
        %v1437 = vunpack.c.h.b16 %v1182
        %v1438 = vunpack.c.l.b16 %v1183
        %v1439 = vunpack.c.l.b16 %v1184
        %v1440 = vunpack.c.h.b16 %v1184
        %v1441 = vunpack.c.l.b16 %v1185
        %v1442 = vunpack.c.l.b16 %v1186
        %v1443 = vunpack.c.h.b16 %v1186
        %v1444 = vunpack.c.l.b16 %v1187
        %v1445 = vunpack.c.l.b16 %v1188
        %v1446 = vunpack.c.h.b16 %v1188
        %v1447 = vunpack.c.l.b16 %v1189
        %v1448 = vpack.c.b16 %v1355, %v1352
        %v1449 = vpack.c.b16 %v1356, %v1353
        %v1450 = vpack.c.b16 %v1357, %v1354
        %v1451 = vpack.c.b16 %v1361, %v1358
        %v1452 = vpack.c.b16 %v1362, %v1359
        %v1453 = vpack.c.b16 %v1363, %v1360
        %v1454 = vpack.c.b16 %v1367, %v1364
        %v1455 = vpack.c.b16 %v1368, %v1365
        %v1456 = vpack.c.b16 %v1369, %v1366
        %v1457 = vpack.c.b16 %v1373, %v1370
        %v1458 = vpack.c.b16 %v1374, %v1371
        %v1459 = vpack.c.b16 %v1375, %v1372
        %v1460 = vpack.c.b16 %v1379, %v1376
        %v1461 = vpack.c.b16 %v1380, %v1377
        %v1462 = vpack.c.b16 %v1381, %v1378
        %v1463 = vpack.c.b16 %v1385, %v1382
        %v1464 = vpack.c.b16 %v1386, %v1383
        %v1465 = vpack.c.b16 %v1387, %v1384
        %v1466 = vpack.c.b16 %v1391, %v1388
        %v1467 = vpack.c.b16 %v1392, %v1389
        %v1468 = vpack.c.b16 %v1393, %v1390
        %v1469 = vpack.c.b16 %v1397, %v1394
        %v1470 = vpack.c.b16 %v1398, %v1395
        %v1471 = vpack.c.b16 %v1399, %v1396
        %v1472 = vpack.c.b16 %v1403, %v1400
        %v1473 = vpack.c.b16 %v1404, %v1401
        %v1474 = vpack.c.b16 %v1405, %v1402
        %v1475 = vpack.c.b16 %v1409, %v1406
        %v1476 = vpack.c.b16 %v1410, %v1407
        %v1477 = vpack.c.b16 %v1411, %v1408
        %v1478 = vpack.c.b16 %v1415, %v1412
        %v1479 = vpack.c.b16 %v1416, %v1413
        %v1480 = vpack.c.b16 %v1417, %v1414
        %v1481 = vpack.c.b16 %v1421, %v1418
        %v1482 = vpack.c.b16 %v1422, %v1419
        %v1483 = vpack.c.b16 %v1423, %v1420
        %v1484 = vpack.c.b16 %v1427, %v1424
        %v1485 = vpack.c.b16 %v1428, %v1425
        %v1486 = vpack.c.b16 %v1429, %v1426
        %v1487 = vpack.c.b16 %v1433, %v1430
        %v1488 = vpack.c.b16 %v1434, %v1431
        %v1489 = vpack.c.b16 %v1435, %v1432
        %v1490 = vpack.c.b16 %v1439, %v1436
        %v1491 = vpack.c.b16 %v1440, %v1437
        %v1492 = vpack.c.b16 %v1441, %v1438
        %v1493 = vpack.c.b16 %v1445, %v1442
        %v1494 = vpack.c.b16 %v1446, %v1443
        %v1495 = vpack.c.b16 %v1447, %v1444
        %1544 = vmatprep.subr.bf16.mxu0 %v1470
        %1545 = vmatpush1.bf16.msra.mxu0 %v1469
        %1546 = vmatprep.subr.bf16.mxu0 %v1467
        %1547 = vmatpush1.bf16.msra.mxu0 %v1466
        %1548 = vmatprep.subr.bf16.mxu0 %v1464
        %1549 = vmatpush1.bf16.msra.mxu0 %v1463
        %1550 = vmatprep.subr.bf16.mxu0 %v1461
        %1551 = vmatpush1.bf16.msra.mxu0 %v1460
        %1552 = vmatprep.subr.bf16.mxu0 %v1458
        %1553 = vmatpush1.bf16.msra.mxu0 %v1457
        %1554 = vmatprep.subr.bf16.mxu0 %v1455
        %1555 = vmatpush1.bf16.msra.mxu0 %v1454
        %1556 = vmatprep.subr.bf16.mxu0 %v1452
        %1557 = vmatpush1.bf16.msra.mxu0 %v1451
        %1558 = vmatprep.subr.bf16.mxu0 %v1449
        %1559 = vmatpush1.bf16.msra.mxu0 %v1448
        %1560 = vmatprep.subr.bf16.mxu0 %v1494
        %1561 = vmatpush2.bf16.msra.mxu0 %v1493
        %1562 = vmatprep.subr.bf16.mxu0 %v1491
        %1563 = vmatpush2.bf16.msra.mxu0 %v1490
        %1564 = vmatprep.subr.bf16.mxu0 %v1488
        %1565 = vmatpush2.bf16.msra.mxu0 %v1487
        %1566 = vmatprep.subr.bf16.mxu0 %v1485
        %1567 = vmatpush2.bf16.msra.mxu0 %v1484
        %1568 = vmatprep.subr.bf16.mxu0 %v1482
        %1569 = vmatpush2.bf16.msra.mxu0 %v1481
        %1570 = vmatprep.subr.bf16.mxu0 %v1479
        %1571 = vmatpush2.bf16.msra.mxu0 %v1478
        %1572 = vmatprep.subr.bf16.mxu0 %v1476
        %1573 = vmatpush2.bf16.msra.mxu0 %v1475
        %1574 = vmatprep.subr.bf16.mxu0 %v1473
        %1575 = vmatpush2.bf16.msra.mxu0 %v1472
        %1576 = vmatprep.mubr.bf16.mxu0 %v1125
        %1577 = vmatmul.mubr.bf16.gmra.mxu0 %v1124
        %v1578 = vpop.f32.mrf.mxu0
        %v1579 = vadd.f32 %v1261, %v1578
        %v1580 = vpop.f32.mrf.mxu0
        %v1581 = vadd.f32 %v1265, %v1580
        %v1582 = vpop.f32.mrf.mxu0
        %v1583 = vpop.f32.mrf.mxu0
        %1584 = vdwg.mxu0
        %1585 = vmatprep.subr.bf16.mxu0 0
        %1586 = vmatpush1.bf16.msra.mxu0 %v1471
        %1587 = vmatprep.subr.bf16.mxu0 0
        %1588 = vmatpush1.bf16.msra.mxu0 %v1468
        %1589 = vmatprep.subr.bf16.mxu0 0
        %1590 = vmatpush1.bf16.msra.mxu0 %v1465
        %1591 = vmatprep.subr.bf16.mxu0 0
        %1592 = vmatpush1.bf16.msra.mxu0 %v1462
        %1593 = vmatprep.subr.bf16.mxu0 0
        %1594 = vmatpush1.bf16.msra.mxu0 %v1459
        %1595 = vmatprep.subr.bf16.mxu0 0
        %1596 = vmatpush1.bf16.msra.mxu0 %v1456
        %1597 = vmatprep.subr.bf16.mxu0 0
        %1598 = vmatpush1.bf16.msra.mxu0 %v1453
        %1599 = vmatprep.subr.bf16.mxu0 0
        %1600 = vmatpush1.bf16.msra.mxu0 %v1450
        %1601 = vmatprep.subr.bf16.mxu0 0
        %1602 = vmatpush2.bf16.msra.mxu0 %v1495
        %1603 = vmatprep.subr.bf16.mxu0 0
        %1604 = vmatpush2.bf16.msra.mxu0 %v1492
        %1605 = vmatprep.subr.bf16.mxu0 0
        %1606 = vmatpush2.bf16.msra.mxu0 %v1489
        %1607 = vmatprep.subr.bf16.mxu0 0
        %1608 = vmatpush2.bf16.msra.mxu0 %v1486
        %1609 = vmatprep.subr.bf16.mxu0 0
        %1610 = vmatpush2.bf16.msra.mxu0 %v1483
        %1611 = vmatprep.subr.bf16.mxu0 0
        %1612 = vmatpush2.bf16.msra.mxu0 %v1480
        %1613 = vmatprep.subr.bf16.mxu0 0
        %1614 = vmatpush2.bf16.msra.mxu0 %v1477
        %1615 = vmatprep.subr.bf16.mxu0 0
        %1616 = vmatpush2.bf16.msra.mxu0 %v1474
        %1617 = vmatprep.mubr.bf16.mxu0 %v1125
        %1618 = vmatmul.mubr.bf16.gmra.mxu0 %v1124
        %v1619 = vpop.f32.mrf.mxu0
        %v1620 = vadd.f32 %v1269, %v1619
        %v1621 = vpop.f32.mrf.mxu0
        %v1622 = vpop.f32.mrf.mxu0
        %v1623 = vpop.f32.mrf.mxu0
        %1624 = vdwg.mxu0
        %v1689 = vunpack.c.l.b16 %v1190
        %v1690 = vunpack.c.h.b16 %v1190
        %v1691 = vunpack.c.l.b16 %v1191
        %v1692 = vunpack.c.l.b16 %v1192
        %v1693 = vunpack.c.h.b16 %v1192
        %v1694 = vunpack.c.l.b16 %v1193
        %v1695 = vunpack.c.l.b16 %v1194
        %v1696 = vunpack.c.h.b16 %v1194
        %v1697 = vunpack.c.l.b16 %v1195
        %v1698 = vunpack.c.l.b16 %v1196
        %v1699 = vunpack.c.h.b16 %v1196
        %v1700 = vunpack.c.l.b16 %v1197
        %v1701 = vunpack.c.l.b16 %v1198
        %v1702 = vunpack.c.h.b16 %v1198
        %v1703 = vunpack.c.l.b16 %v1199
        %v1704 = vunpack.c.l.b16 %v1200
        %v1705 = vunpack.c.h.b16 %v1200
        %v1706 = vunpack.c.l.b16 %v1201
        %v1707 = vunpack.c.l.b16 %v1202
        %v1708 = vunpack.c.h.b16 %v1202
        %v1709 = vunpack.c.l.b16 %v1203
        %v1710 = vunpack.c.l.b16 %v1204
        %v1711 = vunpack.c.h.b16 %v1204
        %v1712 = vunpack.c.l.b16 %v1205
        %v1713 = vunpack.c.l.b16 %v1206
        %v1714 = vunpack.c.h.b16 %v1206
        %v1715 = vunpack.c.l.b16 %v1207
        %v1716 = vunpack.c.l.b16 %v1208
        %v1717 = vunpack.c.h.b16 %v1208
        %v1718 = vunpack.c.l.b16 %v1209
        %v1719 = vunpack.c.l.b16 %v1210
        %v1720 = vunpack.c.h.b16 %v1210
        %v1721 = vunpack.c.l.b16 %v1211
        %v1722 = vunpack.c.l.b16 %v1212
        %v1723 = vunpack.c.h.b16 %v1212
        %v1724 = vunpack.c.l.b16 %v1213
        %v1725 = vunpack.c.l.b16 %v1214
        %v1726 = vunpack.c.h.b16 %v1214
        %v1727 = vunpack.c.l.b16 %v1215
        %v1728 = vunpack.c.l.b16 %v1216
        %v1729 = vunpack.c.h.b16 %v1216
        %v1730 = vunpack.c.l.b16 %v1217
        %v1731 = vunpack.c.l.b16 %v1218
        %v1732 = vunpack.c.h.b16 %v1218
        %v1733 = vunpack.c.l.b16 %v1219
        %v1734 = vunpack.c.l.b16 %v1220
        %v1735 = vunpack.c.h.b16 %v1220
        %v1736 = vunpack.c.l.b16 %v1221
        %v1737 = vunpack.c.l.b16 %v1222
        %v1738 = vunpack.c.h.b16 %v1222
        %v1739 = vunpack.c.l.b16 %v1223
        %v1740 = vunpack.c.l.b16 %v1224
        %v1741 = vunpack.c.h.b16 %v1224
        %v1742 = vunpack.c.l.b16 %v1225
        %v1743 = vunpack.c.l.b16 %v1226
        %v1744 = vunpack.c.h.b16 %v1226
        %v1745 = vunpack.c.l.b16 %v1227
        %v1746 = vunpack.c.l.b16 %v1228
        %v1747 = vunpack.c.h.b16 %v1228
        %v1748 = vunpack.c.l.b16 %v1229
        %v1749 = vunpack.c.l.b16 %v1230
        %v1750 = vunpack.c.h.b16 %v1230
        %v1751 = vunpack.c.l.b16 %v1231
        %v1752 = vunpack.c.l.b16 %v1232
        %v1753 = vunpack.c.h.b16 %v1232
        %v1754 = vunpack.c.l.b16 %v1233
        %v1755 = vunpack.c.l.b16 %v1234
        %v1756 = vunpack.c.h.b16 %v1234
        %v1757 = vunpack.c.l.b16 %v1235
        %v1758 = vunpack.c.l.b16 %v1236
        %v1759 = vunpack.c.h.b16 %v1236
        %v1760 = vunpack.c.l.b16 %v1237
        %v1761 = vunpack.c.l.b16 %v1238
        %v1762 = vunpack.c.h.b16 %v1238
        %v1763 = vunpack.c.l.b16 %v1239
        %v1764 = vunpack.c.l.b16 %v1240
        %v1765 = vunpack.c.h.b16 %v1240
        %v1766 = vunpack.c.l.b16 %v1241
        %v1767 = vunpack.c.l.b16 %v1242
        %v1768 = vunpack.c.h.b16 %v1242
        %v1769 = vunpack.c.l.b16 %v1243
        %v1770 = vunpack.c.l.b16 %v1244
        %v1771 = vunpack.c.h.b16 %v1244
        %v1772 = vunpack.c.l.b16 %v1245
        %v1773 = vunpack.c.l.b16 %v1246
        %v1774 = vunpack.c.h.b16 %v1246
        %v1775 = vunpack.c.l.b16 %v1247
        %v1776 = vunpack.c.l.b16 %v1248
        %v1777 = vunpack.c.h.b16 %v1248
        %v1778 = vunpack.c.l.b16 %v1249
        %v1779 = vunpack.c.l.b16 %v1250
        %v1780 = vunpack.c.h.b16 %v1250
        %v1781 = vunpack.c.l.b16 %v1251
        %v1782 = vunpack.c.l.b16 %v1252
        %v1783 = vunpack.c.h.b16 %v1252
        %v1784 = vunpack.c.l.b16 %v1253
        %v1785 = vpack.c.b16 %v1692, %v1689
        %v1786 = vpack.c.b16 %v1693, %v1690
        %v1787 = vpack.c.b16 %v1694, %v1691
        %v1788 = vpack.c.b16 %v1698, %v1695
        %v1789 = vpack.c.b16 %v1699, %v1696
        %v1790 = vpack.c.b16 %v1700, %v1697
        %v1791 = vpack.c.b16 %v1704, %v1701
        %v1792 = vpack.c.b16 %v1705, %v1702
        %v1793 = vpack.c.b16 %v1706, %v1703
        %v1794 = vpack.c.b16 %v1710, %v1707
        %v1795 = vpack.c.b16 %v1711, %v1708
        %v1796 = vpack.c.b16 %v1712, %v1709
        %v1797 = vpack.c.b16 %v1716, %v1713
        %v1798 = vpack.c.b16 %v1717, %v1714
        %v1799 = vpack.c.b16 %v1718, %v1715
        %v1800 = vpack.c.b16 %v1722, %v1719
        %v1801 = vpack.c.b16 %v1723, %v1720
        %v1802 = vpack.c.b16 %v1724, %v1721
        %v1803 = vpack.c.b16 %v1728, %v1725
        %v1804 = vpack.c.b16 %v1729, %v1726
        %v1805 = vpack.c.b16 %v1730, %v1727
        %v1806 = vpack.c.b16 %v1734, %v1731
        %v1807 = vpack.c.b16 %v1735, %v1732
        %v1808 = vpack.c.b16 %v1736, %v1733
        %v1809 = vpack.c.b16 %v1740, %v1737
        %v1810 = vpack.c.b16 %v1741, %v1738
        %v1811 = vpack.c.b16 %v1742, %v1739
        %v1812 = vpack.c.b16 %v1746, %v1743
        %v1813 = vpack.c.b16 %v1747, %v1744
        %v1814 = vpack.c.b16 %v1748, %v1745
        %v1815 = vpack.c.b16 %v1752, %v1749
        %v1816 = vpack.c.b16 %v1753, %v1750
        %v1817 = vpack.c.b16 %v1754, %v1751
        %v1818 = vpack.c.b16 %v1758, %v1755
        %v1819 = vpack.c.b16 %v1759, %v1756
        %v1820 = vpack.c.b16 %v1760, %v1757
        %v1821 = vpack.c.b16 %v1764, %v1761
        %v1822 = vpack.c.b16 %v1765, %v1762
        %v1823 = vpack.c.b16 %v1766, %v1763
        %v1824 = vpack.c.b16 %v1770, %v1767
        %v1825 = vpack.c.b16 %v1771, %v1768
        %v1826 = vpack.c.b16 %v1772, %v1769
        %v1827 = vpack.c.b16 %v1776, %v1773
        %v1828 = vpack.c.b16 %v1777, %v1774
        %v1829 = vpack.c.b16 %v1778, %v1775
        %v1830 = vpack.c.b16 %v1782, %v1779
        %v1831 = vpack.c.b16 %v1783, %v1780
        %v1832 = vpack.c.b16 %v1784, %v1781
        %1881 = vmatprep.subr.bf16.mxu0 %v1807
        %1882 = vmatpush1.bf16.msra.mxu0 %v1806
        %1883 = vmatprep.subr.bf16.mxu0 %v1804
        %1884 = vmatpush1.bf16.msra.mxu0 %v1803
        %1885 = vmatprep.subr.bf16.mxu0 %v1801
        %1886 = vmatpush1.bf16.msra.mxu0 %v1800
        %1887 = vmatprep.subr.bf16.mxu0 %v1798
        %1888 = vmatpush1.bf16.msra.mxu0 %v1797
        %1889 = vmatprep.subr.bf16.mxu0 %v1795
        %1890 = vmatpush1.bf16.msra.mxu0 %v1794
        %1891 = vmatprep.subr.bf16.mxu0 %v1792
        %1892 = vmatpush1.bf16.msra.mxu0 %v1791
        %1893 = vmatprep.subr.bf16.mxu0 %v1789
        %1894 = vmatpush1.bf16.msra.mxu0 %v1788
        %1895 = vmatprep.subr.bf16.mxu0 %v1786
        %1896 = vmatpush1.bf16.msra.mxu0 %v1785
        %1897 = vmatprep.subr.bf16.mxu0 %v1831
        %1898 = vmatpush2.bf16.msra.mxu0 %v1830
        %1899 = vmatprep.subr.bf16.mxu0 %v1828
        %1900 = vmatpush2.bf16.msra.mxu0 %v1827
        %1901 = vmatprep.subr.bf16.mxu0 %v1825
        %1902 = vmatpush2.bf16.msra.mxu0 %v1824
        %1903 = vmatprep.subr.bf16.mxu0 %v1822
        %1904 = vmatpush2.bf16.msra.mxu0 %v1821
        %1905 = vmatprep.subr.bf16.mxu0 %v1819
        %1906 = vmatpush2.bf16.msra.mxu0 %v1818
        %1907 = vmatprep.subr.bf16.mxu0 %v1816
        %1908 = vmatpush2.bf16.msra.mxu0 %v1815
        %1909 = vmatprep.subr.bf16.mxu0 %v1813
        %1910 = vmatpush2.bf16.msra.mxu0 %v1812
        %1911 = vmatprep.subr.bf16.mxu0 %v1810
        %1912 = vmatpush2.bf16.msra.mxu0 %v1809
        %1913 = vmatprep.mubr.bf16.mxu0 %v1125
        %1914 = vmatmul.mubr.bf16.gmra.mxu0 %v1124
        %v1915 = vpop.f32.mrf.mxu0
        %v1916 = vadd.f32 %v1273, %v1915
        %v1917 = vpop.f32.mrf.mxu0
        %v1918 = vadd.f32 %v1277, %v1917
        %v1919 = vpop.f32.mrf.mxu0
        %v1920 = vpop.f32.mrf.mxu0
        %1921 = vdwg.mxu0
        %1922 = vmatprep.subr.bf16.mxu0 0
        %1923 = vmatpush1.bf16.msra.mxu0 %v1808
        %1924 = vmatprep.subr.bf16.mxu0 0
        %1925 = vmatpush1.bf16.msra.mxu0 %v1805
        %1926 = vmatprep.subr.bf16.mxu0 0
        %1927 = vmatpush1.bf16.msra.mxu0 %v1802
        %1928 = vmatprep.subr.bf16.mxu0 0
        %1929 = vmatpush1.bf16.msra.mxu0 %v1799
        %1930 = vmatprep.subr.bf16.mxu0 0
        %1931 = vmatpush1.bf16.msra.mxu0 %v1796
        %1932 = vmatprep.subr.bf16.mxu0 0
        %1933 = vmatpush1.bf16.msra.mxu0 %v1793
        %1934 = vmatprep.subr.bf16.mxu0 0
        %1935 = vmatpush1.bf16.msra.mxu0 %v1790
        %1936 = vmatprep.subr.bf16.mxu0 0
        %1937 = vmatpush1.bf16.msra.mxu0 %v1787
        %1938 = vmatprep.subr.bf16.mxu0 0
        %1939 = vmatpush2.bf16.msra.mxu0 %v1832
        %1940 = vmatprep.subr.bf16.mxu0 0
        %1941 = vmatpush2.bf16.msra.mxu0 %v1829
        %1942 = vmatprep.subr.bf16.mxu0 0
        %1943 = vmatpush2.bf16.msra.mxu0 %v1826
        %1944 = vmatprep.subr.bf16.mxu0 0
        %1945 = vmatpush2.bf16.msra.mxu0 %v1823
        %1946 = vmatprep.subr.bf16.mxu0 0
        %1947 = vmatpush2.bf16.msra.mxu0 %v1820
        %1948 = vmatprep.subr.bf16.mxu0 0
        %1949 = vmatpush2.bf16.msra.mxu0 %v1817
        %1950 = vmatprep.subr.bf16.mxu0 0
        %1951 = vmatpush2.bf16.msra.mxu0 %v1814
        %1952 = vmatprep.subr.bf16.mxu0 0
        %1953 = vmatpush2.bf16.msra.mxu0 %v1811
        %1954 = vmatprep.mubr.bf16.mxu0 %v1125
        %1955 = vmatmul.mubr.bf16.gmra.mxu0 %v1124
        %v1956 = vpop.f32.mrf.mxu0
        %v1957 = vadd.f32 %v1281, %v1956
        %v1958 = vpop.f32.mrf.mxu0
        %v1959 = vpop.f32.mrf.mxu0
        %v1960 = vpop.f32.mrf.mxu0
        %1961 = vdwg.mxu0
        %v1962 = vpack.c.bf16 %v1579, %v1579
        %v1963 = vpack.c.bf16 %v1916, %v1916
        %v1964 = vpack.c.bf16 %v1581, %v1581
        %v1965 = vpack.c.bf16 %v1918, %v1918
        %1966 = vmatprep.subr.bf16.mxu0 0
        %1967 = vmatpush1.bf16.xpose.msra.mxu0 0
        %1968 = vmatprep.subr.bf16.mxu0 0
        %1969 = vmatpush1.bf16.xpose.msra.mxu0 0
        %1970 = vmatprep.subr.bf16.mxu0 0
        %1971 = vmatpush1.bf16.xpose.msra.mxu0 0
        %1972 = vmatprep.subr.bf16.mxu0 0
        %1973 = vmatpush1.bf16.xpose.msra.mxu0 0
        %1974 = vmatprep.subr.bf16.mxu0 0
        %1975 = vmatpush1.bf16.xpose.msra.mxu0 0
        %1976 = vmatprep.subr.bf16.mxu0 0
        %1977 = vmatpush1.bf16.xpose.msra.mxu0 0
        %1978 = vmatprep.subr.bf16.mxu0 0
        %1979 = vmatpush1.bf16.xpose.msra.mxu0 0
        %1980 = vmatprep.subr.bf16.mxu0 0
        %1981 = vmatpush1.bf16.xpose.msra.mxu0 %v1964
        %1982 = vmatprep.subr.bf16.mxu0 0
        %1983 = vmatpush2.bf16.xpose.msra.mxu0 0
        %1984 = vmatprep.subr.bf16.mxu0 0
        %1985 = vmatpush2.bf16.xpose.msra.mxu0 0
        %1986 = vmatprep.subr.bf16.mxu0 0
        %1987 = vmatpush2.bf16.xpose.msra.mxu0 0
        %1988 = vmatprep.subr.bf16.mxu0 0
        %1989 = vmatpush2.bf16.xpose.msra.mxu0 0
        %1990 = vmatprep.subr.bf16.mxu0 0
        %1991 = vmatpush2.bf16.xpose.msra.mxu0 0
        %1992 = vmatprep.subr.bf16.mxu0 0
        %1993 = vmatpush2.bf16.xpose.msra.mxu0 0
        %1994 = vmatprep.subr.bf16.mxu0 0
        %1995 = vmatpush2.bf16.xpose.msra.mxu0 0
        %1996 = vmatprep.subr.bf16.mxu0 0
        %1997 = vmatpush2.bf16.xpose.msra.mxu0 0
        %1998 = vmatprep.mubr.bf16.mxu0 0
        %1999 = vmatmul.mubr.bf16.gmra.mxu0 %v1962
        %v2000 = vpop.f32.mrf.mxu0
        %v2001 = vadd.f32 0.0, %v2000
        %v2002 = vpop.f32.mrf.mxu0
        %v2003 = vpop.f32.mrf.mxu0
        %v2004 = vpop.f32.mrf.mxu0
        %2005 = vdwg.mxu0
        %2006 = vmatprep.subr.bf16.mxu0 0
        %2007 = vmatpush1.bf16.xpose.msra.mxu0 0
        %2008 = vmatprep.subr.bf16.mxu0 0
        %2009 = vmatpush1.bf16.xpose.msra.mxu0 0
        %2010 = vmatprep.subr.bf16.mxu0 0
        %2011 = vmatpush1.bf16.xpose.msra.mxu0 0
        %2012 = vmatprep.subr.bf16.mxu0 0
        %2013 = vmatpush1.bf16.xpose.msra.mxu0 0
        %2014 = vmatprep.subr.bf16.mxu0 0
        %2015 = vmatpush1.bf16.xpose.msra.mxu0 0
        %2016 = vmatprep.subr.bf16.mxu0 0
        %2017 = vmatpush1.bf16.xpose.msra.mxu0 0
        %2018 = vmatprep.subr.bf16.mxu0 0
        %2019 = vmatpush1.bf16.xpose.msra.mxu0 0
        %2020 = vmatprep.subr.bf16.mxu0 0
        %2021 = vmatpush1.bf16.xpose.msra.mxu0 %v1965
        %2022 = vmatprep.subr.bf16.mxu0 0
        %2023 = vmatpush2.bf16.xpose.msra.mxu0 0
        %2024 = vmatprep.subr.bf16.mxu0 0
        %2025 = vmatpush2.bf16.xpose.msra.mxu0 0
        %2026 = vmatprep.subr.bf16.mxu0 0
        %2027 = vmatpush2.bf16.xpose.msra.mxu0 0
        %2028 = vmatprep.subr.bf16.mxu0 0
        %2029 = vmatpush2.bf16.xpose.msra.mxu0 0
        %2030 = vmatprep.subr.bf16.mxu0 0
        %2031 = vmatpush2.bf16.xpose.msra.mxu0 0
        %2032 = vmatprep.subr.bf16.mxu0 0
        %2033 = vmatpush2.bf16.xpose.msra.mxu0 0
        %2034 = vmatprep.subr.bf16.mxu0 0
        %2035 = vmatpush2.bf16.xpose.msra.mxu0 0
        %2036 = vmatprep.subr.bf16.mxu0 0
        %2037 = vmatpush2.bf16.xpose.msra.mxu0 0
        %2038 = vmatprep.mubr.bf16.mxu0 0
        %2039 = vmatmul.mubr.bf16.gmra.mxu0 %v1963
        %v2040 = vpop.f32.mrf.mxu0
        %v2041 = vadd.f32 0.0, %v2040
        %v2042 = vpop.f32.mrf.mxu0
        %v2043 = vpop.f32.mrf.mxu0
        %v2044 = vpop.f32.mrf.mxu0
        %2045 = vdwg.mxu0
        %v2046 = vmul.f32 %v2001, 0.088388346
        %v2047 = vmul.f32 %v2041, 0.088388346
        %v2048 = vld [vmem:[%s2] sm:$0xff]
        %v2049 = vadd.f32 %v2046, %v2048
        %v2050 = vadd.f32 %v2047, %v2048
        %vm2051 = vcmask 64512
        %v2052 = vsel %vm2051, %v2049, -inf
        %2053 = vmax.xlane.f32.xlu0 %v2052
        %v2054 = vpop.xlane.xlu0 %2053
        %v2055 = vsel %vm2051, %v2050, -inf
        %2056 = vmax.xlane.f32.xlu0 %v2055
        %v2057 = vpop.xlane.xlu0 %2056
        %v2058 = vsub.f32 %v2049, %v2054
        %v2059 = vsub.f32 %v2050, %v2057
        %v2060 = vmul.f32 %v2058, 1.442695
        %v2061 = vpow.pop %v2060
        %v2062 = vmul.f32 %v2059, 1.442695
        %v2063 = vpow.pop %v2062
        %v2064 = vsel %vm2051, %v2061, 0.0
        %2065 = vadd.xlane.f32.xlu0 %v2064
        %v2066 = vpop.xlane.xlu0 %2065
        %v2067 = vsel %vm2051, %v2063, 0.0
        %2068 = vadd.xlane.f32.xlu0 %v2067
        %v2069 = vpop.xlane.xlu0 %2068
        %v2070 = vrcp.pop %v2066
        %v2071 = vrcp.pop %v2069
        %v2072 = vmul.f32 %v2061, %v2070
        %v2073 = vmul.f32 %v2063, %v2071
        %v2074 = vpack.c.bf16 %v2072, %v2072
        %v2075 = vpack.c.bf16 %v2073, %v2073
        %v2076 = vpack.c.bf16 %v1620, %v1620
        %v2077 = vpack.c.bf16 %v1957, %v1957
        %v2079 = vsel %vm2051, %v2074, 0
        %vm2081 = vcmask 1043456
        %v2083 = vsel %vm2081, %v2076, 0
        %2085 = vmatprep.subr.bf16.mxu0 0
        %2086 = vmatpush1.bf16.msra.mxu0 0
        %2087 = vmatprep.subr.bf16.mxu0 0
        %2088 = vmatpush1.bf16.msra.mxu0 0
        %2089 = vmatprep.subr.bf16.mxu0 0
        %2090 = vmatpush1.bf16.msra.mxu0 0
        %2091 = vmatprep.subr.bf16.mxu0 0
        %2092 = vmatpush1.bf16.msra.mxu0 0
        %2093 = vmatprep.subr.bf16.mxu0 0
        %2094 = vmatpush1.bf16.msra.mxu0 0
        %2095 = vmatprep.subr.bf16.mxu0 0
        %2096 = vmatpush1.bf16.msra.mxu0 0
        %2097 = vmatprep.subr.bf16.mxu0 0
        %2098 = vmatpush1.bf16.msra.mxu0 0
        %2099 = vmatprep.subr.bf16.mxu0 0
        %2100 = vmatpush1.bf16.msra.mxu0 %v2083
        %2101 = vmatprep.subr.bf16.mxu0 0
        %2102 = vmatpush2.bf16.msra.mxu0 0
        %2103 = vmatprep.subr.bf16.mxu0 0
        %2104 = vmatpush2.bf16.msra.mxu0 0
        %2105 = vmatprep.subr.bf16.mxu0 0
        %2106 = vmatpush2.bf16.msra.mxu0 0
        %2107 = vmatprep.subr.bf16.mxu0 0
        %2108 = vmatpush2.bf16.msra.mxu0 0
        %2109 = vmatprep.subr.bf16.mxu0 0
        %2110 = vmatpush2.bf16.msra.mxu0 0
        %2111 = vmatprep.subr.bf16.mxu0 0
        %2112 = vmatpush2.bf16.msra.mxu0 0
        %2113 = vmatprep.subr.bf16.mxu0 0
        %2114 = vmatpush2.bf16.msra.mxu0 0
        %2115 = vmatprep.subr.bf16.mxu0 0
        %2116 = vmatpush2.bf16.msra.mxu0 0
        %2117 = vmatprep.mubr.bf16.mxu0 0
        %2118 = vmatmul.mubr.bf16.gmra.mxu0 %v2079
        %v2119 = vpop.f32.mrf.mxu0
        %v2120 = vadd.f32 0.0, %v2119
        %v2121 = vpop.f32.mrf.mxu0
        %v2122 = vpop.f32.mrf.mxu0
        %v2123 = vpop.f32.mrf.mxu0
        %2124 = vdwg.mxu0
        %v2126 = vsel %vm2051, %v2075, 0
        %v2129 = vsel %vm2081, %v2077, 0
        %2131 = vmatprep.subr.bf16.mxu0 0
        %2132 = vmatpush1.bf16.msra.mxu0 0
        %2133 = vmatprep.subr.bf16.mxu0 0
        %2134 = vmatpush1.bf16.msra.mxu0 0
        %2135 = vmatprep.subr.bf16.mxu0 0
        %2136 = vmatpush1.bf16.msra.mxu0 0
        %2137 = vmatprep.subr.bf16.mxu0 0
        %2138 = vmatpush1.bf16.msra.mxu0 0
        %2139 = vmatprep.subr.bf16.mxu0 0
        %2140 = vmatpush1.bf16.msra.mxu0 0
        %2141 = vmatprep.subr.bf16.mxu0 0
        %2142 = vmatpush1.bf16.msra.mxu0 0
        %2143 = vmatprep.subr.bf16.mxu0 0
        %2144 = vmatpush1.bf16.msra.mxu0 0
        %2145 = vmatprep.subr.bf16.mxu0 0
        %2146 = vmatpush1.bf16.msra.mxu0 %v2129
        %2147 = vmatprep.subr.bf16.mxu0 0
        %2148 = vmatpush2.bf16.msra.mxu0 0
        %2149 = vmatprep.subr.bf16.mxu0 0
        %2150 = vmatpush2.bf16.msra.mxu0 0
        %2151 = vmatprep.subr.bf16.mxu0 0
        %2152 = vmatpush2.bf16.msra.mxu0 0
        %2153 = vmatprep.subr.bf16.mxu0 0
        %2154 = vmatpush2.bf16.msra.mxu0 0
        %2155 = vmatprep.subr.bf16.mxu0 0
        %2156 = vmatpush2.bf16.msra.mxu0 0
        %2157 = vmatprep.subr.bf16.mxu0 0
        %2158 = vmatpush2.bf16.msra.mxu0 0
        %2159 = vmatprep.subr.bf16.mxu0 0
        %2160 = vmatpush2.bf16.msra.mxu0 0
        %2161 = vmatprep.subr.bf16.mxu0 0
        %2162 = vmatpush2.bf16.msra.mxu0 0
        %2163 = vmatprep.mubr.bf16.mxu0 0
        %2164 = vmatmul.mubr.bf16.gmra.mxu0 %v2126
        %v2165 = vpop.f32.mrf.mxu0
        %v2166 = vadd.f32 0.0, %v2165
        %v2167 = vpop.f32.mrf.mxu0
        %v2168 = vpop.f32.mrf.mxu0
        %v2169 = vpop.f32.mrf.mxu0
        %2170 = vdwg.mxu0
        %v2171 = vpack.c.bf16 %v2120, %v2120
        %v2172 = vpack.c.bf16 %v2166, %v2166
        %v2173 = vld [vmem:[%s864] sm:$0xff]
        %v2174 = vld [vmem:[%s864 + $0x8] sm:$0xff]
        %v2175 = vld [vmem:[%s864 + $0x10] sm:$0xff]
        %v2176 = vld [vmem:[%s864 + $0x18] sm:$0xff]
        %v2177 = vld [vmem:[%s864 + $0x20] sm:$0xff]
        %v2178 = vld [vmem:[%s864 + $0x28] sm:$0xff]
        %v2179 = vld [vmem:[%s864 + $0x30] sm:$0xff]
        %v2180 = vld [vmem:[%s864 + $0x38] sm:$0xff]
        %v2181 = vld [vmem:[%s864 + $0x40] sm:$0xff]
        %v2182 = vld [vmem:[%s864 + $0x48] sm:$0xff]
        %v2183 = vld [vmem:[%s864 + $0x50] sm:$0xff]
        %v2184 = vld [vmem:[%s864 + $0x58] sm:$0xff]
        %v2185 = vld [vmem:[%s864 + $0x60] sm:$0xff]
        %v2186 = vld [vmem:[%s864 + $0x68] sm:$0xff]
        %v2187 = vld [vmem:[%s864 + $0x70] sm:$0xff]
        %v2188 = vld [vmem:[%s864 + $0x78] sm:$0xff]
        %v2189 = vld [vmem:[%s864 + $0x80] sm:$0xff]
        %v2190 = vld [vmem:[%s864 + $0x88] sm:$0xff]
        %v2191 = vld [vmem:[%s864 + $0x90] sm:$0xff]
        %v2192 = vld [vmem:[%s864 + $0x98] sm:$0xff]
        %v2193 = vld [vmem:[%s864 + $0xa0] sm:$0xff]
        %v2194 = vld [vmem:[%s864 + $0xa8] sm:$0xff]
        %v2195 = vld [vmem:[%s864 + $0xb0] sm:$0xff]
        %v2196 = vld [vmem:[%s864 + $0xb8] sm:$0xff]
        %v2197 = vld [vmem:[%s864 + $0xc0] sm:$0xff]
        %v2198 = vld [vmem:[%s864 + $0xc8] sm:$0xff]
        %v2199 = vld [vmem:[%s864 + $0xd0] sm:$0xff]
        %v2200 = vld [vmem:[%s864 + $0xd8] sm:$0xff]
        %v2201 = vld [vmem:[%s864 + $0xe0] sm:$0xff]
        %v2202 = vld [vmem:[%s864 + $0xe8] sm:$0xff]
        %v2203 = vld [vmem:[%s864 + $0xf0] sm:$0xff]
        %v2204 = vld [vmem:[%s864 + $0xf8] sm:$0xff]
        %v2221 = vunpack.c.l.b16 %v2173
        %v2222 = vunpack.c.h.b16 %v2173
        %v2223 = vunpack.c.l.b16 %v2174
        %v2224 = vunpack.c.h.b16 %v2174
        %v2225 = vunpack.c.l.b16 %v2175
        %v2226 = vunpack.c.h.b16 %v2175
        %v2227 = vunpack.c.l.b16 %v2176
        %v2228 = vunpack.c.h.b16 %v2176
        %v2229 = vunpack.c.l.b16 %v2177
        %v2230 = vunpack.c.h.b16 %v2177
        %v2231 = vunpack.c.l.b16 %v2178
        %v2232 = vunpack.c.h.b16 %v2178
        %v2233 = vunpack.c.l.b16 %v2179
        %v2234 = vunpack.c.h.b16 %v2179
        %v2235 = vunpack.c.l.b16 %v2180
        %v2236 = vunpack.c.h.b16 %v2180
        %v2237 = vunpack.c.l.b16 %v2181
        %v2238 = vunpack.c.h.b16 %v2181
        %v2239 = vunpack.c.l.b16 %v2182
        %v2240 = vunpack.c.h.b16 %v2182
        %v2241 = vunpack.c.l.b16 %v2183
        %v2242 = vunpack.c.h.b16 %v2183
        %v2243 = vunpack.c.l.b16 %v2184
        %v2244 = vunpack.c.h.b16 %v2184
        %v2245 = vunpack.c.l.b16 %v2185
        %v2246 = vunpack.c.h.b16 %v2185
        %v2247 = vunpack.c.l.b16 %v2186
        %v2248 = vunpack.c.h.b16 %v2186
        %v2249 = vunpack.c.l.b16 %v2187
        %v2250 = vunpack.c.h.b16 %v2187
        %v2251 = vunpack.c.l.b16 %v2188
        %v2252 = vunpack.c.h.b16 %v2188
        %v2253 = vpack.c.b16 %v2223, %v2221
        %v2254 = vpack.c.b16 %v2224, %v2222
        %v2255 = vpack.c.b16 %v2227, %v2225
        %v2256 = vpack.c.b16 %v2228, %v2226
        %v2257 = vpack.c.b16 %v2231, %v2229
        %v2258 = vpack.c.b16 %v2232, %v2230
        %v2259 = vpack.c.b16 %v2235, %v2233
        %v2260 = vpack.c.b16 %v2236, %v2234
        %v2261 = vpack.c.b16 %v2239, %v2237
        %v2262 = vpack.c.b16 %v2240, %v2238
        %v2263 = vpack.c.b16 %v2243, %v2241
        %v2264 = vpack.c.b16 %v2244, %v2242
        %v2265 = vpack.c.b16 %v2247, %v2245
        %v2266 = vpack.c.b16 %v2248, %v2246
        %v2267 = vpack.c.b16 %v2251, %v2249
        %v2268 = vpack.c.b16 %v2252, %v2250
        %2285 = vmatprep.subr.bf16.mxu0 %v2268
        %2286 = vmatpush1.bf16.msra.mxu0 %v2267
        %2287 = vmatprep.subr.bf16.mxu0 %v2266
        %2288 = vmatpush1.bf16.msra.mxu0 %v2265
        %2289 = vmatprep.subr.bf16.mxu0 %v2264
        %2290 = vmatpush1.bf16.msra.mxu0 %v2263
        %2291 = vmatprep.subr.bf16.mxu0 %v2262
        %2292 = vmatpush1.bf16.msra.mxu0 %v2261
        %2293 = vmatprep.subr.bf16.mxu0 %v2260
        %2294 = vmatpush1.bf16.msra.mxu0 %v2259
        %2295 = vmatprep.subr.bf16.mxu0 %v2258
        %2296 = vmatpush1.bf16.msra.mxu0 %v2257
        %2297 = vmatprep.subr.bf16.mxu0 %v2256
        %2298 = vmatpush1.bf16.msra.mxu0 %v2255
        %2299 = vmatprep.subr.bf16.mxu0 %v2254
        %2300 = vmatpush1.bf16.msra.mxu0 %v2253
        %2301 = vmatprep.subr.bf16.mxu0 0
        %2302 = vmatpush2.bf16.msra.mxu0 0
        %2303 = vmatprep.subr.bf16.mxu0 0
        %2304 = vmatpush2.bf16.msra.mxu0 0
        %2305 = vmatprep.subr.bf16.mxu0 0
        %2306 = vmatpush2.bf16.msra.mxu0 0
        %2307 = vmatprep.subr.bf16.mxu0 0
        %2308 = vmatpush2.bf16.msra.mxu0 0
        %2309 = vmatprep.subr.bf16.mxu0 0
        %2310 = vmatpush2.bf16.msra.mxu0 0
        %2311 = vmatprep.subr.bf16.mxu0 0
        %2312 = vmatpush2.bf16.msra.mxu0 0
        %2313 = vmatprep.subr.bf16.mxu0 0
        %2314 = vmatpush2.bf16.msra.mxu0 0
        %2315 = vmatprep.subr.bf16.mxu0 0
        %2316 = vmatpush2.bf16.msra.mxu0 0
        %2317 = vmatprep.mubr.bf16.mxu0 0
        %2318 = vmatmul.mubr.bf16.gmra.mxu0 %v2171
        %v2319 = vpop.f32.mrf.mxu0
        %v2320 = vadd.f32 0.0, %v2319
        %v2321 = vpop.f32.mrf.mxu0
        %v2322 = vadd.f32 0.0, %v2321
        %v2323 = vpop.f32.mrf.mxu0
        %v2324 = vpop.f32.mrf.mxu0
        %2325 = vdwg.mxu0
        %v2342 = vunpack.c.l.b16 %v2189
        %v2343 = vunpack.c.h.b16 %v2189
        %v2344 = vunpack.c.l.b16 %v2190
        %v2345 = vunpack.c.h.b16 %v2190
        %v2346 = vunpack.c.l.b16 %v2191
        %v2347 = vunpack.c.h.b16 %v2191
        %v2348 = vunpack.c.l.b16 %v2192
        %v2349 = vunpack.c.h.b16 %v2192
        %v2350 = vunpack.c.l.b16 %v2193
        %v2351 = vunpack.c.h.b16 %v2193
        %v2352 = vunpack.c.l.b16 %v2194
        %v2353 = vunpack.c.h.b16 %v2194
        %v2354 = vunpack.c.l.b16 %v2195
        %v2355 = vunpack.c.h.b16 %v2195
        %v2356 = vunpack.c.l.b16 %v2196
        %v2357 = vunpack.c.h.b16 %v2196
        %v2358 = vunpack.c.l.b16 %v2197
        %v2359 = vunpack.c.h.b16 %v2197
        %v2360 = vunpack.c.l.b16 %v2198
        %v2361 = vunpack.c.h.b16 %v2198
        %v2362 = vunpack.c.l.b16 %v2199
        %v2363 = vunpack.c.h.b16 %v2199
        %v2364 = vunpack.c.l.b16 %v2200
        %v2365 = vunpack.c.h.b16 %v2200
        %v2366 = vunpack.c.l.b16 %v2201
        %v2367 = vunpack.c.h.b16 %v2201
        %v2368 = vunpack.c.l.b16 %v2202
        %v2369 = vunpack.c.h.b16 %v2202
        %v2370 = vunpack.c.l.b16 %v2203
        %v2371 = vunpack.c.h.b16 %v2203
        %v2372 = vunpack.c.l.b16 %v2204
        %v2373 = vunpack.c.h.b16 %v2204
        %v2374 = vpack.c.b16 %v2344, %v2342
        %v2375 = vpack.c.b16 %v2345, %v2343
        %v2376 = vpack.c.b16 %v2348, %v2346
        %v2377 = vpack.c.b16 %v2349, %v2347
        %v2378 = vpack.c.b16 %v2352, %v2350
        %v2379 = vpack.c.b16 %v2353, %v2351
        %v2380 = vpack.c.b16 %v2356, %v2354
        %v2381 = vpack.c.b16 %v2357, %v2355
        %v2382 = vpack.c.b16 %v2360, %v2358
        %v2383 = vpack.c.b16 %v2361, %v2359
        %v2384 = vpack.c.b16 %v2364, %v2362
        %v2385 = vpack.c.b16 %v2365, %v2363
        %v2386 = vpack.c.b16 %v2368, %v2366
        %v2387 = vpack.c.b16 %v2369, %v2367
        %v2388 = vpack.c.b16 %v2372, %v2370
        %v2389 = vpack.c.b16 %v2373, %v2371
        %2406 = vmatprep.subr.bf16.mxu0 %v2389
        %2407 = vmatpush1.bf16.msra.mxu0 %v2388
        %2408 = vmatprep.subr.bf16.mxu0 %v2387
        %2409 = vmatpush1.bf16.msra.mxu0 %v2386
        %2410 = vmatprep.subr.bf16.mxu0 %v2385
        %2411 = vmatpush1.bf16.msra.mxu0 %v2384
        %2412 = vmatprep.subr.bf16.mxu0 %v2383
        %2413 = vmatpush1.bf16.msra.mxu0 %v2382
        %2414 = vmatprep.subr.bf16.mxu0 %v2381
        %2415 = vmatpush1.bf16.msra.mxu0 %v2380
        %2416 = vmatprep.subr.bf16.mxu0 %v2379
        %2417 = vmatpush1.bf16.msra.mxu0 %v2378
        %2418 = vmatprep.subr.bf16.mxu0 %v2377
        %2419 = vmatpush1.bf16.msra.mxu0 %v2376
        %2420 = vmatprep.subr.bf16.mxu0 %v2375
        %2421 = vmatpush1.bf16.msra.mxu0 %v2374
        %2422 = vmatprep.subr.bf16.mxu0 0
        %2423 = vmatpush2.bf16.msra.mxu0 0
        %2424 = vmatprep.subr.bf16.mxu0 0
        %2425 = vmatpush2.bf16.msra.mxu0 0
        %2426 = vmatprep.subr.bf16.mxu0 0
        %2427 = vmatpush2.bf16.msra.mxu0 0
        %2428 = vmatprep.subr.bf16.mxu0 0
        %2429 = vmatpush2.bf16.msra.mxu0 0
        %2430 = vmatprep.subr.bf16.mxu0 0
        %2431 = vmatpush2.bf16.msra.mxu0 0
        %2432 = vmatprep.subr.bf16.mxu0 0
        %2433 = vmatpush2.bf16.msra.mxu0 0
        %2434 = vmatprep.subr.bf16.mxu0 0
        %2435 = vmatpush2.bf16.msra.mxu0 0
        %2436 = vmatprep.subr.bf16.mxu0 0
        %2437 = vmatpush2.bf16.msra.mxu0 0
        %2438 = vmatprep.mubr.bf16.mxu0 0
        %2439 = vmatmul.mubr.bf16.gmra.mxu0 %v2172
        %v2440 = vpop.f32.mrf.mxu0
        %v2441 = vadd.f32 0.0, %v2440
        %v2442 = vpop.f32.mrf.mxu0
        %v2443 = vadd.f32 0.0, %v2442
        %v2444 = vpop.f32.mrf.mxu0
        %v2445 = vpop.f32.mrf.mxu0
        %2446 = vdwg.mxu0
        %v2447 = vadd.f32 %v2320, %v2441
        %v2448 = vadd.f32 %v2322, %v2443
        %v2449 = vld [vmem:[%s873] sm:$0x3]
        %v2451 = vlaneseq
        %v2452 = vshrl.u32 %v2451, 7
        %v2453 = vsub.s32 0, %v2452
        %v2454 = vrot.slane %v2449, %v2453
        %v2455 = vlaneseq
        %v2456 = vshrl.u32 %v2455, 7
        %v2457 = vsub.s32 1, %v2456
        %v2458 = vrot.slane %v2449, %v2457
        %v2461 = vadd.f32 %v2447, %v2454
        %v2462 = vadd.f32 %v2448, %v2458
        %v2463 = vadd.f32 %v1077, %v2461
        %v2464 = vadd.f32 %v1078, %v2462
        %v2465 = vld [vmem:[%s882] sm:$0x3]
        %v2466 = vld [vmem:[%s891] sm:$0x3]
        %v2467 = vadd.f32 %v2463, %v2464
        %2468 = vadd.xlane.f32.xlu0 %v2467
        %v2469 = vpop.xlane.xlu0 %2468
        %v2470 = vmul.f32 %v2469, %v1084
        %v2471 = vsub.f32 %v2463, %v2470
        %v2472 = vsub.f32 %v2464, %v2470
        %v2473 = vmul.f32 %v2471, %v2471
        %v2474 = vmul.f32 %v2472, %v2472
        %v2475 = vadd.f32 %v2473, %v2474
        %2476 = vadd.xlane.f32.xlu0 %v2475
        %v2477 = vpop.xlane.xlu0 %2476
        %v2478 = vmul.f32 %v2477, %v1084
        %v2479 = vadd.f32 %v2478, 1e-05
        %v2480 = vrsqrt.pop %v2479
        %v2481 = vmul.f32 %v2471, %v2480
        %v2482 = vmul.f32 %v2472, %v2480
        %v2484 = vlaneseq
        %v2485 = vshrl.u32 %v2484, 7
        %v2486 = vsub.s32 0, %v2485
        %v2487 = vrot.slane %v2465, %v2486
        %v2488 = vlaneseq
        %v2489 = vshrl.u32 %v2488, 7
        %v2490 = vsub.s32 1, %v2489
        %v2491 = vrot.slane %v2465, %v2490
        %v2494 = vmul.f32 %v2481, %v2487
        %v2495 = vmul.f32 %v2482, %v2491
        %v2497 = vlaneseq
        %v2498 = vshrl.u32 %v2497, 7
        %v2499 = vsub.s32 0, %v2498
        %v2500 = vrot.slane %v2466, %v2499
        %v2501 = vlaneseq
        %v2502 = vshrl.u32 %v2501, 7
        %v2503 = vsub.s32 1, %v2502
        %v2504 = vrot.slane %v2466, %v2503
        %v2507 = vadd.f32 %v2494, %v2500
        %v2508 = vadd.f32 %v2495, %v2504
        %v2509 = vpack.c.bf16 %v2507, %v2507
        %v2510 = vpack.c.bf16 %v2508, %v2508
        %v2511 = vld [vmem:[%s1051] sm:$0xff]
        %v2512 = vld [vmem:[%s1051 + $0x8] sm:$0xff]
        %v2513 = vld [vmem:[%s1051 + $0x10] sm:$0xff]
        %v2514 = vld [vmem:[%s1051 + $0x18] sm:$0xff]
        %v2515 = vld [vmem:[%s1051 + $0x20] sm:$0xff]
        %v2516 = vld [vmem:[%s1051 + $0x28] sm:$0xff]
        %v2517 = vld [vmem:[%s1051 + $0x30] sm:$0xff]
        %v2518 = vld [vmem:[%s1051 + $0x38] sm:$0xff]
        %v2519 = vld [vmem:[%s1051 + $0x40] sm:$0xff]
        %v2520 = vld [vmem:[%s1051 + $0x48] sm:$0xff]
        %v2521 = vld [vmem:[%s1051 + $0x50] sm:$0xff]
        %v2522 = vld [vmem:[%s1051 + $0x58] sm:$0xff]
        %v2523 = vld [vmem:[%s1051 + $0x60] sm:$0xff]
        %v2524 = vld [vmem:[%s1051 + $0x68] sm:$0xff]
        %v2525 = vld [vmem:[%s1051 + $0x70] sm:$0xff]
        %v2526 = vld [vmem:[%s1051 + $0x78] sm:$0xff]
        %v2527 = vld [vmem:[%s1051 + $0x80] sm:$0xff]
        %v2528 = vld [vmem:[%s1051 + $0x88] sm:$0xff]
        %v2529 = vld [vmem:[%s1051 + $0x90] sm:$0xff]
        %v2530 = vld [vmem:[%s1051 + $0x98] sm:$0xff]
        %v2531 = vld [vmem:[%s1051 + $0xa0] sm:$0xff]
        %v2532 = vld [vmem:[%s1051 + $0xa8] sm:$0xff]
        %v2533 = vld [vmem:[%s1051 + $0xb0] sm:$0xff]
        %v2534 = vld [vmem:[%s1051 + $0xb8] sm:$0xff]
        %v2535 = vld [vmem:[%s1051 + $0xc0] sm:$0xff]
        %v2536 = vld [vmem:[%s1051 + $0xc8] sm:$0xff]
        %v2537 = vld [vmem:[%s1051 + $0xd0] sm:$0xff]
        %v2538 = vld [vmem:[%s1051 + $0xd8] sm:$0xff]
        %v2539 = vld [vmem:[%s1051 + $0xe0] sm:$0xff]
        %v2540 = vld [vmem:[%s1051 + $0xe8] sm:$0xff]
        %v2541 = vld [vmem:[%s1051 + $0xf0] sm:$0xff]
        %v2542 = vld [vmem:[%s1051 + $0xf8] sm:$0xff]
        %v2543 = vld [vmem:[%s1051 + $0x100] sm:$0xff]
        %v2544 = vld [vmem:[%s1051 + $0x108] sm:$0xff]
        %v2545 = vld [vmem:[%s1051 + $0x110] sm:$0xff]
        %v2546 = vld [vmem:[%s1051 + $0x118] sm:$0xff]
        %v2547 = vld [vmem:[%s1051 + $0x120] sm:$0xff]
        %v2548 = vld [vmem:[%s1051 + $0x128] sm:$0xff]
        %v2549 = vld [vmem:[%s1051 + $0x130] sm:$0xff]
        %v2550 = vld [vmem:[%s1051 + $0x138] sm:$0xff]
        %v2551 = vld [vmem:[%s1051 + $0x140] sm:$0xff]
        %v2552 = vld [vmem:[%s1051 + $0x148] sm:$0xff]
        %v2553 = vld [vmem:[%s1051 + $0x150] sm:$0xff]
        %v2554 = vld [vmem:[%s1051 + $0x158] sm:$0xff]
        %v2555 = vld [vmem:[%s1051 + $0x160] sm:$0xff]
        %v2556 = vld [vmem:[%s1051 + $0x168] sm:$0xff]
        %v2557 = vld [vmem:[%s1051 + $0x170] sm:$0xff]
        %v2558 = vld [vmem:[%s1051 + $0x178] sm:$0xff]
        %v2559 = vld [vmem:[%s1051 + $0x180] sm:$0xff]
        %v2560 = vld [vmem:[%s1051 + $0x188] sm:$0xff]
        %v2561 = vld [vmem:[%s1051 + $0x190] sm:$0xff]
        %v2562 = vld [vmem:[%s1051 + $0x198] sm:$0xff]
        %v2563 = vld [vmem:[%s1051 + $0x1a0] sm:$0xff]
        %v2564 = vld [vmem:[%s1051 + $0x1a8] sm:$0xff]
        %v2565 = vld [vmem:[%s1051 + $0x1b0] sm:$0xff]
        %v2566 = vld [vmem:[%s1051 + $0x1b8] sm:$0xff]
        %v2567 = vld [vmem:[%s1051 + $0x1c0] sm:$0xff]
        %v2568 = vld [vmem:[%s1051 + $0x1c8] sm:$0xff]
        %v2569 = vld [vmem:[%s1051 + $0x1d0] sm:$0xff]
        %v2570 = vld [vmem:[%s1051 + $0x1d8] sm:$0xff]
        %v2571 = vld [vmem:[%s1051 + $0x1e0] sm:$0xff]
        %v2572 = vld [vmem:[%s1051 + $0x1e8] sm:$0xff]
        %v2573 = vld [vmem:[%s1051 + $0x1f0] sm:$0xff]
        %v2574 = vld [vmem:[%s1051 + $0x1f8] sm:$0xff]
        %v2575 = vld [vmem:[%s900] sm:$0xf]
        %v2577 = vlaneseq
        %v2578 = vshrl.u32 %v2577, 7
        %v2579 = vsub.s32 0, %v2578
        %v2580 = vrot.slane %v2575, %v2579
        %v2581 = vlaneseq
        %v2582 = vshrl.u32 %v2581, 7
        %v2583 = vsub.s32 1, %v2582
        %v2584 = vrot.slane %v2575, %v2583
        %v2585 = vlaneseq
        %v2586 = vshrl.u32 %v2585, 7
        %v2587 = vsub.s32 2, %v2586
        %v2588 = vrot.slane %v2575, %v2587
        %v2589 = vlaneseq
        %v2590 = vshrl.u32 %v2589, 7
        %v2591 = vsub.s32 3, %v2590
        %v2592 = vrot.slane %v2575, %v2591
        %v2661 = vunpack.c.l.b16 %v2511
        %v2662 = vunpack.c.h.b16 %v2511
        %v2663 = vunpack.c.l.b16 %v2512
        %v2664 = vunpack.c.h.b16 %v2512
        %v2665 = vunpack.c.l.b16 %v2513
        %v2666 = vunpack.c.h.b16 %v2513
        %v2667 = vunpack.c.l.b16 %v2514
        %v2668 = vunpack.c.h.b16 %v2514
        %v2669 = vunpack.c.l.b16 %v2515
        %v2670 = vunpack.c.h.b16 %v2515
        %v2671 = vunpack.c.l.b16 %v2516
        %v2672 = vunpack.c.h.b16 %v2516
        %v2673 = vunpack.c.l.b16 %v2517
        %v2674 = vunpack.c.h.b16 %v2517
        %v2675 = vunpack.c.l.b16 %v2518
        %v2676 = vunpack.c.h.b16 %v2518
        %v2677 = vunpack.c.l.b16 %v2519
        %v2678 = vunpack.c.h.b16 %v2519
        %v2679 = vunpack.c.l.b16 %v2520
        %v2680 = vunpack.c.h.b16 %v2520
        %v2681 = vunpack.c.l.b16 %v2521
        %v2682 = vunpack.c.h.b16 %v2521
        %v2683 = vunpack.c.l.b16 %v2522
        %v2684 = vunpack.c.h.b16 %v2522
        %v2685 = vunpack.c.l.b16 %v2523
        %v2686 = vunpack.c.h.b16 %v2523
        %v2687 = vunpack.c.l.b16 %v2524
        %v2688 = vunpack.c.h.b16 %v2524
        %v2689 = vunpack.c.l.b16 %v2525
        %v2690 = vunpack.c.h.b16 %v2525
        %v2691 = vunpack.c.l.b16 %v2526
        %v2692 = vunpack.c.h.b16 %v2526
        %v2693 = vunpack.c.l.b16 %v2527
        %v2694 = vunpack.c.h.b16 %v2527
        %v2695 = vunpack.c.l.b16 %v2528
        %v2696 = vunpack.c.h.b16 %v2528
        %v2697 = vunpack.c.l.b16 %v2529
        %v2698 = vunpack.c.h.b16 %v2529
        %v2699 = vunpack.c.l.b16 %v2530
        %v2700 = vunpack.c.h.b16 %v2530
        %v2701 = vunpack.c.l.b16 %v2531
        %v2702 = vunpack.c.h.b16 %v2531
        %v2703 = vunpack.c.l.b16 %v2532
        %v2704 = vunpack.c.h.b16 %v2532
        %v2705 = vunpack.c.l.b16 %v2533
        %v2706 = vunpack.c.h.b16 %v2533
        %v2707 = vunpack.c.l.b16 %v2534
        %v2708 = vunpack.c.h.b16 %v2534
        %v2709 = vunpack.c.l.b16 %v2535
        %v2710 = vunpack.c.h.b16 %v2535
        %v2711 = vunpack.c.l.b16 %v2536
        %v2712 = vunpack.c.h.b16 %v2536
        %v2713 = vunpack.c.l.b16 %v2537
        %v2714 = vunpack.c.h.b16 %v2537
        %v2715 = vunpack.c.l.b16 %v2538
        %v2716 = vunpack.c.h.b16 %v2538
        %v2717 = vunpack.c.l.b16 %v2539
        %v2718 = vunpack.c.h.b16 %v2539
        %v2719 = vunpack.c.l.b16 %v2540
        %v2720 = vunpack.c.h.b16 %v2540
        %v2721 = vunpack.c.l.b16 %v2541
        %v2722 = vunpack.c.h.b16 %v2541
        %v2723 = vunpack.c.l.b16 %v2542
        %v2724 = vunpack.c.h.b16 %v2542
        %v2725 = vunpack.c.l.b16 %v2543
        %v2726 = vunpack.c.h.b16 %v2543
        %v2727 = vunpack.c.l.b16 %v2544
        %v2728 = vunpack.c.h.b16 %v2544
        %v2729 = vunpack.c.l.b16 %v2545
        %v2730 = vunpack.c.h.b16 %v2545
        %v2731 = vunpack.c.l.b16 %v2546
        %v2732 = vunpack.c.h.b16 %v2546
        %v2733 = vunpack.c.l.b16 %v2547
        %v2734 = vunpack.c.h.b16 %v2547
        %v2735 = vunpack.c.l.b16 %v2548
        %v2736 = vunpack.c.h.b16 %v2548
        %v2737 = vunpack.c.l.b16 %v2549
        %v2738 = vunpack.c.h.b16 %v2549
        %v2739 = vunpack.c.l.b16 %v2550
        %v2740 = vunpack.c.h.b16 %v2550
        %v2741 = vunpack.c.l.b16 %v2551
        %v2742 = vunpack.c.h.b16 %v2551
        %v2743 = vunpack.c.l.b16 %v2552
        %v2744 = vunpack.c.h.b16 %v2552
        %v2745 = vunpack.c.l.b16 %v2553
        %v2746 = vunpack.c.h.b16 %v2553
        %v2747 = vunpack.c.l.b16 %v2554
        %v2748 = vunpack.c.h.b16 %v2554
        %v2749 = vunpack.c.l.b16 %v2555
        %v2750 = vunpack.c.h.b16 %v2555
        %v2751 = vunpack.c.l.b16 %v2556
        %v2752 = vunpack.c.h.b16 %v2556
        %v2753 = vunpack.c.l.b16 %v2557
        %v2754 = vunpack.c.h.b16 %v2557
        %v2755 = vunpack.c.l.b16 %v2558
        %v2756 = vunpack.c.h.b16 %v2558
        %v2757 = vunpack.c.l.b16 %v2559
        %v2758 = vunpack.c.h.b16 %v2559
        %v2759 = vunpack.c.l.b16 %v2560
        %v2760 = vunpack.c.h.b16 %v2560
        %v2761 = vunpack.c.l.b16 %v2561
        %v2762 = vunpack.c.h.b16 %v2561
        %v2763 = vunpack.c.l.b16 %v2562
        %v2764 = vunpack.c.h.b16 %v2562
        %v2765 = vunpack.c.l.b16 %v2563
        %v2766 = vunpack.c.h.b16 %v2563
        %v2767 = vunpack.c.l.b16 %v2564
        %v2768 = vunpack.c.h.b16 %v2564
        %v2769 = vunpack.c.l.b16 %v2565
        %v2770 = vunpack.c.h.b16 %v2565
        %v2771 = vunpack.c.l.b16 %v2566
        %v2772 = vunpack.c.h.b16 %v2566
        %v2773 = vunpack.c.l.b16 %v2567
        %v2774 = vunpack.c.h.b16 %v2567
        %v2775 = vunpack.c.l.b16 %v2568
        %v2776 = vunpack.c.h.b16 %v2568
        %v2777 = vunpack.c.l.b16 %v2569
        %v2778 = vunpack.c.h.b16 %v2569
        %v2779 = vunpack.c.l.b16 %v2570
        %v2780 = vunpack.c.h.b16 %v2570
        %v2781 = vunpack.c.l.b16 %v2571
        %v2782 = vunpack.c.h.b16 %v2571
        %v2783 = vunpack.c.l.b16 %v2572
        %v2784 = vunpack.c.h.b16 %v2572
        %v2785 = vunpack.c.l.b16 %v2573
        %v2786 = vunpack.c.h.b16 %v2573
        %v2787 = vunpack.c.l.b16 %v2574
        %v2788 = vunpack.c.h.b16 %v2574
        %v2789 = vpack.c.b16 %v2665, %v2661
        %v2790 = vpack.c.b16 %v2666, %v2662
        %v2791 = vpack.c.b16 %v2667, %v2663
        %v2792 = vpack.c.b16 %v2668, %v2664
        %v2793 = vpack.c.b16 %v2673, %v2669
        %v2794 = vpack.c.b16 %v2674, %v2670
        %v2795 = vpack.c.b16 %v2675, %v2671
        %v2796 = vpack.c.b16 %v2676, %v2672
        %v2797 = vpack.c.b16 %v2681, %v2677
        %v2798 = vpack.c.b16 %v2682, %v2678
        %v2799 = vpack.c.b16 %v2683, %v2679
        %v2800 = vpack.c.b16 %v2684, %v2680
        %v2801 = vpack.c.b16 %v2689, %v2685
        %v2802 = vpack.c.b16 %v2690, %v2686
        %v2803 = vpack.c.b16 %v2691, %v2687
        %v2804 = vpack.c.b16 %v2692, %v2688
        %v2805 = vpack.c.b16 %v2697, %v2693
        %v2806 = vpack.c.b16 %v2698, %v2694
        %v2807 = vpack.c.b16 %v2699, %v2695
        %v2808 = vpack.c.b16 %v2700, %v2696
        %v2809 = vpack.c.b16 %v2705, %v2701
        %v2810 = vpack.c.b16 %v2706, %v2702
        %v2811 = vpack.c.b16 %v2707, %v2703
        %v2812 = vpack.c.b16 %v2708, %v2704
        %v2813 = vpack.c.b16 %v2713, %v2709
        %v2814 = vpack.c.b16 %v2714, %v2710
        %v2815 = vpack.c.b16 %v2715, %v2711
        %v2816 = vpack.c.b16 %v2716, %v2712
        %v2817 = vpack.c.b16 %v2721, %v2717
        %v2818 = vpack.c.b16 %v2722, %v2718
        %v2819 = vpack.c.b16 %v2723, %v2719
        %v2820 = vpack.c.b16 %v2724, %v2720
        %v2821 = vpack.c.b16 %v2729, %v2725
        %v2822 = vpack.c.b16 %v2730, %v2726
        %v2823 = vpack.c.b16 %v2731, %v2727
        %v2824 = vpack.c.b16 %v2732, %v2728
        %v2825 = vpack.c.b16 %v2737, %v2733
        %v2826 = vpack.c.b16 %v2738, %v2734
        %v2827 = vpack.c.b16 %v2739, %v2735
        %v2828 = vpack.c.b16 %v2740, %v2736
        %v2829 = vpack.c.b16 %v2745, %v2741
        %v2830 = vpack.c.b16 %v2746, %v2742
        %v2831 = vpack.c.b16 %v2747, %v2743
        %v2832 = vpack.c.b16 %v2748, %v2744
        %v2833 = vpack.c.b16 %v2753, %v2749
        %v2834 = vpack.c.b16 %v2754, %v2750
        %v2835 = vpack.c.b16 %v2755, %v2751
        %v2836 = vpack.c.b16 %v2756, %v2752
        %v2837 = vpack.c.b16 %v2761, %v2757
        %v2838 = vpack.c.b16 %v2762, %v2758
        %v2839 = vpack.c.b16 %v2763, %v2759
        %v2840 = vpack.c.b16 %v2764, %v2760
        %v2841 = vpack.c.b16 %v2769, %v2765
        %v2842 = vpack.c.b16 %v2770, %v2766
        %v2843 = vpack.c.b16 %v2771, %v2767
        %v2844 = vpack.c.b16 %v2772, %v2768
        %v2845 = vpack.c.b16 %v2777, %v2773
        %v2846 = vpack.c.b16 %v2778, %v2774
        %v2847 = vpack.c.b16 %v2779, %v2775
        %v2848 = vpack.c.b16 %v2780, %v2776
        %v2849 = vpack.c.b16 %v2785, %v2781
        %v2850 = vpack.c.b16 %v2786, %v2782
        %v2851 = vpack.c.b16 %v2787, %v2783
        %v2852 = vpack.c.b16 %v2788, %v2784
        %2917 = vmatprep.subr.bf16.mxu0 %v2818
        %2918 = vmatpush1.bf16.msra.mxu0 %v2817
        %2919 = vmatprep.subr.bf16.mxu0 %v2814
        %2920 = vmatpush1.bf16.msra.mxu0 %v2813
        %2921 = vmatprep.subr.bf16.mxu0 %v2810
        %2922 = vmatpush1.bf16.msra.mxu0 %v2809
        %2923 = vmatprep.subr.bf16.mxu0 %v2806
        %2924 = vmatpush1.bf16.msra.mxu0 %v2805
        %2925 = vmatprep.subr.bf16.mxu0 %v2802
        %2926 = vmatpush1.bf16.msra.mxu0 %v2801
        %2927 = vmatprep.subr.bf16.mxu0 %v2798
        %2928 = vmatpush1.bf16.msra.mxu0 %v2797
        %2929 = vmatprep.subr.bf16.mxu0 %v2794
        %2930 = vmatpush1.bf16.msra.mxu0 %v2793
        %2931 = vmatprep.subr.bf16.mxu0 %v2790
        %2932 = vmatpush1.bf16.msra.mxu0 %v2789
        %2933 = vmatprep.subr.bf16.mxu0 %v2850
        %2934 = vmatpush2.bf16.msra.mxu0 %v2849
        %2935 = vmatprep.subr.bf16.mxu0 %v2846
        %2936 = vmatpush2.bf16.msra.mxu0 %v2845
        %2937 = vmatprep.subr.bf16.mxu0 %v2842
        %2938 = vmatpush2.bf16.msra.mxu0 %v2841
        %2939 = vmatprep.subr.bf16.mxu0 %v2838
        %2940 = vmatpush2.bf16.msra.mxu0 %v2837
        %2941 = vmatprep.subr.bf16.mxu0 %v2834
        %2942 = vmatpush2.bf16.msra.mxu0 %v2833
        %2943 = vmatprep.subr.bf16.mxu0 %v2830
        %2944 = vmatpush2.bf16.msra.mxu0 %v2829
        %2945 = vmatprep.subr.bf16.mxu0 %v2826
        %2946 = vmatpush2.bf16.msra.mxu0 %v2825
        %2947 = vmatprep.subr.bf16.mxu0 %v2822
        %2948 = vmatpush2.bf16.msra.mxu0 %v2821
        %2949 = vmatprep.mubr.bf16.mxu0 %v2510
        %2950 = vmatmul.mubr.bf16.gmra.mxu0 %v2509
        %v2951 = vpop.f32.mrf.mxu0
        %v2952 = vadd.f32 %v2580, %v2951
        %v2953 = vpop.f32.mrf.mxu0
        %v2954 = vadd.f32 %v2584, %v2953
        %v2955 = vpop.f32.mrf.mxu0
        %v2956 = vpop.f32.mrf.mxu0
        %2957 = vdwg.mxu0
        %2958 = vmatprep.subr.bf16.mxu0 %v2820
        %2959 = vmatpush1.bf16.msra.mxu0 %v2819
        %2960 = vmatprep.subr.bf16.mxu0 %v2816
        %2961 = vmatpush1.bf16.msra.mxu0 %v2815
        %2962 = vmatprep.subr.bf16.mxu0 %v2812
        %2963 = vmatpush1.bf16.msra.mxu0 %v2811
        %2964 = vmatprep.subr.bf16.mxu0 %v2808
        %2965 = vmatpush1.bf16.msra.mxu0 %v2807
        %2966 = vmatprep.subr.bf16.mxu0 %v2804
        %2967 = vmatpush1.bf16.msra.mxu0 %v2803
        %2968 = vmatprep.subr.bf16.mxu0 %v2800
        %2969 = vmatpush1.bf16.msra.mxu0 %v2799
        %2970 = vmatprep.subr.bf16.mxu0 %v2796
        %2971 = vmatpush1.bf16.msra.mxu0 %v2795
        %2972 = vmatprep.subr.bf16.mxu0 %v2792
        %2973 = vmatpush1.bf16.msra.mxu0 %v2791
        %2974 = vmatprep.subr.bf16.mxu0 %v2852
        %2975 = vmatpush2.bf16.msra.mxu0 %v2851
        %2976 = vmatprep.subr.bf16.mxu0 %v2848
        %2977 = vmatpush2.bf16.msra.mxu0 %v2847
        %2978 = vmatprep.subr.bf16.mxu0 %v2844
        %2979 = vmatpush2.bf16.msra.mxu0 %v2843
        %2980 = vmatprep.subr.bf16.mxu0 %v2840
        %2981 = vmatpush2.bf16.msra.mxu0 %v2839
        %2982 = vmatprep.subr.bf16.mxu0 %v2836
        %2983 = vmatpush2.bf16.msra.mxu0 %v2835
        %2984 = vmatprep.subr.bf16.mxu0 %v2832
        %2985 = vmatpush2.bf16.msra.mxu0 %v2831
        %2986 = vmatprep.subr.bf16.mxu0 %v2828
        %2987 = vmatpush2.bf16.msra.mxu0 %v2827
        %2988 = vmatprep.subr.bf16.mxu0 %v2824
        %2989 = vmatpush2.bf16.msra.mxu0 %v2823
        %2990 = vmatprep.mubr.bf16.mxu0 %v2510
        %2991 = vmatmul.mubr.bf16.gmra.mxu0 %v2509
        %v2992 = vpop.f32.mrf.mxu0
        %v2993 = vadd.f32 %v2588, %v2992
        %v2994 = vpop.f32.mrf.mxu0
        %v2995 = vadd.f32 %v2592, %v2994
        %v2996 = vpop.f32.mrf.mxu0
        %v2997 = vpop.f32.mrf.mxu0
        %2998 = vdwg.mxu0
        %v2999 = vmul.f32 %v2952, 1.702
        %v3000 = vmul.f32 %v2954, 1.702
        %v3001 = vmul.f32 %v2993, 1.702
        %v3002 = vmul.f32 %v2995, 1.702
        %v3003 = vxor.u32 %v2999, 2147483648
        %v3004 = vxor.u32 %v3000, 2147483648
        %v3005 = vxor.u32 %v3001, 2147483648
        %v3006 = vxor.u32 %v3002, 2147483648
        %v3007 = vmul.f32 %v3003, 1.442695
        %v3008 = vpow.pop %v3007
        %v3009 = vmul.f32 %v3004, 1.442695
        %v3010 = vpow.pop %v3009
        %v3011 = vmul.f32 %v3005, 1.442695
        %v3012 = vpow.pop %v3011
        %v3013 = vmul.f32 %v3006, 1.442695
        %v3014 = vpow.pop %v3013
        %v3015 = vadd.f32 %v3008, 1.0
        %v3016 = vadd.f32 %v3010, 1.0
        %v3017 = vadd.f32 %v3012, 1.0
        %v3018 = vadd.f32 %v3014, 1.0
        %v3019 = vrcp.pop %v3015
        %v3020 = vmul.f32 1.0, %v3019
        %v3021 = vrcp.pop %v3016
        %v3022 = vmul.f32 1.0, %v3021
        %v3023 = vrcp.pop %v3017
        %v3024 = vmul.f32 1.0, %v3023
        %v3025 = vrcp.pop %v3018
        %v3026 = vmul.f32 1.0, %v3025
        %v3027 = vmul.f32 %v2952, %v3020
        %v3028 = vmul.f32 %v2954, %v3022
        %v3029 = vmul.f32 %v2993, %v3024
        %v3030 = vmul.f32 %v2995, %v3026
        %v3031 = vpack.c.bf16 %v3027, %v3027
        %v3032 = vpack.c.bf16 %v3028, %v3028
        %v3033 = vpack.c.bf16 %v3029, %v3029
        %v3034 = vpack.c.bf16 %v3030, %v3030
        %v3035 = vld [vmem:[%s909] sm:$0xff]
        %v3036 = vld [vmem:[%s909 + $0x8] sm:$0xff]
        %v3037 = vld [vmem:[%s909 + $0x10] sm:$0xff]
        %v3038 = vld [vmem:[%s909 + $0x18] sm:$0xff]
        %v3039 = vld [vmem:[%s909 + $0x20] sm:$0xff]
        %v3040 = vld [vmem:[%s909 + $0x28] sm:$0xff]
        %v3041 = vld [vmem:[%s909 + $0x30] sm:$0xff]
        %v3042 = vld [vmem:[%s909 + $0x38] sm:$0xff]
        %v3043 = vld [vmem:[%s909 + $0x40] sm:$0xff]
        %v3044 = vld [vmem:[%s909 + $0x48] sm:$0xff]
        %v3045 = vld [vmem:[%s909 + $0x50] sm:$0xff]
        %v3046 = vld [vmem:[%s909 + $0x58] sm:$0xff]
        %v3047 = vld [vmem:[%s909 + $0x60] sm:$0xff]
        %v3048 = vld [vmem:[%s909 + $0x68] sm:$0xff]
        %v3049 = vld [vmem:[%s909 + $0x70] sm:$0xff]
        %v3050 = vld [vmem:[%s909 + $0x78] sm:$0xff]
        %v3051 = vld [vmem:[%s909 + $0x80] sm:$0xff]
        %v3052 = vld [vmem:[%s909 + $0x88] sm:$0xff]
        %v3053 = vld [vmem:[%s909 + $0x90] sm:$0xff]
        %v3054 = vld [vmem:[%s909 + $0x98] sm:$0xff]
        %v3055 = vld [vmem:[%s909 + $0xa0] sm:$0xff]
        %v3056 = vld [vmem:[%s909 + $0xa8] sm:$0xff]
        %v3057 = vld [vmem:[%s909 + $0xb0] sm:$0xff]
        %v3058 = vld [vmem:[%s909 + $0xb8] sm:$0xff]
        %v3059 = vld [vmem:[%s909 + $0xc0] sm:$0xff]
        %v3060 = vld [vmem:[%s909 + $0xc8] sm:$0xff]
        %v3061 = vld [vmem:[%s909 + $0xd0] sm:$0xff]
        %v3062 = vld [vmem:[%s909 + $0xd8] sm:$0xff]
        %v3063 = vld [vmem:[%s909 + $0xe0] sm:$0xff]
        %v3064 = vld [vmem:[%s909 + $0xe8] sm:$0xff]
        %v3065 = vld [vmem:[%s909 + $0xf0] sm:$0xff]
        %v3066 = vld [vmem:[%s909 + $0xf8] sm:$0xff]
        %v3067 = vld [vmem:[%s909 + $0x100] sm:$0xff]
        %v3068 = vld [vmem:[%s909 + $0x108] sm:$0xff]
        %v3069 = vld [vmem:[%s909 + $0x110] sm:$0xff]
        %v3070 = vld [vmem:[%s909 + $0x118] sm:$0xff]
        %v3071 = vld [vmem:[%s909 + $0x120] sm:$0xff]
        %v3072 = vld [vmem:[%s909 + $0x128] sm:$0xff]
        %v3073 = vld [vmem:[%s909 + $0x130] sm:$0xff]
        %v3074 = vld [vmem:[%s909 + $0x138] sm:$0xff]
        %v3075 = vld [vmem:[%s909 + $0x140] sm:$0xff]
        %v3076 = vld [vmem:[%s909 + $0x148] sm:$0xff]
        %v3077 = vld [vmem:[%s909 + $0x150] sm:$0xff]
        %v3078 = vld [vmem:[%s909 + $0x158] sm:$0xff]
        %v3079 = vld [vmem:[%s909 + $0x160] sm:$0xff]
        %v3080 = vld [vmem:[%s909 + $0x168] sm:$0xff]
        %v3081 = vld [vmem:[%s909 + $0x170] sm:$0xff]
        %v3082 = vld [vmem:[%s909 + $0x178] sm:$0xff]
        %v3083 = vld [vmem:[%s909 + $0x180] sm:$0xff]
        %v3084 = vld [vmem:[%s909 + $0x188] sm:$0xff]
        %v3085 = vld [vmem:[%s909 + $0x190] sm:$0xff]
        %v3086 = vld [vmem:[%s909 + $0x198] sm:$0xff]
        %v3087 = vld [vmem:[%s909 + $0x1a0] sm:$0xff]
        %v3088 = vld [vmem:[%s909 + $0x1a8] sm:$0xff]
        %v3089 = vld [vmem:[%s909 + $0x1b0] sm:$0xff]
        %v3090 = vld [vmem:[%s909 + $0x1b8] sm:$0xff]
        %v3091 = vld [vmem:[%s909 + $0x1c0] sm:$0xff]
        %v3092 = vld [vmem:[%s909 + $0x1c8] sm:$0xff]
        %v3093 = vld [vmem:[%s909 + $0x1d0] sm:$0xff]
        %v3094 = vld [vmem:[%s909 + $0x1d8] sm:$0xff]
        %v3095 = vld [vmem:[%s909 + $0x1e0] sm:$0xff]
        %v3096 = vld [vmem:[%s909 + $0x1e8] sm:$0xff]
        %v3097 = vld [vmem:[%s909 + $0x1f0] sm:$0xff]
        %v3098 = vld [vmem:[%s909 + $0x1f8] sm:$0xff]
        %v3099 = vld [vmem:[%s918] sm:$0x3]
        %v3101 = vlaneseq
        %v3102 = vshrl.u32 %v3101, 7
        %v3103 = vsub.s32 0, %v3102
        %v3104 = vrot.slane %v3099, %v3103
        %v3105 = vlaneseq
        %v3106 = vshrl.u32 %v3105, 7
        %v3107 = vsub.s32 1, %v3106
        %v3108 = vrot.slane %v3099, %v3107
        %v3175 = vunpack.c.l.b16 %v3035
        %v3176 = vunpack.c.h.b16 %v3035
        %v3177 = vunpack.c.l.b16 %v3036
        %v3178 = vunpack.c.h.b16 %v3036
        %v3179 = vunpack.c.l.b16 %v3037
        %v3180 = vunpack.c.h.b16 %v3037
        %v3181 = vunpack.c.l.b16 %v3038
        %v3182 = vunpack.c.h.b16 %v3038
        %v3183 = vunpack.c.l.b16 %v3039
        %v3184 = vunpack.c.h.b16 %v3039
        %v3185 = vunpack.c.l.b16 %v3040
        %v3186 = vunpack.c.h.b16 %v3040
        %v3187 = vunpack.c.l.b16 %v3041
        %v3188 = vunpack.c.h.b16 %v3041
        %v3189 = vunpack.c.l.b16 %v3042
        %v3190 = vunpack.c.h.b16 %v3042
        %v3191 = vunpack.c.l.b16 %v3043
        %v3192 = vunpack.c.h.b16 %v3043
        %v3193 = vunpack.c.l.b16 %v3044
        %v3194 = vunpack.c.h.b16 %v3044
        %v3195 = vunpack.c.l.b16 %v3045
        %v3196 = vunpack.c.h.b16 %v3045
        %v3197 = vunpack.c.l.b16 %v3046
        %v3198 = vunpack.c.h.b16 %v3046
        %v3199 = vunpack.c.l.b16 %v3047
        %v3200 = vunpack.c.h.b16 %v3047
        %v3201 = vunpack.c.l.b16 %v3048
        %v3202 = vunpack.c.h.b16 %v3048
        %v3203 = vunpack.c.l.b16 %v3049
        %v3204 = vunpack.c.h.b16 %v3049
        %v3205 = vunpack.c.l.b16 %v3050
        %v3206 = vunpack.c.h.b16 %v3050
        %v3207 = vunpack.c.l.b16 %v3051
        %v3208 = vunpack.c.h.b16 %v3051
        %v3209 = vunpack.c.l.b16 %v3052
        %v3210 = vunpack.c.h.b16 %v3052
        %v3211 = vunpack.c.l.b16 %v3053
        %v3212 = vunpack.c.h.b16 %v3053
        %v3213 = vunpack.c.l.b16 %v3054
        %v3214 = vunpack.c.h.b16 %v3054
        %v3215 = vunpack.c.l.b16 %v3055
        %v3216 = vunpack.c.h.b16 %v3055
        %v3217 = vunpack.c.l.b16 %v3056
        %v3218 = vunpack.c.h.b16 %v3056
        %v3219 = vunpack.c.l.b16 %v3057
        %v3220 = vunpack.c.h.b16 %v3057
        %v3221 = vunpack.c.l.b16 %v3058
        %v3222 = vunpack.c.h.b16 %v3058
        %v3223 = vunpack.c.l.b16 %v3059
        %v3224 = vunpack.c.h.b16 %v3059
        %v3225 = vunpack.c.l.b16 %v3060
        %v3226 = vunpack.c.h.b16 %v3060
        %v3227 = vunpack.c.l.b16 %v3061
        %v3228 = vunpack.c.h.b16 %v3061
        %v3229 = vunpack.c.l.b16 %v3062
        %v3230 = vunpack.c.h.b16 %v3062
        %v3231 = vunpack.c.l.b16 %v3063
        %v3232 = vunpack.c.h.b16 %v3063
        %v3233 = vunpack.c.l.b16 %v3064
        %v3234 = vunpack.c.h.b16 %v3064
        %v3235 = vunpack.c.l.b16 %v3065
        %v3236 = vunpack.c.h.b16 %v3065
        %v3237 = vunpack.c.l.b16 %v3066
        %v3238 = vunpack.c.h.b16 %v3066
        %v3239 = vunpack.c.l.b16 %v3067
        %v3240 = vunpack.c.h.b16 %v3067
        %v3241 = vunpack.c.l.b16 %v3068
        %v3242 = vunpack.c.h.b16 %v3068
        %v3243 = vunpack.c.l.b16 %v3069
        %v3244 = vunpack.c.h.b16 %v3069
        %v3245 = vunpack.c.l.b16 %v3070
        %v3246 = vunpack.c.h.b16 %v3070
        %v3247 = vunpack.c.l.b16 %v3071
        %v3248 = vunpack.c.h.b16 %v3071
        %v3249 = vunpack.c.l.b16 %v3072
        %v3250 = vunpack.c.h.b16 %v3072
        %v3251 = vunpack.c.l.b16 %v3073
        %v3252 = vunpack.c.h.b16 %v3073
        %v3253 = vunpack.c.l.b16 %v3074
        %v3254 = vunpack.c.h.b16 %v3074
        %v3255 = vunpack.c.l.b16 %v3075
        %v3256 = vunpack.c.h.b16 %v3075
        %v3257 = vunpack.c.l.b16 %v3076
        %v3258 = vunpack.c.h.b16 %v3076
        %v3259 = vunpack.c.l.b16 %v3077
        %v3260 = vunpack.c.h.b16 %v3077
        %v3261 = vunpack.c.l.b16 %v3078
        %v3262 = vunpack.c.h.b16 %v3078
        %v3263 = vunpack.c.l.b16 %v3079
        %v3264 = vunpack.c.h.b16 %v3079
        %v3265 = vunpack.c.l.b16 %v3080
        %v3266 = vunpack.c.h.b16 %v3080
        %v3267 = vunpack.c.l.b16 %v3081
        %v3268 = vunpack.c.h.b16 %v3081
        %v3269 = vunpack.c.l.b16 %v3082
        %v3270 = vunpack.c.h.b16 %v3082
        %v3271 = vunpack.c.l.b16 %v3083
        %v3272 = vunpack.c.h.b16 %v3083
        %v3273 = vunpack.c.l.b16 %v3084
        %v3274 = vunpack.c.h.b16 %v3084
        %v3275 = vunpack.c.l.b16 %v3085
        %v3276 = vunpack.c.h.b16 %v3085
        %v3277 = vunpack.c.l.b16 %v3086
        %v3278 = vunpack.c.h.b16 %v3086
        %v3279 = vunpack.c.l.b16 %v3087
        %v3280 = vunpack.c.h.b16 %v3087
        %v3281 = vunpack.c.l.b16 %v3088
        %v3282 = vunpack.c.h.b16 %v3088
        %v3283 = vunpack.c.l.b16 %v3089
        %v3284 = vunpack.c.h.b16 %v3089
        %v3285 = vunpack.c.l.b16 %v3090
        %v3286 = vunpack.c.h.b16 %v3090
        %v3287 = vunpack.c.l.b16 %v3091
        %v3288 = vunpack.c.h.b16 %v3091
        %v3289 = vunpack.c.l.b16 %v3092
        %v3290 = vunpack.c.h.b16 %v3092
        %v3291 = vunpack.c.l.b16 %v3093
        %v3292 = vunpack.c.h.b16 %v3093
        %v3293 = vunpack.c.l.b16 %v3094
        %v3294 = vunpack.c.h.b16 %v3094
        %v3295 = vunpack.c.l.b16 %v3095
        %v3296 = vunpack.c.h.b16 %v3095
        %v3297 = vunpack.c.l.b16 %v3096
        %v3298 = vunpack.c.h.b16 %v3096
        %v3299 = vunpack.c.l.b16 %v3097
        %v3300 = vunpack.c.h.b16 %v3097
        %v3301 = vunpack.c.l.b16 %v3098
        %v3302 = vunpack.c.h.b16 %v3098
        %v3303 = vpack.c.b16 %v3177, %v3175
        %v3304 = vpack.c.b16 %v3178, %v3176
        %v3305 = vpack.c.b16 %v3181, %v3179
        %v3306 = vpack.c.b16 %v3182, %v3180
        %v3307 = vpack.c.b16 %v3185, %v3183
        %v3308 = vpack.c.b16 %v3186, %v3184
        %v3309 = vpack.c.b16 %v3189, %v3187
        %v3310 = vpack.c.b16 %v3190, %v3188
        %v3311 = vpack.c.b16 %v3193, %v3191
        %v3312 = vpack.c.b16 %v3194, %v3192
        %v3313 = vpack.c.b16 %v3197, %v3195
        %v3314 = vpack.c.b16 %v3198, %v3196
        %v3315 = vpack.c.b16 %v3201, %v3199
        %v3316 = vpack.c.b16 %v3202, %v3200
        %v3317 = vpack.c.b16 %v3205, %v3203
        %v3318 = vpack.c.b16 %v3206, %v3204
        %v3319 = vpack.c.b16 %v3209, %v3207
        %v3320 = vpack.c.b16 %v3210, %v3208
        %v3321 = vpack.c.b16 %v3213, %v3211
        %v3322 = vpack.c.b16 %v3214, %v3212
        %v3323 = vpack.c.b16 %v3217, %v3215
        %v3324 = vpack.c.b16 %v3218, %v3216
        %v3325 = vpack.c.b16 %v3221, %v3219
        %v3326 = vpack.c.b16 %v3222, %v3220
        %v3327 = vpack.c.b16 %v3225, %v3223
        %v3328 = vpack.c.b16 %v3226, %v3224
        %v3329 = vpack.c.b16 %v3229, %v3227
        %v3330 = vpack.c.b16 %v3230, %v3228
        %v3331 = vpack.c.b16 %v3233, %v3231
        %v3332 = vpack.c.b16 %v3234, %v3232
        %v3333 = vpack.c.b16 %v3237, %v3235
        %v3334 = vpack.c.b16 %v3238, %v3236
        %v3335 = vpack.c.b16 %v3241, %v3239
        %v3336 = vpack.c.b16 %v3242, %v3240
        %v3337 = vpack.c.b16 %v3245, %v3243
        %v3338 = vpack.c.b16 %v3246, %v3244
        %v3339 = vpack.c.b16 %v3249, %v3247
        %v3340 = vpack.c.b16 %v3250, %v3248
        %v3341 = vpack.c.b16 %v3253, %v3251
        %v3342 = vpack.c.b16 %v3254, %v3252
        %v3343 = vpack.c.b16 %v3257, %v3255
        %v3344 = vpack.c.b16 %v3258, %v3256
        %v3345 = vpack.c.b16 %v3261, %v3259
        %v3346 = vpack.c.b16 %v3262, %v3260
        %v3347 = vpack.c.b16 %v3265, %v3263
        %v3348 = vpack.c.b16 %v3266, %v3264
        %v3349 = vpack.c.b16 %v3269, %v3267
        %v3350 = vpack.c.b16 %v3270, %v3268
        %v3351 = vpack.c.b16 %v3273, %v3271
        %v3352 = vpack.c.b16 %v3274, %v3272
        %v3353 = vpack.c.b16 %v3277, %v3275
        %v3354 = vpack.c.b16 %v3278, %v3276
        %v3355 = vpack.c.b16 %v3281, %v3279
        %v3356 = vpack.c.b16 %v3282, %v3280
        %v3357 = vpack.c.b16 %v3285, %v3283
        %v3358 = vpack.c.b16 %v3286, %v3284
        %v3359 = vpack.c.b16 %v3289, %v3287
        %v3360 = vpack.c.b16 %v3290, %v3288
        %v3361 = vpack.c.b16 %v3293, %v3291
        %v3362 = vpack.c.b16 %v3294, %v3292
        %v3363 = vpack.c.b16 %v3297, %v3295
        %v3364 = vpack.c.b16 %v3298, %v3296
        %v3365 = vpack.c.b16 %v3301, %v3299
        %v3366 = vpack.c.b16 %v3302, %v3300
        %3431 = vmatprep.subr.bf16.mxu0 %v3318
        %3432 = vmatpush1.bf16.msra.mxu0 %v3317
        %3433 = vmatprep.subr.bf16.mxu0 %v3316
        %3434 = vmatpush1.bf16.msra.mxu0 %v3315
        %3435 = vmatprep.subr.bf16.mxu0 %v3314
        %3436 = vmatpush1.bf16.msra.mxu0 %v3313
        %3437 = vmatprep.subr.bf16.mxu0 %v3312
        %3438 = vmatpush1.bf16.msra.mxu0 %v3311
        %3439 = vmatprep.subr.bf16.mxu0 %v3310
        %3440 = vmatpush1.bf16.msra.mxu0 %v3309
        %3441 = vmatprep.subr.bf16.mxu0 %v3308
        %3442 = vmatpush1.bf16.msra.mxu0 %v3307
        %3443 = vmatprep.subr.bf16.mxu0 %v3306
        %3444 = vmatpush1.bf16.msra.mxu0 %v3305
        %3445 = vmatprep.subr.bf16.mxu0 %v3304
        %3446 = vmatpush1.bf16.msra.mxu0 %v3303
        %3447 = vmatprep.subr.bf16.mxu0 %v3334
        %3448 = vmatpush2.bf16.msra.mxu0 %v3333
        %3449 = vmatprep.subr.bf16.mxu0 %v3332
        %3450 = vmatpush2.bf16.msra.mxu0 %v3331
        %3451 = vmatprep.subr.bf16.mxu0 %v3330
        %3452 = vmatpush2.bf16.msra.mxu0 %v3329
        %3453 = vmatprep.subr.bf16.mxu0 %v3328
        %3454 = vmatpush2.bf16.msra.mxu0 %v3327
        %3455 = vmatprep.subr.bf16.mxu0 %v3326
        %3456 = vmatpush2.bf16.msra.mxu0 %v3325
        %3457 = vmatprep.subr.bf16.mxu0 %v3324
        %3458 = vmatpush2.bf16.msra.mxu0 %v3323
        %3459 = vmatprep.subr.bf16.mxu0 %v3322
        %3460 = vmatpush2.bf16.msra.mxu0 %v3321
        %3461 = vmatprep.subr.bf16.mxu0 %v3320
        %3462 = vmatpush2.bf16.msra.mxu0 %v3319
        %3463 = vmatprep.mubr.bf16.mxu0 %v3032
        %3464 = vmatmul.mubr.bf16.gmra.mxu0 %v3031
        %v3465 = vpop.f32.mrf.mxu0
        %v3466 = vadd.f32 %v3104, %v3465
        %v3467 = vpop.f32.mrf.mxu0
        %v3468 = vadd.f32 %v3108, %v3467
        %v3469 = vpop.f32.mrf.mxu0
        %v3470 = vpop.f32.mrf.mxu0
        %3471 = vdwg.mxu0
        %3472 = vmatprep.subr.bf16.mxu0 %v3350
        %3473 = vmatpush1.bf16.msra.mxu0 %v3349
        %3474 = vmatprep.subr.bf16.mxu0 %v3348
        %3475 = vmatpush1.bf16.msra.mxu0 %v3347
        %3476 = vmatprep.subr.bf16.mxu0 %v3346
        %3477 = vmatpush1.bf16.msra.mxu0 %v3345
        %3478 = vmatprep.subr.bf16.mxu0 %v3344
        %3479 = vmatpush1.bf16.msra.mxu0 %v3343
        %3480 = vmatprep.subr.bf16.mxu0 %v3342
        %3481 = vmatpush1.bf16.msra.mxu0 %v3341
        %3482 = vmatprep.subr.bf16.mxu0 %v3340
        %3483 = vmatpush1.bf16.msra.mxu0 %v3339
        %3484 = vmatprep.subr.bf16.mxu0 %v3338
        %3485 = vmatpush1.bf16.msra.mxu0 %v3337
        %3486 = vmatprep.subr.bf16.mxu0 %v3336
        %3487 = vmatpush1.bf16.msra.mxu0 %v3335
        %3488 = vmatprep.subr.bf16.mxu0 %v3366
        %3489 = vmatpush2.bf16.msra.mxu0 %v3365
        %3490 = vmatprep.subr.bf16.mxu0 %v3364
        %3491 = vmatpush2.bf16.msra.mxu0 %v3363
        %3492 = vmatprep.subr.bf16.mxu0 %v3362
        %3493 = vmatpush2.bf16.msra.mxu0 %v3361
        %3494 = vmatprep.subr.bf16.mxu0 %v3360
        %3495 = vmatpush2.bf16.msra.mxu0 %v3359
        %3496 = vmatprep.subr.bf16.mxu0 %v3358
        %3497 = vmatpush2.bf16.msra.mxu0 %v3357
        %3498 = vmatprep.subr.bf16.mxu0 %v3356
        %3499 = vmatpush2.bf16.msra.mxu0 %v3355
        %3500 = vmatprep.subr.bf16.mxu0 %v3354
        %3501 = vmatpush2.bf16.msra.mxu0 %v3353
        %3502 = vmatprep.subr.bf16.mxu0 %v3352
        %3503 = vmatpush2.bf16.msra.mxu0 %v3351
        %3504 = vmatprep.mubr.bf16.mxu0 %v3034
        %3505 = vmatmul.mubr.bf16.gmra.mxu0 %v3033
        %v3506 = vpop.f32.mrf.mxu0
        %v3507 = vadd.f32 %v3466, %v3506
        %v3508 = vpop.f32.mrf.mxu0
        %v3509 = vadd.f32 %v3468, %v3508
        %v3510 = vpop.f32.mrf.mxu0
        %v3511 = vpop.f32.mrf.mxu0
        %3512 = vdwg.mxu0
        %v3513 = vadd.f32 %v2463, %v3507
        %v3514 = vadd.f32 %v2464, %v3509
        %3515 = vst [vmem:[#allocation2] sm:$0xff] %v3513
        %3516 = vst [vmem:[#allocation2 + $0x8] sm:$0xff] %v3514
        // Predicated region
        $region149: #{prompt_encoder_forward.3} parent=87 // pred_check
          %p3517 = pneg %p1069
        $region150: #{prompt_encoder_forward.3} parent=87 // pred_check_branch
          %3519 = sbr.rel (%p3517) target = $region152
        $region151: #{prompt_encoder_forward.3} parent=87 // pred_region
          %s3520 = sld [smem:[#allocation4 + %s60]]
          %v3521 = vlaneseq
          %v3522 = vshrl.u32 %v3521, 7
          %v3523 = vstv %s3520
          %vm3524 = vcmp.eq.s32.totalorder %v3522, %v3523
          %v3525 = vsel %vm3524, 1, 0
          %v3526 = vcvt.s32.f32 %v3525
          %v3527 = vmul.f32 %v3526, %v3513
          %v3528 = vmul.f32 %v3526, %v3514
          %v3529 = vrot.slane %v3527, 4
          %v3530 = vadd.f32 %v3527, %v3529
          %v3531 = vrot.slane %v3530, 2
          %v3532 = vadd.f32 %v3530, %v3531
          %v3533 = vrot.slane %v3532, 1
          %v3534 = vadd.f32 %v3532, %v3533
          %v3535 = vrot.slane %v3528, 4
          %v3536 = vadd.f32 %v3528, %v3535
          %v3537 = vrot.slane %v3536, 2
          %v3538 = vadd.f32 %v3536, %v3537
          %v3539 = vrot.slane %v3538, 1
          %v3540 = vadd.f32 %v3538, %v3539
          %v3541 = vld [vmem:[#allocation22] sm:$0x3]
          %v3542 = vld [vmem:[#allocation24] sm:$0x3]
          %v3543 = vadd.f32 %v3534, %v3540
          %3544 = vadd.xlane.f32.xlu0 %v3543
          %v3545 = vpop.xlane.xlu0 %3544
          %v3546 = vmul.f32 %v3545, %v1084
          %v3547 = vsub.f32 %v3534, %v3546
          %v3548 = vsub.f32 %v3540, %v3546
          %v3549 = vmul.f32 %v3547, %v3547
          %v3550 = vmul.f32 %v3548, %v3548
          %v3551 = vadd.f32 %v3549, %v3550
          %3552 = vadd.xlane.f32.xlu0 %v3551
          %v3553 = vpop.xlane.xlu0 %3552
          %v3554 = vmul.f32 %v3553, %v1084
          %v3555 = vadd.f32 %v3554, 1e-05
          %v3556 = vrsqrt.pop %v3555
          %v3557 = vmul.f32 %v3547, %v3556
          %v3558 = vmul.f32 %v3548, %v3556
          %v3560 = vlaneseq
          %v3561 = vshrl.u32 %v3560, 7
          %v3562 = vsub.s32 0, %v3561
          %v3563 = vrot.slane %v3541, %v3562
          %v3564 = vlaneseq
          %v3565 = vshrl.u32 %v3564, 7
          %v3566 = vsub.s32 1, %v3565
          %v3567 = vrot.slane %v3541, %v3566
          %v3570 = vmul.f32 %v3557, %v3563
          %v3571 = vmul.f32 %v3558, %v3567
          %v3573 = vlaneseq
          %v3574 = vshrl.u32 %v3573, 7
          %v3575 = vsub.s32 0, %v3574
          %v3576 = vrot.slane %v3542, %v3575
          %v3577 = vlaneseq
          %v3578 = vshrl.u32 %v3577, 7
          %v3579 = vsub.s32 1, %v3578
          %v3580 = vrot.slane %v3542, %v3579
          %v3583 = vadd.f32 %v3570, %v3576
          %v3584 = vadd.f32 %v3571, %v3580
          %v3585 = vpack.c.bf16 %v3583, %v3583
          %v3586 = vpack.c.bf16 %v3584, %v3584
          %v3587 = vld [vmem:[%s17] sm:$0xf]
          %v3588 = vld [vmem:[%s17 + $0x4] sm:$0xf]
          %v3589 = vld [vmem:[%s17 + $0x8] sm:$0xf]
          %v3590 = vld [vmem:[%s17 + $0xc] sm:$0xf]
          %v3591 = vld [vmem:[%s17 + $0x10] sm:$0xf]
          %v3592 = vld [vmem:[%s17 + $0x14] sm:$0xf]
          %v3593 = vld [vmem:[%s17 + $0x18] sm:$0xf]
          %v3594 = vld [vmem:[%s17 + $0x1c] sm:$0xf]
          %v3595 = vld [vmem:[%s17 + $0x20] sm:$0xf]
          %v3596 = vld [vmem:[%s17 + $0x24] sm:$0xf]
          %v3597 = vld [vmem:[%s17 + $0x28] sm:$0xf]
          %v3598 = vld [vmem:[%s17 + $0x2c] sm:$0xf]
          %v3599 = vld [vmem:[%s17 + $0x30] sm:$0xf]
          %v3600 = vld [vmem:[%s17 + $0x34] sm:$0xf]
          %v3601 = vld [vmem:[%s17 + $0x38] sm:$0xf]
          %v3602 = vld [vmem:[%s17 + $0x3c] sm:$0xf]
          %v3603 = vld [vmem:[%s17 + $0x40] sm:$0xf]
          %v3604 = vld [vmem:[%s17 + $0x44] sm:$0xf]
          %v3605 = vld [vmem:[%s17 + $0x48] sm:$0xf]
          %v3606 = vld [vmem:[%s17 + $0x4c] sm:$0xf]
          %v3607 = vld [vmem:[%s17 + $0x50] sm:$0xf]
          %v3608 = vld [vmem:[%s17 + $0x54] sm:$0xf]
          %v3609 = vld [vmem:[%s17 + $0x58] sm:$0xf]
          %v3610 = vld [vmem:[%s17 + $0x5c] sm:$0xf]
          %v3611 = vld [vmem:[%s17 + $0x60] sm:$0xf]
          %v3612 = vld [vmem:[%s17 + $0x64] sm:$0xf]
          %v3613 = vld [vmem:[%s17 + $0x68] sm:$0xf]
          %v3614 = vld [vmem:[%s17 + $0x6c] sm:$0xf]
          %v3615 = vld [vmem:[%s17 + $0x70] sm:$0xf]
          %v3616 = vld [vmem:[%s17 + $0x74] sm:$0xf]
          %v3617 = vld [vmem:[%s17 + $0x78] sm:$0xf]
          %v3618 = vld [vmem:[%s17 + $0x7c] sm:$0xf]
          %v3651 = vunpack.c.l.b16 %v3587
          %v3652 = vunpack.c.l.b16 %v3588
          %v3653 = vunpack.c.l.b16 %v3589
          %v3654 = vunpack.c.l.b16 %v3590
          %v3655 = vunpack.c.l.b16 %v3591
          %v3656 = vunpack.c.l.b16 %v3592
          %v3657 = vunpack.c.l.b16 %v3593
          %v3658 = vunpack.c.l.b16 %v3594
          %v3659 = vunpack.c.l.b16 %v3595
          %v3660 = vunpack.c.l.b16 %v3596
          %v3661 = vunpack.c.l.b16 %v3597
          %v3662 = vunpack.c.l.b16 %v3598
          %v3663 = vunpack.c.l.b16 %v3599
          %v3664 = vunpack.c.l.b16 %v3600
          %v3665 = vunpack.c.l.b16 %v3601
          %v3666 = vunpack.c.l.b16 %v3602
          %v3667 = vunpack.c.l.b16 %v3603
          %v3668 = vunpack.c.l.b16 %v3604
          %v3669 = vunpack.c.l.b16 %v3605
          %v3670 = vunpack.c.l.b16 %v3606
          %v3671 = vunpack.c.l.b16 %v3607
          %v3672 = vunpack.c.l.b16 %v3608
          %v3673 = vunpack.c.l.b16 %v3609
          %v3674 = vunpack.c.l.b16 %v3610
          %v3675 = vunpack.c.l.b16 %v3611
          %v3676 = vunpack.c.l.b16 %v3612
          %v3677 = vunpack.c.l.b16 %v3613
          %v3678 = vunpack.c.l.b16 %v3614
          %v3679 = vunpack.c.l.b16 %v3615
          %v3680 = vunpack.c.l.b16 %v3616
          %v3681 = vunpack.c.l.b16 %v3617
          %v3682 = vunpack.c.l.b16 %v3618
          %v3683 = vpack.c.b16 %v3652, %v3651
          %v3684 = vpack.c.b16 %v3654, %v3653
          %v3685 = vpack.c.b16 %v3656, %v3655
          %v3686 = vpack.c.b16 %v3658, %v3657
          %v3687 = vpack.c.b16 %v3660, %v3659
          %v3688 = vpack.c.b16 %v3662, %v3661
          %v3689 = vpack.c.b16 %v3664, %v3663
          %v3690 = vpack.c.b16 %v3666, %v3665
          %v3691 = vpack.c.b16 %v3668, %v3667
          %v3692 = vpack.c.b16 %v3670, %v3669
          %v3693 = vpack.c.b16 %v3672, %v3671
          %v3694 = vpack.c.b16 %v3674, %v3673
          %v3695 = vpack.c.b16 %v3676, %v3675
          %v3696 = vpack.c.b16 %v3678, %v3677
          %v3697 = vpack.c.b16 %v3680, %v3679
          %v3698 = vpack.c.b16 %v3682, %v3681
          %3715 = vmatprep.subr.bf16.mxu0 0
          %3716 = vmatpush1.bf16.msra.mxu0 %v3690
          %3717 = vmatprep.subr.bf16.mxu0 0
          %3718 = vmatpush1.bf16.msra.mxu0 %v3689
          %3719 = vmatprep.subr.bf16.mxu0 0
          %3720 = vmatpush1.bf16.msra.mxu0 %v3688
          %3721 = vmatprep.subr.bf16.mxu0 0
          %3722 = vmatpush1.bf16.msra.mxu0 %v3687
          %3723 = vmatprep.subr.bf16.mxu0 0
          %3724 = vmatpush1.bf16.msra.mxu0 %v3686
          %3725 = vmatprep.subr.bf16.mxu0 0
          %3726 = vmatpush1.bf16.msra.mxu0 %v3685
          %3727 = vmatprep.subr.bf16.mxu0 0
          %3728 = vmatpush1.bf16.msra.mxu0 %v3684
          %3729 = vmatprep.subr.bf16.mxu0 0
          %3730 = vmatpush1.bf16.msra.mxu0 %v3683
          %3731 = vmatprep.subr.bf16.mxu0 0
          %3732 = vmatpush2.bf16.msra.mxu0 %v3698
          %3733 = vmatprep.subr.bf16.mxu0 0
          %3734 = vmatpush2.bf16.msra.mxu0 %v3697
          %3735 = vmatprep.subr.bf16.mxu0 0
          %3736 = vmatpush2.bf16.msra.mxu0 %v3696
          %3737 = vmatprep.subr.bf16.mxu0 0
          %3738 = vmatpush2.bf16.msra.mxu0 %v3695
          %3739 = vmatprep.subr.bf16.mxu0 0
          %3740 = vmatpush2.bf16.msra.mxu0 %v3694
          %3741 = vmatprep.subr.bf16.mxu0 0
          %3742 = vmatpush2.bf16.msra.mxu0 %v3693
          %3743 = vmatprep.subr.bf16.mxu0 0
          %3744 = vmatpush2.bf16.msra.mxu0 %v3692
          %3745 = vmatprep.subr.bf16.mxu0 0
          %3746 = vmatpush2.bf16.msra.mxu0 %v3691
          %3747 = vmatprep.mubr.bf16.mxu0 %v3586
          %3748 = vmatmul.mubr.bf16.gmra.mxu0 %v3585
          %v3749 = vpop.f32.mrf.mxu0
          %v3750 = vadd.f32 0.0, %v3749
          %v3751 = vpop.f32.mrf.mxu0
          %v3752 = vpop.f32.mrf.mxu0
          %v3753 = vpop.f32.mrf.mxu0
          %3754 = vdwg.mxu0
          %3755 = vst [vmem:[%s1059] sm:$0x1] %v3750
        $region152: #{prompt_encoder_forward.3} parent=87 // pred_fallthru
          _
        %p3756 = scmp.lt.s32.totalorder %s60, 1
        %s3757 = scalar_select %p3756, %s60, 1
        %s3758 = smul.addr %s3757, 2
        %s3759 = smul.addr %s3758, 8
        %s3760 = scalar_lea.vmem %s18, %s3759
        %p3761 = scmp.lt.s32.totalorder %s60, 1
        %s3762 = scalar_select %p3761, %s60, 1
        %s3763 = scalar_lea.vmem %s19, %s3762
        // Predicated region
        $region153: #{prompt_encoder_forward.3} parent=87 // pred_check
          %p3764 = pneg %p508
        $region154: #{prompt_encoder_forward.3} parent=87 // pred_check_branch
          %3766 = sbr.rel (%p3764) target = $region156
        $region155: #{prompt_encoder_forward.3} parent=87 // pred_region
          _
        $region156: #{prompt_encoder_forward.3} parent=87 // pred_fallthru
          _
        // Predicated region
        $region157: #{prompt_encoder_forward.3} parent=87 // pred_check
          %p3767 = pneg %p534
        $region158: #{prompt_encoder_forward.3} parent=87 // pred_check_branch
          %3769 = sbr.rel (%p3767) target = $region160
        $region159: #{prompt_encoder_forward.3} parent=87 // pred_region
          _
        $region160: #{prompt_encoder_forward.3} parent=87 // pred_fallthru
          _
      $region88: #{prompt_encoder_forward.3} parent=5 // pred_fallthru
        _
      %p3770 = scmp.le.s32.totalorder 2, %s51
      // Predicated region
      $region161: #{prompt_encoder_forward.3} parent=5 // pred_check
        %p3771 = pneg %p3770
      $region162: #{prompt_encoder_forward.3} parent=5 // pred_check_branch
        %3773 = sbr.rel (%p3771) target = $region164
      $region163: #{prompt_encoder_forward.3} parent=5 // pred_region
        %s3774 = ssub.s32 %s51, 2
        // Predicated region
        $region165: #{prompt_encoder_forward.3} parent=163 // pred_check
          %p3775 = pneg %p514
        $region166: #{prompt_encoder_forward.3} parent=163 // pred_check_branch
          %3777 = sbr.rel (%p3775) target = $region168
        $region167: #{prompt_encoder_forward.3} parent=163 // pred_region
          %p3778 = scmp.lt.s32.totalorder %s62, 1
          %s3779 = scalar_select %p3778, %s62, 1
          %s3780 = smul.addr %s3779, 2
          %s3781 = smul.addr %s3780, 8
          %s3782 = scalar_lea.vmem %s18, %s3781
        $region168: #{prompt_encoder_forward.3} parent=163 // pred_fallthru
          _
        // Predicated region
        $region169: #{prompt_encoder_forward.3} parent=163 // pred_check
          %p3783 = pneg %p540
        $region170: #{prompt_encoder_forward.3} parent=163 // pred_check_branch
          %3785 = sbr.rel (%p3783) target = $region172
        $region171: #{prompt_encoder_forward.3} parent=163 // pred_region
          %p3786 = scmp.lt.s32.totalorder %s62, 1
          %s3787 = scalar_select %p3786, %s62, 1
          %s3788 = scalar_lea.vmem %s19, %s3787
        $region172: #{prompt_encoder_forward.3} parent=163 // pred_fallthru
          _
      $region164: #{prompt_encoder_forward.3} parent=5 // pred_fallthru
        _
    $region6: #{prompt_encoder_forward.3} parent=1 // loop_footer
      %s55 = sadd.s32 1, %s51
    $region7: #{prompt_encoder_forward.3} parent=1 // loop_footer_branch
      %50 = sbr.rel target = $region3
    $region8: #{prompt_encoder_forward.3} parent=1 // loop_exit
      _
    %3789 = vsyncpa [#allocation6], 1
    %s3790 = scalar_lea.sflag [#allocation6], 1
    %3791 = vsyncpa %s3790, 1
    %3792 = vsyncpa [#allocation8], 1
    %s3793 = scalar_lea.sflag [#allocation8], 1
    %3794 = vsyncpa %s3793, 1
    %3795 = vsyncpa [#allocation11], 1
    %s3796 = scalar_lea.sflag [#allocation11], 1
    %3797 = vsyncpa %s3796, 1
    %3798 = vsyncpa [#allocation14], 1
    %s3799 = scalar_lea.sflag [#allocation14], 1
    %3800 = vsyncpa %s3799, 1
    %3801 = vsyncpa [#allocation17], 1
    %s3802 = scalar_lea.sflag [#allocation17], 1
    %3803 = vsyncpa %s3802, 1
    %3804 = vsyncpa [#allocation20], 1
    %s3805 = scalar_lea.sflag [#allocation20], 1
    %3806 = vsyncpa %s3805, 1
    %3807 = vsyncpa [#allocation23], 1

</llo_original>
